<compile_context>
chip_gen: v7x
topology: tpu7x:2x2x1
jax: 0.10.0
libtpu: 0.0.40
codegen_flags: <defaults>
</compile_context>

<pallas_src>
import functools
import numpy as np

import jax
import jax.numpy as jnp
from jax import lax
from jax.experimental import pallas as pl
from jax.experimental.pallas import tpu as pltpu

# ----------------- synthetic model config -----------------
NUM_ATOM_TYPE = 16      # model_conf.num_atom_type
NUM_EDGE_TYPE = 8       # model_conf.mpnn.num_edge_type
NODE_DIM = 32           # model_conf.mpnn.mpnn_node_embed_size
EDGE_DIM = 16           # model_conf.mpnn.mpnn_edge_embed_size
MPNN_LAYERS = 2         # model_conf.mpnn.mpnn_layers
N_TIMESTEPS = 2         # model_conf.mpnn.n_timesteps
DROPOUT = 0.0           # model_conf.mpnn.dropout (eval -> identity)

F32 = jnp.float32


# ----------------- tiny helpers (traced inside the fused kernel) -----------------
def _mm(a, b):    # a @ b  (contract last dim of a with dim 0 of b), f32 accumulate
    return lax.dot_general(a, b, (((a.ndim - 1,), (0,)), ((), ())),
                           preferred_element_type=F32)


def _leaky(x, slope=0.01):
    return jnp.where(x > 0, x, slope * x)


def _elu(x):
    return jnp.where(x > 0, x, jnp.exp(x) - 1.0)


# ----------------- the single fused Pallas kernel -----------------
def _fused_forward_kernel(dims, woff, boff,
                          x_ref, ea_ref, sdoh_ref, dohT_ref, boh_ref, bohT_ref,
                          w_ref, b_ref, o_ref):
    N, E, B, H, De, n_atom_layers, n_timesteps = dims

    # ---- lazy parameter readers (weights stay in VMEM until their use site) ----
    def wblk(name, rows):
        o = woff[name]
        return w_ref[o:o + rows, :]                      # [rows, 3H] (zero-padded columns)

    def bvec(name, cols=None):
        r = boff[name]
        v = b_ref[r:r + 1, :]                            # [1, 3H]
        return v if cols is None else v[:, :cols]

    def softmax_agg(alpha, feat, scatter_T):
        # Exact per-segment softmax + sum aggregation folded into ONE scatter matmul:
        # scatter_T @ [feat*ex | ex] gives numerator and denominator together.
        # The global-max shift cancels exactly in the ratio; the denom guard covers
        # segments with zero incident edges (aggregation is then 0, as in PyG).
        m = jnp.max(alpha, axis=0, keepdims=True)                            # [1, 1]
        ex = jnp.exp(alpha - m)                                              # [*, 1]
        agg = _mm(scatter_T, jnp.concatenate([feat * ex, ex], axis=-1))      # [Nd, H+1]
        return agg[:, :H] / jnp.maximum(agg[:, H:H + 1], 1e-30)              # exact divide

    def gru_relu(name, i, h):
        # torch.nn.GRUCell (r,z,n gate ordering) + trailing ReLU; 2 matmuls of width 3H.
        gi = _mm(i, wblk(name + "_wi", H)) + bvec(name + "_bi")              # [*, 3H]
        gh = _mm(h, wblk(name + "_wh", H)) + bvec(name + "_bh")              # [*, 3H]
        r = jax.nn.sigmoid(gi[:, :H] + gh[:, :H])
        z = jax.nn.sigmoid(gi[:, H:2 * H] + gh[:, H:2 * H])
        n = jnp.tanh(gi[:, 2 * H:] + r * gh[:, 2 * H:])
        return jnp.maximum((1.0 - z) * n + z * h, 0.0)

    x0 = x_ref[...]          # [N, H]   node-embedder output
    ea = ea_ref[...]         # [E, De]  edge-embedder output
    sdoh = sdoh_ref[...]     # [2E, N]  stacked (src; dst) one-hot gather matrix
    dohT = dohT_ref[...]     # [N, E]   pre-transposed dst one-hot (scatter)

    # --- AttentiveFP: x = leaky_relu(lin1(x)) ---
    x = _leaky(_mm(x0, wblk("lin1", H))[:, :H] + bvec("lin1_b", H))          # [N, H]

    # --- GATEConv (+ELU) then GRU (+ReLU) ---
    att_l = bvec("att_l", H)
    att_r = bvec("att_r", H)
    s_r = jnp.sum(x * att_r, axis=-1, keepdims=True)                         # [N, 1] (VPU)
    g = _mm(sdoh, jnp.concatenate([x, s_r], axis=-1))                        # [2E, H+1] one gather
    x_j = g[:E, :H]                                                          # x[src]
    a_i = g[E:, H:H + 1]                                                     # att_r . x[dst]
    # one fused matmul: cols [0:H] = lin1([x_j|ea]), cols [H:2H] = lin2(x_j)
    prod = _mm(jnp.concatenate([x_j, ea], axis=-1), wblk("gate", H + De))    # [E, 3H]
    t = _leaky(prod[:, :H])
    w2xj = prod[:, H:2 * H]
    alpha = _leaky(jnp.sum(t * att_l, axis=-1, keepdims=True) + a_i)         # [E, 1]
    h = _elu(softmax_agg(alpha, w2xj, dohT) + bvec("gate_b", H))             # [N, H]
    x = gru_relu("gru0", h, x)

    # --- remaining atom layers: GATConv (+ELU) then GRU (+ReLU) ---
    for l in range(n_atom_layers):
        # cols: [0:H] = x@W^T, [H] = att_src-proj, [H+1] = att_dst-proj (folded into one matmul)
        xs_full = _mm(x, wblk(f"conv{l}", H))                                # [N, 3H]
        g = _mm(sdoh, xs_full)                                               # [2E, 3H] one gather
        alpha = _leaky(g[:E, H:H + 1] + g[E:, H + 1:H + 2])                  # [E, 1]
        h = _elu(softmax_agg(alpha, g[:E, :H], dohT) + bvec(f"conv{l}_b", H))
        x = gru_relu(f"gru{l + 1}", h, x)

    # --- molecule readout: out = relu(global_add_pool(x, batch)) ---
    boh = boh_ref[...]       # [N, B]
    bohT = bohT_ref[...]     # [B, N] (pre-transposed)
    out = jnp.maximum(_mm(bohT, x), 0.0)                                     # [B, H]

    # --- mol-level GAT timesteps (src = arange(N) identity gather, dst = batch) ---
    xs_full = _mm(x, wblk("mol", H))                     # [N, 3H]: [x@W^T | att_src-proj | 0]
    xs = xs_full[:, :H]                                  # loop-invariant
    a_s = xs_full[:, H:H + 1]
    mol_adw = bvec("mol_adw", H)                         # att_dst @ W (folded projection)
    mol_b = bvec("mol_b", H)
    for _ in range(n_timesteps):
        a_d = jnp.sum(out * mol_adw, axis=-1, keepdims=True)                 # [B, 1] (VPU)
        alpha = _leaky(a_s + _mm(boh, a_d))                                  # [N, 1]
        h = _elu(softmax_agg(alpha, xs, bohT) + mol_b)                       # [B, H]
        out = gru_relu("grum", h, out)

    # --- predictor: lin2(out)  (dropout is identity in eval) ---
    o_ref[...] = _mm(out, wblk("lin2", H))[:, :H] + bvec("lin2_b", H)


# ----------------- parameters (deterministic synthetic init) -----------------
def init_params(key):
    ks = iter(jax.random.split(key, 128))

    def nrm(shape, scale=0.2):
        return (scale * jax.random.normal(next(ks), shape)).astype(F32)

    H, De = NODE_DIM, EDGE_DIM
    p = {}
    # node_embedder: Embedding -> SiLU -> Linear -> LayerNorm
    p["node_emb"] = nrm((NUM_ATOM_TYPE, H))
    p["node_lin_w"] = nrm((H, H)); p["node_lin_b"] = nrm((1, H))
    p["node_ln_g"] = jnp.ones((1, H), F32); p["node_ln_b"] = jnp.zeros((1, H), F32)
    # edge_embedder
    p["edge_emb"] = nrm((NUM_EDGE_TYPE, De))
    p["edge_lin_w"] = nrm((De, De)); p["edge_lin_b"] = nrm((1, De))
    p["edge_ln_g"] = jnp.ones((1, De), F32); p["edge_ln_b"] = jnp.zeros((1, De), F32)
    # AttentiveFP.lin1
    p["lin1_w"] = nrm((H, H)); p["lin1_b"] = nrm((1, H))
    # GATEConv
    p["gate_w1x"] = nrm((H, H))        # lin1 weight, x_j part
    p["gate_w1e"] = nrm((H, De))       # lin1 weight, edge_attr part
    p["gate_w2"] = nrm((H, H))
    p["gate_att_l"] = nrm((1, H)); p["gate_att_r"] = nrm((1, H))
    p["gate_bias"] = nrm((1, H))

    def gru_params():
        # Concatenated GRU weights: rows ordered (r, z, n) like torch.nn.GRUCell.
        return {"wi": nrm((3 * H, H)), "wh": nrm((3 * H, H)),
                "bi": nrm((1, 3 * H)), "bh": nrm((1, 3 * H))}

    p["gru0"] = gru_params()
    p["atom_convs"], p["atom_grus"] = [], []
    for _ in range(MPNN_LAYERS - 1):
        p["atom_convs"].append({"w": nrm((H, H)), "att_src": nrm((1, H)),
                                "att_dst": nrm((1, H)), "bias": nrm((1, H))})
        p["atom_grus"].append(gru_params())
    p["mol_conv"] = {"w": nrm((H, H)), "att_src": nrm((1, H)),
                     "att_dst": nrm((1, H)), "bias": nrm((1, H))}
    p["mol_gru"] = gru_params()
    p["lin2_w"] = nrm((H, H)); p["lin2_b"] = nrm((1, H))
    return p


# ----------------- wrapper-side parameter packing (2 arrays, static offsets) -----------------
def _embed_table(emb, lin_w, lin_b, ln_g, ln_b):
    """Embedding -> SiLU -> Linear -> LayerNorm evaluated once per type (exact hoist)."""
    h = emb * jax.nn.sigmoid(emb)
    y = h @ lin_w.T + lin_b
    mu = jnp.mean(y, axis=-1, keepdims=True)
    var = jnp.mean(jnp.square(y - mu), axis=-1, keepdims=True)
    return (y - mu) / jnp.sqrt(var + 1e-5) * ln_g + ln_b


def _pack_params(p):
    """Pack every MPNN weight into W_pack [R, 3H] / B_pack [K, 3H] with static offsets."""
    H, De = NODE_DIM, EDGE_DIM
    WIDTH = 3 * H

    wmats, woff = [], {}
    def addw(name, m):
        woff[name] = sum(int(b.shape[0]) for b in wmats)
        m = jnp.asarray(m, F32)
        wmats.append(jnp.pad(m, ((0, 0), (0, WIDTH - m.shape[1]))))

    bvecs, boff = [], {}
    def addb(name, v):
        boff[name] = len(bvecs)
        v = jnp.asarray(v, F32).reshape(1, -1)
        bvecs.append(jnp.pad(v, ((0, 0), (0, WIDTH - v.shape[1]))))

    def addgru(name, g):
        addw(f"{name}_wi", g["wi"].T)       # [H, 3H]
        addw(f"{name}_wh", g["wh"].T)
        addb(f"{name}_bi", g["bi"])
        addb(f"{name}_bh", g["bh"])

    # lin1
    addw("lin1", p["lin1_w"].T)                                              # [H, H]
    addb("lin1_b", p["lin1_b"])
    # GATEConv: fuse lin1 (split over [x_j | ea]) and lin2 (x_j only) into one [H+De, 2H] block
    gate_top = jnp.concatenate([p["gate_w1x"].T, p["gate_w2"].T], axis=1)    # [H, 2H]
    gate_bot = jnp.concatenate([p["gate_w1e"].T, jnp.zeros((De, H), F32)], axis=1)
    addw("gate", jnp.concatenate([gate_top, gate_bot], axis=0))              # [H+De, 2H]
    addb("att_l", p["gate_att_l"]); addb("att_r", p["gate_att_r"])
    addb("gate_b", p["gate_bias"])
    addgru("gru0", p["gru0"])
    # atom GATConv layers: fold att_src/att_dst projections as extra RHS columns
    for l, conv in enumerate(p["atom_convs"]):
        w = conv["w"]
        addw(f"conv{l}", jnp.concatenate(
            [w.T, (conv["att_src"] @ w).T, (conv["att_dst"] @ w).T], axis=1))  # [H, H+2]
        addb(f"conv{l}_b", conv["bias"])
        addgru(f"gru{l + 1}", p["atom_grus"][l])
    # mol-level GATConv
    mw = p["mol_conv"]["w"]
    addw("mol", jnp.concatenate([mw.T, (p["mol_conv"]["att_src"] @ mw).T], axis=1))  # [H, H+1]
    addb("mol_adw", p["mol_conv"]["att_dst"] @ mw)     # folded dst projection (used on VPU)
    addb("mol_b", p["mol_conv"]["bias"])
    addgru("grum", p["mol_gru"])
    # predictor
    addw("lin2", p["lin2_w"].T)
    addb("lin2_b", p["lin2_b"])

    return jnp.concatenate(wmats, axis=0), jnp.concatenate(bvecs, axis=0), woff, boff


# ----------------- dense_to_sparse (host-side glue, ragged shapes) -----------------
def dense_to_sparse_np(mol_atom, mol_edge, mol_edge_feat, mol_atom_mask, mol_edge_mask):
    mol_atom = np.asarray(mol_atom)
    mol_edge = np.asarray(mol_edge)
    mol_edge_feat = np.asarray(mol_edge_feat)
    amask = np.asarray(mol_atom_mask).astype(bool)
    emask = np.asarray(mol_edge_mask).astype(bool)

    atom_list = mol_atom[amask]                     # [N_total]
    edge_feat_list = mol_edge_feat[emask]           # [E_total]
    if mol_edge.shape[1] == 2:
        mol_edge = np.transpose(mol_edge, (0, 2, 1))    # [B, E_max, 2]
    edge_list = [e[m] for e, m in zip(mol_edge, emask)]
    n_nodes = amask.sum(axis=1, keepdims=True)      # [B, 1]
    cum = np.cumsum(n_nodes, axis=0)
    new_edges = [edge_list[0]]
    for e, s in zip(edge_list[1:], cum[:-1]):
        new_edges.append(e + s)
    edges = np.concatenate(new_edges, axis=0)       # [E_total, 2]
    if edges.shape[1] == 2:
        edges = edges.T                             # [2, E_total]
    batch = np.concatenate([np.full((int(n),), i, dtype=np.int64)
                            for i, n in enumerate(n_nodes[:, 0])])
    return atom_list, edges, edge_feat_list, batch


# ----------------- full MolMPNN forward -----------------
def mol_mpnn_forward(params, mol_atom, mol_edge, mol_edge_feat,
                     mol_atom_mask, mol_edge_mask):
    atoms, edge_index, edge_types, batch = dense_to_sparse_np(
        mol_atom, mol_edge, mol_edge_feat, mol_atom_mask, mol_edge_mask)
    assert edge_index.shape[1] == edge_types.shape[0]

    N = int(atoms.shape[0])
    E = int(edge_index.shape[1])
    B = int(batch.max()) + 1
    H, De = NODE_DIM, EDGE_DIM

    # Node/edge embedders are pure per-type functions; evaluate their tiny output tables
    # once on the wrapper (exact algebraic hoist) and gather per node/edge.
    node_tab = _embed_table(params["node_emb"], params["node_lin_w"], params["node_lin_b"],
                            params["node_ln_g"], params["node_ln_b"])          # [A, H]
    edge_tab = _embed_table(params["edge_emb"], params["edge_lin_w"], params["edge_lin_b"],
                            params["edge_ln_g"], params["edge_ln_b"])           # [T, De]
    x0 = jnp.take(node_tab, jnp.asarray(atoms, jnp.int32), axis=0)              # [N, H]
    ea0 = jnp.take(edge_tab, jnp.asarray(edge_types, jnp.int32), axis=0)        # [E, De]

    # Graph structure (glue): stacked gather matrix + pre-transposed scatter matrices.
    src = jnp.asarray(edge_index[0], jnp.int32)
    dst = jnp.asarray(edge_index[1], jnp.int32)
    soh = jax.nn.one_hot(src, N, dtype=F32)                                     # [E, N]
    doh = jax.nn.one_hot(dst, N, dtype=F32)                                     # [E, N]
    sd_oh = jnp.concatenate([soh, doh], axis=0)                                 # [2E, N]
    doh_T = doh.T                                                               # [N, E]
    boh = jax.nn.one_hot(jnp.asarray(batch, jnp.int32), B, dtype=F32)           # [N, B]
    boh_T = boh.T                                                               # [B, N]
    # TODO(synk): at production graph sizes switch to a scalar-prefetch sparse gather/scatter
    # path (edge_index in SMEM), bf16 incidence/weight MXU operands, and a parallel grid axis
    # (2nd TensorCore on v7x). Dense f32, grid-less kept here for exactness at tiny shapes.

    w_pack, b_pack, woff, boff = _pack_params(params)

    inputs = [x0, ea0, sd_oh, doh_T, boh, boh_T, w_pack, b_pack]
    dims = (N, E, B, H, De, MPNN_LAYERS - 1, N_TIMESTEPS)
    kernel = functools.partial(_fused_forward_kernel, dims, woff, boff)

    # Generation-aware VMEM budget (v7x: 64 MiB physical vs 128 MiB on v5e/v6e).
    try:
        phys = int(pltpu.get_tpu_info().vmem_capacity_bytes)
    except Exception:
        phys = 128 * 1024 * 1024
    in_bytes = sum(int(np.prod(a.shape)) * 4 for a in inputs)
    vmem_limit = int(min(0.45 * phys, max(16 * 1024 * 1024, 8 * in_bytes)))

    out = pl.pallas_call(
        kernel,
        out_shape=jax.ShapeDtypeStruct((B, H), F32),
        in_specs=[pl.BlockSpec(memory_space=pltpu.MemorySpace.VMEM)] * len(inputs),
        out_specs=pl.BlockSpec(memory_space=pltpu.MemorySpace.VMEM),
        compiler_params=pltpu.CompilerParams(vmem_limit_bytes=vmem_limit),
    )(*inputs)
    return out


# ----------------- demo -----------------
if __name__ == "__main__":
    key = jax.random.PRNGKey(0)
    k_par, k_at, k_ef, k_e0, k_e1 = jax.random.split(key, 5)
    params = init_params(k_par)

    B, N_max, E_max = 2, 8, 12
    n_atoms = [6, 5]
    n_edges = [10, 8]

    mol_atom = jax.random.randint(k_at, (B, N_max), 0, NUM_ATOM_TYPE, dtype=jnp.int32)
    mol_edge_feat = jax.random.randint(k_ef, (B, E_max), 0, NUM_EDGE_TYPE, dtype=jnp.int32)
    edge_blocks = []
    for b, ke in enumerate([k_e0, k_e1]):
        edge_blocks.append(jax.random.randint(ke, (2, E_max), 0, n_atoms[b], dtype=jnp.int32))
    mol_edge = jnp.stack(edge_blocks, axis=0)      # [B, 2, E_max]
    mol_atom_mask = jnp.array(
        [[1] * n_atoms[b] + [0] * (N_max - n_atoms[b]) for b in range(B)], jnp.int32)
    mol_edge_mask = jnp.array(
        [[1] * n_edges[b] + [0] * (E_max - n_edges[b]) for b in range(B)], jnp.int32)

    mol_rep = mol_mpnn_forward(params, mol_atom, mol_edge, mol_edge_feat,
                               mol_atom_mask, mol_edge_mask)
    jax.block_until_ready(mol_rep)
    assert mol_rep.shape == (B, NODE_DIM)
    assert bool(jnp.all(jnp.isfinite(mol_rep)))
    print("KERNEL_OK")
</pallas_src>

<mosaic_0001>
module attributes {stable_mosaic.version = 11 : i64} {
  func.func @_fused_forward_kernel(%arg0: memref<11x32xf32, #tpu.memory_space<vmem>>, %arg1: memref<18x16xf32, #tpu.memory_space<vmem>>, %arg2: memref<36x11xf32, #tpu.memory_space<vmem>>, %arg3: memref<11x18xf32, #tpu.memory_space<vmem>>, %arg4: memref<11x2xf32, #tpu.memory_space<vmem>>, %arg5: memref<2x11xf32, #tpu.memory_space<vmem>>, %arg6: memref<368x96xf32, #tpu.memory_space<vmem>>, %arg7: memref<14x96xf32, #tpu.memory_space<vmem>>, %arg8: memref<2x32xf32, #tpu.memory_space<vmem>>) attributes {dimension_semantics = [], scalar_prefetch = 0 : i64, scratch_operands = 0 : i64, tpu.core_type = #tpu.core_type<tc>} {
    %c0 = arith.constant 0 : index
    %c0_0 = arith.constant 0 : index
    %0 = vector.load %arg0[%c0, %c0_0] : memref<11x32xf32, #tpu.memory_space<vmem>>, vector<11x32xf32>
    %c0_1 = arith.constant 0 : index
    %c0_2 = arith.constant 0 : index
    %1 = vector.load %arg1[%c0_1, %c0_2] : memref<18x16xf32, #tpu.memory_space<vmem>>, vector<18x16xf32>
    %c0_3 = arith.constant 0 : index
    %c0_4 = arith.constant 0 : index
    %2 = vector.load %arg2[%c0_3, %c0_4] : memref<36x11xf32, #tpu.memory_space<vmem>>, vector<36x11xf32>
    %c0_5 = arith.constant 0 : index
    %c0_6 = arith.constant 0 : index
    %3 = vector.load %arg3[%c0_5, %c0_6] : memref<11x18xf32, #tpu.memory_space<vmem>>, vector<11x18xf32>
    %c0_7 = arith.constant 0 : index
    %c0_8 = arith.constant 0 : index
    %4 = vector.load %arg6[%c0_7, %c0_8] : memref<368x96xf32, #tpu.memory_space<vmem>>, vector<32x96xf32>
    %cst = arith.constant dense<0.000000e+00> : vector<11x96xf32>
    %5 = tpu.matmul %0, %4, %cst {dimension_numbers = #tpu.dot_dimension_numbers<[1], [0], [0], [1], [0, 0, 1, 1], [], []>} : vector<11x32xf32>, vector<32x96xf32>, vector<11x96xf32> -> vector<11x96xf32>
    %6 = vector.extract_strided_slice %5 {offsets = [0, 0], sizes = [11, 32], strides = [1, 1]} : vector<11x96xf32> to vector<11x32xf32>
    %c0_9 = arith.constant 0 : index
    %c0_10 = arith.constant 0 : index
    %7 = vector.load %arg7[%c0_9, %c0_10] : memref<14x96xf32, #tpu.memory_space<vmem>>, vector<1x96xf32>
    %8 = vector.extract_strided_slice %7 {offsets = [0, 0], sizes = [1, 32], strides = [1, 1]} : vector<1x96xf32> to vector<1x32xf32>
    %9 = vector.broadcast %8 : vector<1x32xf32> to vector<11x32xf32>
    %10 = arith.addf %6, %9 : vector<11x32xf32>
    %cst_11 = arith.constant 0.000000e+00 : f32
    %11 = vector.broadcast %cst_11 : f32 to vector<11x32xf32>
    %12 = arith.cmpf ogt, %10, %11 : vector<11x32xf32>
    %cst_12 = arith.constant 0.00999999977 : f32
    %13 = vector.broadcast %cst_12 : f32 to vector<11x32xf32>
    %14 = arith.mulf %13, %10 : vector<11x32xf32>
    %15 = arith.select %12, %10, %14 : vector<11x32xi1>, vector<11x32xf32>
    %c1 = arith.constant 1 : index
    %c0_13 = arith.constant 0 : index
    %16 = vector.load %arg7[%c1, %c0_13] : memref<14x96xf32, #tpu.memory_space<vmem>>, vector<1x96xf32>
    %17 = vector.extract_strided_slice %16 {offsets = [0, 0], sizes = [1, 32], strides = [1, 1]} : vector<1x96xf32> to vector<1x32xf32>
    %c2 = arith.constant 2 : index
    %c0_14 = arith.constant 0 : index
    %18 = vector.load %arg7[%c2, %c0_14] : memref<14x96xf32, #tpu.memory_space<vmem>>, vector<1x96xf32>
    %19 = vector.extract_strided_slice %18 {offsets = [0, 0], sizes = [1, 32], strides = [1, 1]} : vector<1x96xf32> to vector<1x32xf32>
    %20 = vector.broadcast %19 : vector<1x32xf32> to vector<11x32xf32>
    %21 = arith.mulf %15, %20 : vector<11x32xf32>
    %cst_15 = arith.constant dense<0.000000e+00> : vector<11xf32>
    %22 = vector.multi_reduction <add>, %21, %cst_15 [1] : vector<11x32xf32> to vector<11xf32>
    %23 = vector.shape_cast %22 : vector<11xf32> to vector<11x1xf32>
    %24 = tpu.concatenate %15, %23 in 1 : vector<11x32xf32>, vector<11x1xf32> -> vector<11x33xf32>
    %cst_16 = arith.constant dense<0.000000e+00> : vector<36x33xf32>
    %25 = tpu.matmul %2, %24, %cst_16 {dimension_numbers = #tpu.dot_dimension_numbers<[1], [0], [0], [1], [0, 0, 1, 1], [], []>} : vector<36x11xf32>, vector<11x33xf32>, vector<36x33xf32> -> vector<36x33xf32>
    %26 = vector.extract_strided_slice %25 {offsets = [0, 0], sizes = [18, 32], strides = [1, 1]} : vector<36x33xf32> to vector<18x32xf32>
    %27 = vector.extract_strided_slice %25 {offsets = [18, 32], sizes = [18, 1], strides = [1, 1]} : vector<36x33xf32> to vector<18x1xf32>
    %28 = tpu.concatenate %26, %1 in 1 : vector<18x32xf32>, vector<18x16xf32> -> vector<18x48xf32>
    %c32 = arith.constant 32 : index
    %c0_17 = arith.constant 0 : index
    %29 = vector.load %arg6[%c32, %c0_17] : memref<368x96xf32, #tpu.memory_space<vmem>>, vector<48x96xf32>
    %cst_18 = arith.constant dense<0.000000e+00> : vector<18x96xf32>
    %30 = tpu.matmul %28, %29, %cst_18 {dimension_numbers = #tpu.dot_dimension_numbers<[1], [0], [0], [1], [0, 0, 1, 1], [], []>} : vector<18x48xf32>, vector<48x96xf32>, vector<18x96xf32> -> vector<18x96xf32>
    %31 = vector.extract_strided_slice %30 {offsets = [0, 0], sizes = [18, 32], strides = [1, 1]} : vector<18x96xf32> to vector<18x32xf32>
    %cst_19 = arith.constant 0.000000e+00 : f32
    %32 = vector.broadcast %cst_19 : f32 to vector<18x32xf32>
    %33 = arith.cmpf ogt, %31, %32 : vector<18x32xf32>
    %cst_20 = arith.constant 0.00999999977 : f32
    %34 = vector.broadcast %cst_20 : f32 to vector<18x32xf32>
    %35 = arith.mulf %34, %31 : vector<18x32xf32>
    %36 = arith.select %33, %31, %35 : vector<18x32xi1>, vector<18x32xf32>
    %37 = vector.extract_strided_slice %30 {offsets = [0, 32], sizes = [18, 32], strides = [1, 1]} : vector<18x96xf32> to vector<18x32xf32>
    %38 = vector.broadcast %17 : vector<1x32xf32> to vector<18x32xf32>
    %39 = arith.mulf %36, %38 : vector<18x32xf32>
    %cst_21 = arith.constant dense<0.000000e+00> : vector<18xf32>
    %40 = vector.multi_reduction <add>, %39, %cst_21 [1] : vector<18x32xf32> to vector<18xf32>
    %41 = vector.shape_cast %40 : vector<18xf32> to vector<18x1xf32>
    %42 = arith.addf %41, %27 : vector<18x1xf32>
    %cst_22 = arith.constant 0.000000e+00 : f32
    %43 = vector.broadcast %cst_22 : f32 to vector<18x1xf32>
    %44 = arith.cmpf ogt, %42, %43 : vector<18x1xf32>
    %cst_23 = arith.constant 0.00999999977 : f32
    %45 = vector.broadcast %cst_23 : f32 to vector<18x1xf32>
    %46 = arith.mulf %45, %42 : vector<18x1xf32>
    %47 = arith.select %44, %42, %46 : vector<18x1xi1>, vector<18x1xf32>
    %cst_24 = arith.constant dense<0xFF800000> : vector<1xf32>
    %48 = vector.multi_reduction <maximumf>, %47, %cst_24 [0] : vector<18x1xf32> to vector<1xf32>
    %49 = vector.shape_cast %48 : vector<1xf32> to vector<1x1xf32>
    %50 = vector.broadcast %49 : vector<1x1xf32> to vector<18x1xf32>
    %51 = arith.subf %47, %50 : vector<18x1xf32>
    %52 = math.exp %51 : vector<18x1xf32>
    %53 = vector.broadcast %52 : vector<18x1xf32> to vector<18x32xf32>
    %54 = arith.mulf %37, %53 : vector<18x32xf32>
    %55 = tpu.concatenate %54, %52 in 1 : vector<18x32xf32>, vector<18x1xf32> -> vector<18x33xf32>
    %cst_25 = arith.constant dense<0.000000e+00> : vector<11x33xf32>
    %56 = tpu.matmul %3, %55, %cst_25 {dimension_numbers = #tpu.dot_dimension_numbers<[1], [0], [0], [1], [0, 0, 1, 1], [], []>} : vector<11x18xf32>, vector<18x33xf32>, vector<11x33xf32> -> vector<11x33xf32>
    %57 = vector.extract_strided_slice %56 {offsets = [0, 0], sizes = [11, 32], strides = [1, 1]} : vector<11x33xf32> to vector<11x32xf32>
    %58 = vector.extract_strided_slice %56 {offsets = [0, 32], sizes = [11, 1], strides = [1, 1]} : vector<11x33xf32> to vector<11x1xf32>
    %cst_26 = arith.constant 1.000000e-30 : f32
    %59 = vector.broadcast %cst_26 : f32 to vector<11x1xf32>
    %60 = arith.maximumf %58, %59 : vector<11x1xf32>
    %61 = vector.broadcast %60 : vector<11x1xf32> to vector<11x32xf32>
    %62 = arith.divf %57, %61 : vector<11x32xf32>
    %c3 = arith.constant 3 : index
    %c0_27 = arith.constant 0 : index
    %63 = vector.load %arg7[%c3, %c0_27] : memref<14x96xf32, #tpu.memory_space<vmem>>, vector<1x96xf32>
    %64 = vector.extract_strided_slice %63 {offsets = [0, 0], sizes = [1, 32], strides = [1, 1]} : vector<1x96xf32> to vector<1x32xf32>
    %65 = vector.broadcast %64 : vector<1x32xf32> to vector<11x32xf32>
    %66 = arith.addf %62, %65 : vector<11x32xf32>
    %cst_28 = arith.constant 0.000000e+00 : f32
    %67 = vector.broadcast %cst_28 : f32 to vector<11x32xf32>
    %68 = arith.cmpf ogt, %66, %67 : vector<11x32xf32>
    %69 = math.exp %66 : vector<11x32xf32>
    %cst_29 = arith.constant 1.000000e+00 : f32
    %70 = vector.broadcast %cst_29 : f32 to vector<11x32xf32>
    %71 = arith.subf %69, %70 : vector<11x32xf32>
    %72 = arith.select %68, %66, %71 : vector<11x32xi1>, vector<11x32xf32>
    %c80 = arith.constant 80 : index
    %c0_30 = arith.constant 0 : index
    %73 = vector.load %arg6[%c80, %c0_30] : memref<368x96xf32, #tpu.memory_space<vmem>>, vector<32x96xf32>
    %cst_31 = arith.constant dense<0.000000e+00> : vector<11x96xf32>
    %74 = tpu.matmul %72, %73, %cst_31 {dimension_numbers = #tpu.dot_dimension_numbers<[1], [0], [0], [1], [0, 0, 1, 1], [], []>} : vector<11x32xf32>, vector<32x96xf32>, vector<11x96xf32> -> vector<11x96xf32>
    %c4 = arith.constant 4 : index
    %c0_32 = arith.constant 0 : index
    %75 = vector.load %arg7[%c4, %c0_32] : memref<14x96xf32, #tpu.memory_space<vmem>>, vector<1x96xf32>
    %76 = vector.broadcast %75 : vector<1x96xf32> to vector<11x96xf32>
    %77 = arith.addf %74, %76 : vector<11x96xf32>
    %c112 = arith.constant 112 : index
    %c0_33 = arith.constant 0 : index
    %78 = vector.load %arg6[%c112, %c0_33] : memref<368x96xf32, #tpu.memory_space<vmem>>, vector<32x96xf32>
    %cst_34 = arith.constant dense<0.000000e+00> : vector<11x96xf32>
    %79 = tpu.matmul %15, %78, %cst_34 {dimension_numbers = #tpu.dot_dimension_numbers<[1], [0], [0], [1], [0, 0, 1, 1], [], []>} : vector<11x32xf32>, vector<32x96xf32>, vector<11x96xf32> -> vector<11x96xf32>
    %c5 = arith.constant 5 : index
    %c0_35 = arith.constant 0 : index
    %80 = vector.load %arg7[%c5, %c0_35] : memref<14x96xf32, #tpu.memory_space<vmem>>, vector<1x96xf32>
    %81 = vector.broadcast %80 : vector<1x96xf32> to vector<11x96xf32>
    %82 = arith.addf %79, %81 : vector<11x96xf32>
    %83 = vector.extract_strided_slice %77 {offsets = [0, 0], sizes = [11, 32], strides = [1, 1]} : vector<11x96xf32> to vector<11x32xf32>
    %84 = vector.extract_strided_slice %82 {offsets = [0, 0], sizes = [11, 32], strides = [1, 1]} : vector<11x96xf32> to vector<11x32xf32>
    %85 = arith.addf %83, %84 : vector<11x32xf32>
    %86 = arith.negf %85 : vector<11x32xf32>
    %87 = math.exp %86 : vector<11x32xf32>
    %cst_36 = arith.constant 1.000000e+00 : f32
    %88 = vector.broadcast %cst_36 : f32 to vector<11x32xf32>
    %89 = arith.addf %88, %87 : vector<11x32xf32>
    %90 = arith.divf %88, %89 : vector<11x32xf32>
    %91 = vector.extract_strided_slice %77 {offsets = [0, 32], sizes = [11, 32], strides = [1, 1]} : vector<11x96xf32> to vector<11x32xf32>
    %92 = vector.extract_strided_slice %82 {offsets = [0, 32], sizes = [11, 32], strides = [1, 1]} : vector<11x96xf32> to vector<11x32xf32>
    %93 = arith.addf %91, %92 : vector<11x32xf32>
    %94 = arith.negf %93 : vector<11x32xf32>
    %95 = math.exp %94 : vector<11x32xf32>
    %cst_37 = arith.constant 1.000000e+00 : f32
    %96 = vector.broadcast %cst_37 : f32 to vector<11x32xf32>
    %97 = arith.addf %96, %95 : vector<11x32xf32>
    %98 = arith.divf %96, %97 : vector<11x32xf32>
    %99 = vector.extract_strided_slice %77 {offsets = [0, 64], sizes = [11, 32], strides = [1, 1]} : vector<11x96xf32> to vector<11x32xf32>
    %100 = vector.extract_strided_slice %82 {offsets = [0, 64], sizes = [11, 32], strides = [1, 1]} : vector<11x96xf32> to vector<11x32xf32>
    %101 = arith.mulf %90, %100 : vector<11x32xf32>
    %102 = arith.addf %99, %101 : vector<11x32xf32>
    %103 = math.tanh %102 : vector<11x32xf32>
    %cst_38 = arith.constant 1.000000e+00 : f32
    %104 = vector.broadcast %cst_38 : f32 to vector<11x32xf32>
    %105 = arith.subf %104, %98 : vector<11x32xf32>
    %106 = arith.mulf %105, %103 : vector<11x32xf32>
    %107 = arith.mulf %98, %15 : vector<11x32xf32>
    %108 = arith.addf %106, %107 : vector<11x32xf32>
    %cst_39 = arith.constant 0.000000e+00 : f32
    %109 = vector.broadcast %cst_39 : f32 to vector<11x32xf32>
    %110 = arith.maximumf %108, %109 : vector<11x32xf32>
    %c144 = arith.constant 144 : index
    %c0_40 = arith.constant 0 : index
    %111 = vector.load %arg6[%c144, %c0_40] : memref<368x96xf32, #tpu.memory_space<vmem>>, vector<32x96xf32>
    %cst_41 = arith.constant dense<0.000000e+00> : vector<11x96xf32>
    %112 = tpu.matmul %110, %111, %cst_41 {dimension_numbers = #tpu.dot_dimension_numbers<[1], [0], [0], [1], [0, 0, 1, 1], [], []>} : vector<11x32xf32>, vector<32x96xf32>, vector<11x96xf32> -> vector<11x96xf32>
    %cst_42 = arith.constant dense<0.000000e+00> : vector<36x96xf32>
    %113 = tpu.matmul %2, %112, %cst_42 {dimension_numbers = #tpu.dot_dimension_numbers<[1], [0], [0], [1], [0, 0, 1, 1], [], []>} : vector<36x11xf32>, vector<11x96xf32>, vector<36x96xf32> -> vector<36x96xf32>
    %114 = vector.extract_strided_slice %113 {offsets = [0, 32], sizes = [18, 1], strides = [1, 1]} : vector<36x96xf32> to vector<18x1xf32>
    %115 = vector.extract_strided_slice %113 {offsets = [18, 33], sizes = [18, 1], strides = [1, 1]} : vector<36x96xf32> to vector<18x1xf32>
    %116 = arith.addf %114, %115 : vector<18x1xf32>
    %cst_43 = arith.constant 0.000000e+00 : f32
    %117 = vector.broadcast %cst_43 : f32 to vector<18x1xf32>
    %118 = arith.cmpf ogt, %116, %117 : vector<18x1xf32>
    %cst_44 = arith.constant 0.00999999977 : f32
    %119 = vector.broadcast %cst_44 : f32 to vector<18x1xf32>
    %120 = arith.mulf %119, %116 : vector<18x1xf32>
    %121 = arith.select %118, %116, %120 : vector<18x1xi1>, vector<18x1xf32>
    %122 = vector.extract_strided_slice %113 {offsets = [0, 0], sizes = [18, 32], strides = [1, 1]} : vector<36x96xf32> to vector<18x32xf32>
    %cst_45 = arith.constant dense<0xFF800000> : vector<1xf32>
    %123 = vector.multi_reduction <maximumf>, %121, %cst_45 [0] : vector<18x1xf32> to vector<1xf32>
    %124 = vector.shape_cast %123 : vector<1xf32> to vector<1x1xf32>
    %125 = vector.broadcast %124 : vector<1x1xf32> to vector<18x1xf32>
    %126 = arith.subf %121, %125 : vector<18x1xf32>
    %127 = math.exp %126 : vector<18x1xf32>
    %128 = vector.broadcast %127 : vector<18x1xf32> to vector<18x32xf32>
    %129 = arith.mulf %122, %128 : vector<18x32xf32>
    %130 = tpu.concatenate %129, %127 in 1 : vector<18x32xf32>, vector<18x1xf32> -> vector<18x33xf32>
    %cst_46 = arith.constant dense<0.000000e+00> : vector<11x33xf32>
    %131 = tpu.matmul %3, %130, %cst_46 {dimension_numbers = #tpu.dot_dimension_numbers<[1], [0], [0], [1], [0, 0, 1, 1], [], []>} : vector<11x18xf32>, vector<18x33xf32>, vector<11x33xf32> -> vector<11x33xf32>
    %132 = vector.extract_strided_slice %131 {offsets = [0, 0], sizes = [11, 32], strides = [1, 1]} : vector<11x33xf32> to vector<11x32xf32>
    %133 = vector.extract_strided_slice %131 {offsets = [0, 32], sizes = [11, 1], strides = [1, 1]} : vector<11x33xf32> to vector<11x1xf32>
    %cst_47 = arith.constant 1.000000e-30 : f32
    %134 = vector.broadcast %cst_47 : f32 to vector<11x1xf32>
    %135 = arith.maximumf %133, %134 : vector<11x1xf32>
    %136 = vector.broadcast %135 : vector<11x1xf32> to vector<11x32xf32>
    %137 = arith.divf %132, %136 : vector<11x32xf32>
    %c6 = arith.constant 6 : index
    %c0_48 = arith.constant 0 : index
    %138 = vector.load %arg7[%c6, %c0_48] : memref<14x96xf32, #tpu.memory_space<vmem>>, vector<1x96xf32>
    %139 = vector.extract_strided_slice %138 {offsets = [0, 0], sizes = [1, 32], strides = [1, 1]} : vector<1x96xf32> to vector<1x32xf32>
    %140 = vector.broadcast %139 : vector<1x32xf32> to vector<11x32xf32>
    %141 = arith.addf %137, %140 : vector<11x32xf32>
    %cst_49 = arith.constant 0.000000e+00 : f32
    %142 = vector.broadcast %cst_49 : f32 to vector<11x32xf32>
    %143 = arith.cmpf ogt, %141, %142 : vector<11x32xf32>
    %144 = math.exp %141 : vector<11x32xf32>
    %cst_50 = arith.constant 1.000000e+00 : f32
    %145 = vector.broadcast %cst_50 : f32 to vector<11x32xf32>
    %146 = arith.subf %144, %145 : vector<11x32xf32>
    %147 = arith.select %143, %141, %146 : vector<11x32xi1>, vector<11x32xf32>
    %c176 = arith.constant 176 : index
    %c0_51 = arith.constant 0 : index
    %148 = vector.load %arg6[%c176, %c0_51] : memref<368x96xf32, #tpu.memory_space<vmem>>, vector<32x96xf32>
    %cst_52 = arith.constant dense<0.000000e+00> : vector<11x96xf32>
    %149 = tpu.matmul %147, %148, %cst_52 {dimension_numbers = #tpu.dot_dimension_numbers<[1], [0], [0], [1], [0, 0, 1, 1], [], []>} : vector<11x32xf32>, vector<32x96xf32>, vector<11x96xf32> -> vector<11x96xf32>
    %c7 = arith.constant 7 : index
    %c0_53 = arith.constant 0 : index
    %150 = vector.load %arg7[%c7, %c0_53] : memref<14x96xf32, #tpu.memory_space<vmem>>, vector<1x96xf32>
    %151 = vector.broadcast %150 : vector<1x96xf32> to vector<11x96xf32>
    %152 = arith.addf %149, %151 : vector<11x96xf32>
    %c208 = arith.constant 208 : index
    %c0_54 = arith.constant 0 : index
    %153 = vector.load %arg6[%c208, %c0_54] : memref<368x96xf32, #tpu.memory_space<vmem>>, vector<32x96xf32>
    %cst_55 = arith.constant dense<0.000000e+00> : vector<11x96xf32>
    %154 = tpu.matmul %110, %153, %cst_55 {dimension_numbers = #tpu.dot_dimension_numbers<[1], [0], [0], [1], [0, 0, 1, 1], [], []>} : vector<11x32xf32>, vector<32x96xf32>, vector<11x96xf32> -> vector<11x96xf32>
    %c8 = arith.constant 8 : index
    %c0_56 = arith.constant 0 : index
    %155 = vector.load %arg7[%c8, %c0_56] : memref<14x96xf32, #tpu.memory_space<vmem>>, vector<1x96xf32>
    %156 = vector.broadcast %155 : vector<1x96xf32> to vector<11x96xf32>
    %157 = arith.addf %154, %156 : vector<11x96xf32>
    %158 = vector.extract_strided_slice %152 {offsets = [0, 0], sizes = [11, 32], strides = [1, 1]} : vector<11x96xf32> to vector<11x32xf32>
    %159 = vector.extract_strided_slice %157 {offsets = [0, 0], sizes = [11, 32], strides = [1, 1]} : vector<11x96xf32> to vector<11x32xf32>
    %160 = arith.addf %158, %159 : vector<11x32xf32>
    %161 = arith.negf %160 : vector<11x32xf32>
    %162 = math.exp %161 : vector<11x32xf32>
    %cst_57 = arith.constant 1.000000e+00 : f32
    %163 = vector.broadcast %cst_57 : f32 to vector<11x32xf32>
    %164 = arith.addf %163, %162 : vector<11x32xf32>
    %165 = arith.divf %163, %164 : vector<11x32xf32>
    %166 = vector.extract_strided_slice %152 {offsets = [0, 32], sizes = [11, 32], strides = [1, 1]} : vector<11x96xf32> to vector<11x32xf32>
    %167 = vector.extract_strided_slice %157 {offsets = [0, 32], sizes = [11, 32], strides = [1, 1]} : vector<11x96xf32> to vector<11x32xf32>
    %168 = arith.addf %166, %167 : vector<11x32xf32>
    %169 = arith.negf %168 : vector<11x32xf32>
    %170 = math.exp %169 : vector<11x32xf32>
    %cst_58 = arith.constant 1.000000e+00 : f32
    %171 = vector.broadcast %cst_58 : f32 to vector<11x32xf32>
    %172 = arith.addf %171, %170 : vector<11x32xf32>
    %173 = arith.divf %171, %172 : vector<11x32xf32>
    %174 = vector.extract_strided_slice %152 {offsets = [0, 64], sizes = [11, 32], strides = [1, 1]} : vector<11x96xf32> to vector<11x32xf32>
    %175 = vector.extract_strided_slice %157 {offsets = [0, 64], sizes = [11, 32], strides = [1, 1]} : vector<11x96xf32> to vector<11x32xf32>
    %176 = arith.mulf %165, %175 : vector<11x32xf32>
    %177 = arith.addf %174, %176 : vector<11x32xf32>
    %178 = math.tanh %177 : vector<11x32xf32>
    %cst_59 = arith.constant 1.000000e+00 : f32
    %179 = vector.broadcast %cst_59 : f32 to vector<11x32xf32>
    %180 = arith.subf %179, %173 : vector<11x32xf32>
    %181 = arith.mulf %180, %178 : vector<11x32xf32>
    %182 = arith.mulf %173, %110 : vector<11x32xf32>
    %183 = arith.addf %181, %182 : vector<11x32xf32>
    %cst_60 = arith.constant 0.000000e+00 : f32
    %184 = vector.broadcast %cst_60 : f32 to vector<11x32xf32>
    %185 = arith.maximumf %183, %184 : vector<11x32xf32>
    %c0_61 = arith.constant 0 : index
    %c0_62 = arith.constant 0 : index
    %186 = vector.load %arg4[%c0_61, %c0_62] : memref<11x2xf32, #tpu.memory_space<vmem>>, vector<11x2xf32>
    %c0_63 = arith.constant 0 : index
    %c0_64 = arith.constant 0 : index
    %187 = vector.load %arg5[%c0_63, %c0_64] : memref<2x11xf32, #tpu.memory_space<vmem>>, vector<2x11xf32>
    %cst_65 = arith.constant dense<0.000000e+00> : vector<2x32xf32>
    %188 = tpu.matmul %187, %185, %cst_65 {dimension_numbers = #tpu.dot_dimension_numbers<[1], [0], [0], [1], [0, 0, 1, 1], [], []>} : vector<2x11xf32>, vector<11x32xf32>, vector<2x32xf32> -> vector<2x32xf32>
    %cst_66 = arith.constant 0.000000e+00 : f32
    %189 = vector.broadcast %cst_66 : f32 to vector<2x32xf32>
    %190 = arith.maximumf %188, %189 : vector<2x32xf32>
    %c240 = arith.constant 240 : index
    %c0_67 = arith.constant 0 : index
    %191 = vector.load %arg6[%c240, %c0_67] : memref<368x96xf32, #tpu.memory_space<vmem>>, vector<32x96xf32>
    %cst_68 = arith.constant dense<0.000000e+00> : vector<11x96xf32>
    %192 = tpu.matmul %185, %191, %cst_68 {dimension_numbers = #tpu.dot_dimension_numbers<[1], [0], [0], [1], [0, 0, 1, 1], [], []>} : vector<11x32xf32>, vector<32x96xf32>, vector<11x96xf32> -> vector<11x96xf32>
    %193 = vector.extract_strided_slice %192 {offsets = [0, 0], sizes = [11, 32], strides = [1, 1]} : vector<11x96xf32> to vector<11x32xf32>
    %194 = vector.extract_strided_slice %192 {offsets = [0, 32], sizes = [11, 1], strides = [1, 1]} : vector<11x96xf32> to vector<11x1xf32>
    %c9 = arith.constant 9 : index
    %c0_69 = arith.constant 0 : index
    %195 = vector.load %arg7[%c9, %c0_69] : memref<14x96xf32, #tpu.memory_space<vmem>>, vector<1x96xf32>
    %196 = vector.extract_strided_slice %195 {offsets = [0, 0], sizes = [1, 32], strides = [1, 1]} : vector<1x96xf32> to vector<1x32xf32>
    %c10 = arith.constant 10 : index
    %c0_70 = arith.constant 0 : index
    %197 = vector.load %arg7[%c10, %c0_70] : memref<14x96xf32, #tpu.memory_space<vmem>>, vector<1x96xf32>
    %198 = vector.extract_strided_slice %197 {offsets = [0, 0], sizes = [1, 32], strides = [1, 1]} : vector<1x96xf32> to vector<1x32xf32>
    %199 = vector.broadcast %196 : vector<1x32xf32> to vector<2x32xf32>
    %200 = arith.mulf %190, %199 : vector<2x32xf32>
    %cst_71 = arith.constant dense<0.000000e+00> : vector<2xf32>
    %201 = vector.multi_reduction <add>, %200, %cst_71 [1] : vector<2x32xf32> to vector<2xf32>
    %202 = vector.shape_cast %201 : vector<2xf32> to vector<2x1xf32>
    %cst_72 = arith.constant dense<0.000000e+00> : vector<11x1xf32>
    %203 = tpu.matmul %186, %202, %cst_72 {dimension_numbers = #tpu.dot_dimension_numbers<[1], [0], [0], [1], [0, 0, 1, 1], [], []>} : vector<11x2xf32>, vector<2x1xf32>, vector<11x1xf32> -> vector<11x1xf32>
    %204 = arith.addf %194, %203 : vector<11x1xf32>
    %cst_73 = arith.constant 0.000000e+00 : f32
    %205 = vector.broadcast %cst_73 : f32 to vector<11x1xf32>
    %206 = arith.cmpf ogt, %204, %205 : vector<11x1xf32>
    %cst_74 = arith.constant 0.00999999977 : f32
    %207 = vector.broadcast %cst_74 : f32 to vector<11x1xf32>
    %208 = arith.mulf %207, %204 : vector<11x1xf32>
    %209 = arith.select %206, %204, %208 : vector<11x1xi1>, vector<11x1xf32>
    %cst_75 = arith.constant dense<0xFF800000> : vector<1xf32>
    %210 = vector.multi_reduction <maximumf>, %209, %cst_75 [0] : vector<11x1xf32> to vector<1xf32>
    %211 = vector.shape_cast %210 : vector<1xf32> to vector<1x1xf32>
    %212 = vector.broadcast %211 : vector<1x1xf32> to vector<11x1xf32>
    %213 = arith.subf %209, %212 : vector<11x1xf32>
    %214 = math.exp %213 : vector<11x1xf32>
    %215 = vector.broadcast %214 : vector<11x1xf32> to vector<11x32xf32>
    %216 = arith.mulf %193, %215 : vector<11x32xf32>
    %217 = tpu.concatenate %216, %214 in 1 : vector<11x32xf32>, vector<11x1xf32> -> vector<11x33xf32>
    %cst_76 = arith.constant dense<0.000000e+00> : vector<2x33xf32>
    %218 = tpu.matmul %187, %217, %cst_76 {dimension_numbers = #tpu.dot_dimension_numbers<[1], [0], [0], [1], [0, 0, 1, 1], [], []>} : vector<2x11xf32>, vector<11x33xf32>, vector<2x33xf32> -> vector<2x33xf32>
    %219 = vector.extract_strided_slice %218 {offsets = [0, 0], sizes = [2, 32], strides = [1, 1]} : vector<2x33xf32> to vector<2x32xf32>
    %220 = vector.extract_strided_slice %218 {offsets = [0, 32], sizes = [2, 1], strides = [1, 1]} : vector<2x33xf32> to vector<2x1xf32>
    %cst_77 = arith.constant 1.000000e-30 : f32
    %221 = vector.broadcast %cst_77 : f32 to vector<2x1xf32>
    %222 = arith.maximumf %220, %221 : vector<2x1xf32>
    %223 = vector.broadcast %222 : vector<2x1xf32> to vector<2x32xf32>
    %224 = arith.divf %219, %223 : vector<2x32xf32>
    %225 = vector.broadcast %198 : vector<1x32xf32> to vector<2x32xf32>
    %226 = arith.addf %224, %225 : vector<2x32xf32>
    %cst_78 = arith.constant 0.000000e+00 : f32
    %227 = vector.broadcast %cst_78 : f32 to vector<2x32xf32>
    %228 = arith.cmpf ogt, %226, %227 : vector<2x32xf32>
    %229 = math.exp %226 : vector<2x32xf32>
    %cst_79 = arith.constant 1.000000e+00 : f32
    %230 = vector.broadcast %cst_79 : f32 to vector<2x32xf32>
    %231 = arith.subf %229, %230 : vector<2x32xf32>
    %232 = arith.select %228, %226, %231 : vector<2x32xi1>, vector<2x32xf32>
    %c272 = arith.constant 272 : index
    %c0_80 = arith.constant 0 : index
    %233 = vector.load %arg6[%c272, %c0_80] : memref<368x96xf32, #tpu.memory_space<vmem>>, vector<32x96xf32>
    %cst_81 = arith.constant dense<0.000000e+00> : vector<2x96xf32>
    %234 = tpu.matmul %232, %233, %cst_81 {dimension_numbers = #tpu.dot_dimension_numbers<[1], [0], [0], [1], [0, 0, 1, 1], [], []>} : vector<2x32xf32>, vector<32x96xf32>, vector<2x96xf32> -> vector<2x96xf32>
    %c11 = arith.constant 11 : index
    %c0_82 = arith.constant 0 : index
    %235 = vector.load %arg7[%c11, %c0_82] : memref<14x96xf32, #tpu.memory_space<vmem>>, vector<1x96xf32>
    %236 = vector.broadcast %235 : vector<1x96xf32> to vector<2x96xf32>
    %237 = arith.addf %234, %236 : vector<2x96xf32>
    %c304 = arith.constant 304 : index
    %c0_83 = arith.constant 0 : index
    %238 = vector.load %arg6[%c304, %c0_83] : memref<368x96xf32, #tpu.memory_space<vmem>>, vector<32x96xf32>
    %cst_84 = arith.constant dense<0.000000e+00> : vector<2x96xf32>
    %239 = tpu.matmul %190, %238, %cst_84 {dimension_numbers = #tpu.dot_dimension_numbers<[1], [0], [0], [1], [0, 0, 1, 1], [], []>} : vector<2x32xf32>, vector<32x96xf32>, vector<2x96xf32> -> vector<2x96xf32>
    %c12 = arith.constant 12 : index
    %c0_85 = arith.constant 0 : index
    %240 = vector.load %arg7[%c12, %c0_85] : memref<14x96xf32, #tpu.memory_space<vmem>>, vector<1x96xf32>
    %241 = vector.broadcast %240 : vector<1x96xf32> to vector<2x96xf32>
    %242 = arith.addf %239, %241 : vector<2x96xf32>
    %243 = vector.extract_strided_slice %237 {offsets = [0, 0], sizes = [2, 32], strides = [1, 1]} : vector<2x96xf32> to vector<2x32xf32>
    %244 = vector.extract_strided_slice %242 {offsets = [0, 0], sizes = [2, 32], strides = [1, 1]} : vector<2x96xf32> to vector<2x32xf32>
    %245 = arith.addf %243, %244 : vector<2x32xf32>
    %246 = arith.negf %245 : vector<2x32xf32>
    %247 = math.exp %246 : vector<2x32xf32>
    %cst_86 = arith.constant 1.000000e+00 : f32
    %248 = vector.broadcast %cst_86 : f32 to vector<2x32xf32>
    %249 = arith.addf %248, %247 : vector<2x32xf32>
    %250 = arith.divf %248, %249 : vector<2x32xf32>
    %251 = vector.extract_strided_slice %237 {offsets = [0, 32], sizes = [2, 32], strides = [1, 1]} : vector<2x96xf32> to vector<2x32xf32>
    %252 = vector.extract_strided_slice %242 {offsets = [0, 32], sizes = [2, 32], strides = [1, 1]} : vector<2x96xf32> to vector<2x32xf32>
    %253 = arith.addf %251, %252 : vector<2x32xf32>
    %254 = arith.negf %253 : vector<2x32xf32>
    %255 = math.exp %254 : vector<2x32xf32>
    %cst_87 = arith.constant 1.000000e+00 : f32
    %256 = vector.broadcast %cst_87 : f32 to vector<2x32xf32>
    %257 = arith.addf %256, %255 : vector<2x32xf32>
    %258 = arith.divf %256, %257 : vector<2x32xf32>
    %259 = vector.extract_strided_slice %237 {offsets = [0, 64], sizes = [2, 32], strides = [1, 1]} : vector<2x96xf32> to vector<2x32xf32>
    %260 = vector.extract_strided_slice %242 {offsets = [0, 64], sizes = [2, 32], strides = [1, 1]} : vector<2x96xf32> to vector<2x32xf32>
    %261 = arith.mulf %250, %260 : vector<2x32xf32>
    %262 = arith.addf %259, %261 : vector<2x32xf32>
    %263 = math.tanh %262 : vector<2x32xf32>
    %cst_88 = arith.constant 1.000000e+00 : f32
    %264 = vector.broadcast %cst_88 : f32 to vector<2x32xf32>
    %265 = arith.subf %264, %258 : vector<2x32xf32>
    %266 = arith.mulf %265, %263 : vector<2x32xf32>
    %267 = arith.mulf %258, %190 : vector<2x32xf32>
    %268 = arith.addf %266, %267 : vector<2x32xf32>
    %cst_89 = arith.constant 0.000000e+00 : f32
    %269 = vector.broadcast %cst_89 : f32 to vector<2x32xf32>
    %270 = arith.maximumf %268, %269 : vector<2x32xf32>
    %271 = vector.broadcast %196 : vector<1x32xf32> to vector<2x32xf32>
    %272 = arith.mulf %270, %271 : vector<2x32xf32>
    %cst_90 = arith.constant dense<0.000000e+00> : vector<2xf32>
    %273 = vector.multi_reduction <add>, %272, %cst_90 [1] : vector<2x32xf32> to vector<2xf32>
    %274 = vector.shape_cast %273 : vector<2xf32> to vector<2x1xf32>
    %cst_91 = arith.constant dense<0.000000e+00> : vector<11x1xf32>
    %275 = tpu.matmul %186, %274, %cst_91 {dimension_numbers = #tpu.dot_dimension_numbers<[1], [0], [0], [1], [0, 0, 1, 1], [], []>} : vector<11x2xf32>, vector<2x1xf32>, vector<11x1xf32> -> vector<11x1xf32>
    %276 = arith.addf %194, %275 : vector<11x1xf32>
    %cst_92 = arith.constant 0.000000e+00 : f32
    %277 = vector.broadcast %cst_92 : f32 to vector<11x1xf32>
    %278 = arith.cmpf ogt, %276, %277 : vector<11x1xf32>
    %cst_93 = arith.constant 0.00999999977 : f32
    %279 = vector.broadcast %cst_93 : f32 to vector<11x1xf32>
    %280 = arith.mulf %279, %276 : vector<11x1xf32>
    %281 = arith.select %278, %276, %280 : vector<11x1xi1>, vector<11x1xf32>
    %cst_94 = arith.constant dense<0xFF800000> : vector<1xf32>
    %282 = vector.multi_reduction <maximumf>, %281, %cst_94 [0] : vector<11x1xf32> to vector<1xf32>
    %283 = vector.shape_cast %282 : vector<1xf32> to vector<1x1xf32>
    %284 = vector.broadcast %283 : vector<1x1xf32> to vector<11x1xf32>
    %285 = arith.subf %281, %284 : vector<11x1xf32>
    %286 = math.exp %285 : vector<11x1xf32>
    %287 = vector.broadcast %286 : vector<11x1xf32> to vector<11x32xf32>
    %288 = arith.mulf %193, %287 : vector<11x32xf32>
    %289 = tpu.concatenate %288, %286 in 1 : vector<11x32xf32>, vector<11x1xf32> -> vector<11x33xf32>
    %cst_95 = arith.constant dense<0.000000e+00> : vector<2x33xf32>
    %290 = tpu.matmul %187, %289, %cst_95 {dimension_numbers = #tpu.dot_dimension_numbers<[1], [0], [0], [1], [0, 0, 1, 1], [], []>} : vector<2x11xf32>, vector<11x33xf32>, vector<2x33xf32> -> vector<2x33xf32>
    %291 = vector.extract_strided_slice %290 {offsets = [0, 0], sizes = [2, 32], strides = [1, 1]} : vector<2x33xf32> to vector<2x32xf32>
    %292 = vector.extract_strided_slice %290 {offsets = [0, 32], sizes = [2, 1], strides = [1, 1]} : vector<2x33xf32> to vector<2x1xf32>
    %cst_96 = arith.constant 1.000000e-30 : f32
    %293 = vector.broadcast %cst_96 : f32 to vector<2x1xf32>
    %294 = arith.maximumf %292, %293 : vector<2x1xf32>
    %295 = vector.broadcast %294 : vector<2x1xf32> to vector<2x32xf32>
    %296 = arith.divf %291, %295 : vector<2x32xf32>
    %297 = vector.broadcast %198 : vector<1x32xf32> to vector<2x32xf32>
    %298 = arith.addf %296, %297 : vector<2x32xf32>
    %cst_97 = arith.constant 0.000000e+00 : f32
    %299 = vector.broadcast %cst_97 : f32 to vector<2x32xf32>
    %300 = arith.cmpf ogt, %298, %299 : vector<2x32xf32>
    %301 = math.exp %298 : vector<2x32xf32>
    %cst_98 = arith.constant 1.000000e+00 : f32
    %302 = vector.broadcast %cst_98 : f32 to vector<2x32xf32>
    %303 = arith.subf %301, %302 : vector<2x32xf32>
    %304 = arith.select %300, %298, %303 : vector<2x32xi1>, vector<2x32xf32>
    %c272_99 = arith.constant 272 : index
    %c0_100 = arith.constant 0 : index
    %305 = vector.load %arg6[%c272_99, %c0_100] : memref<368x96xf32, #tpu.memory_space<vmem>>, vector<32x96xf32>
    %cst_101 = arith.constant dense<0.000000e+00> : vector<2x96xf32>
    %306 = tpu.matmul %304, %305, %cst_101 {dimension_numbers = #tpu.dot_dimension_numbers<[1], [0], [0], [1], [0, 0, 1, 1], [], []>} : vector<2x32xf32>, vector<32x96xf32>, vector<2x96xf32> -> vector<2x96xf32>
    %c11_102 = arith.constant 11 : index
    %c0_103 = arith.constant 0 : index
    %307 = vector.load %arg7[%c11_102, %c0_103] : memref<14x96xf32, #tpu.memory_space<vmem>>, vector<1x96xf32>
    %308 = vector.broadcast %307 : vector<1x96xf32> to vector<2x96xf32>
    %309 = arith.addf %306, %308 : vector<2x96xf32>
    %c304_104 = arith.constant 304 : index
    %c0_105 = arith.constant 0 : index
    %310 = vector.load %arg6[%c304_104, %c0_105] : memref<368x96xf32, #tpu.memory_space<vmem>>, vector<32x96xf32>
    %cst_106 = arith.constant dense<0.000000e+00> : vector<2x96xf32>
    %311 = tpu.matmul %270, %310, %cst_106 {dimension_numbers = #tpu.dot_dimension_numbers<[1], [0], [0], [1], [0, 0, 1, 1], [], []>} : vector<2x32xf32>, vector<32x96xf32>, vector<2x96xf32> -> vector<2x96xf32>
    %c12_107 = arith.constant 12 : index
    %c0_108 = arith.constant 0 : index
    %312 = vector.load %arg7[%c12_107, %c0_108] : memref<14x96xf32, #tpu.memory_space<vmem>>, vector<1x96xf32>
    %313 = vector.broadcast %312 : vector<1x96xf32> to vector<2x96xf32>
    %314 = arith.addf %311, %313 : vector<2x96xf32>
    %315 = vector.extract_strided_slice %309 {offsets = [0, 0], sizes = [2, 32], strides = [1, 1]} : vector<2x96xf32> to vector<2x32xf32>
    %316 = vector.extract_strided_slice %314 {offsets = [0, 0], sizes = [2, 32], strides = [1, 1]} : vector<2x96xf32> to vector<2x32xf32>
    %317 = arith.addf %315, %316 : vector<2x32xf32>
    %318 = arith.negf %317 : vector<2x32xf32>
    %319 = math.exp %318 : vector<2x32xf32>
    %cst_109 = arith.constant 1.000000e+00 : f32
    %320 = vector.broadcast %cst_109 : f32 to vector<2x32xf32>
    %321 = arith.addf %320, %319 : vector<2x32xf32>
    %322 = arith.divf %320, %321 : vector<2x32xf32>
    %323 = vector.extract_strided_slice %309 {offsets = [0, 32], sizes = [2, 32], strides = [1, 1]} : vector<2x96xf32> to vector<2x32xf32>
    %324 = vector.extract_strided_slice %314 {offsets = [0, 32], sizes = [2, 32], strides = [1, 1]} : vector<2x96xf32> to vector<2x32xf32>
    %325 = arith.addf %323, %324 : vector<2x32xf32>
    %326 = arith.negf %325 : vector<2x32xf32>
    %327 = math.exp %326 : vector<2x32xf32>
    %cst_110 = arith.constant 1.000000e+00 : f32
    %328 = vector.broadcast %cst_110 : f32 to vector<2x32xf32>
    %329 = arith.addf %328, %327 : vector<2x32xf32>
    %330 = arith.divf %328, %329 : vector<2x32xf32>
    %331 = vector.extract_strided_slice %309 {offsets = [0, 64], sizes = [2, 32], strides = [1, 1]} : vector<2x96xf32> to vector<2x32xf32>
    %332 = vector.extract_strided_slice %314 {offsets = [0, 64], sizes = [2, 32], strides = [1, 1]} : vector<2x96xf32> to vector<2x32xf32>
    %333 = arith.mulf %322, %332 : vector<2x32xf32>
    %334 = arith.addf %331, %333 : vector<2x32xf32>
    %335 = math.tanh %334 : vector<2x32xf32>
    %cst_111 = arith.constant 1.000000e+00 : f32
    %336 = vector.broadcast %cst_111 : f32 to vector<2x32xf32>
    %337 = arith.subf %336, %330 : vector<2x32xf32>
    %338 = arith.mulf %337, %335 : vector<2x32xf32>
    %339 = arith.mulf %330, %270 : vector<2x32xf32>
    %340 = arith.addf %338, %339 : vector<2x32xf32>
    %cst_112 = arith.constant 0.000000e+00 : f32
    %341 = vector.broadcast %cst_112 : f32 to vector<2x32xf32>
    %342 = arith.maximumf %340, %341 : vector<2x32xf32>
    %c336 = arith.constant 336 : index
    %c0_113 = arith.constant 0 : index
    %343 = vector.load %arg6[%c336, %c0_113] : memref<368x96xf32, #tpu.memory_space<vmem>>, vector<32x96xf32>
    %cst_114 = arith.constant dense<0.000000e+00> : vector<2x96xf32>
    %344 = tpu.matmul %342, %343, %cst_114 {dimension_numbers = #tpu.dot_dimension_numbers<[1], [0], [0], [1], [0, 0, 1, 1], [], []>} : vector<2x32xf32>, vector<32x96xf32>, vector<2x96xf32> -> vector<2x96xf32>
    %345 = vector.extract_strided_slice %344 {offsets = [0, 0], sizes = [2, 32], strides = [1, 1]} : vector<2x96xf32> to vector<2x32xf32>
    %c13 = arith.constant 13 : index
    %c0_115 = arith.constant 0 : index
    %346 = vector.load %arg7[%c13, %c0_115] : memref<14x96xf32, #tpu.memory_space<vmem>>, vector<1x96xf32>
    %347 = vector.extract_strided_slice %346 {offsets = [0, 0], sizes = [1, 32], strides = [1, 1]} : vector<1x96xf32> to vector<1x32xf32>
    %348 = vector.broadcast %347 : vector<1x32xf32> to vector<2x32xf32>
    %349 = arith.addf %345, %348 : vector<2x32xf32>
    %c0_116 = arith.constant 0 : index
    %c0_117 = arith.constant 0 : index
    %350 = vector.load %arg8[%c0_116, %c0_117] : memref<2x32xf32, #tpu.memory_space<vmem>>, vector<2x32xf32>
    tpu.vector_store %arg8[%c0_116, %c0_117], %349 {strides = array<i32>} : memref<2x32xf32, #tpu.memory_space<vmem>>, vector<2x32xf32>,
    return
  }
}

</mosaic_0001>

<llo_original>
// kernel: tpu_custom_call.1
$region0: #{tpu_custom_call.1}
  #allocation0 [shape = 'u32[]', space=smem, size = 0x4, offset = 0x4, fixed_abs, tag = 'smem constant byte address 0x4 - core index']
  #allocation1 [shape = 'u32[144,128]{1,0:T(1,128)}', space=vmem, size = 0x12000, scoped, tag = 'internal scratch']
  %s0 = inlined_call_operand.vmem [shape: f32[11,32], index: 0, kind: input, shape index: {}]
  %s1 = inlined_call_operand.vmem [shape: f32[18,16], index: 1, kind: input, shape index: {}]
  %s2 = inlined_call_operand.vmem [shape: f32[36,11], index: 2, kind: input, shape index: {}]
  %s3 = inlined_call_operand.vmem [shape: f32[11,18], index: 3, kind: input, shape index: {}]
  %s4 = inlined_call_operand.vmem [shape: f32[11,2], index: 4, kind: input, shape index: {}]
  %s5 = inlined_call_operand.vmem [shape: f32[2,11], index: 5, kind: input, shape index: {}]
  %s6 = inlined_call_operand.vmem [shape: f32[368,96], index: 6, kind: input, shape index: {}]
  %s7 = inlined_call_operand.vmem [shape: f32[14,96], index: 7, kind: input, shape index: {}]
  %s8 = inlined_call_operand.hbm [shape: f32[2,32], index: 8, kind: output, shape index: {}]
  %s9 = sld [smem:[#allocation0]]
  $region42: #{tpu_custom_call.1} parent=0
    _
  %s11 = ssub.s32 1, %s9
  %s12 = scalar_select 0, %s11, %s9
  $region1: #{tpu_custom_call.1} parent=0
    #allocation2 [shape = 'u8[1024]{0}', space=vmem, size = 0x400, scoped, tag = 'output window, operand 0, single buffered']
    #allocation3 [shape = 's32[1]{0}', space=sflag, size = 0x4, scoped, tag = 'scoped memory for tpu_custom_call.1']
    %13 = vsyncpa [#allocation3], 0
    // Predicated region
    $region2: #{tpu_custom_call.1} parent=1 // pred_check
      _
    $region3: #{tpu_custom_call.1} parent=1 // pred_check_branch
      %15 = sbr.rel (0) target = $region5
    $region4: #{tpu_custom_call.1} parent=1 // pred_region
      _
    $region5: #{tpu_custom_call.1} parent=1 // pred_fallthru
      _
    // Predicated region
    $region6: #{tpu_custom_call.1} parent=1 // pred_check
      _
    $region7: #{tpu_custom_call.1} parent=1 // pred_check_branch
      %17 = sbr.rel (0) target = $region9
    $region8: #{tpu_custom_call.1} parent=1 // pred_region
      _
    $region9: #{tpu_custom_call.1} parent=1 // pred_fallthru
      _
    // Predicated region
    $region10: #{tpu_custom_call.1} parent=1 // pred_check
      _
    $region11: #{tpu_custom_call.1} parent=1 // pred_check_branch
      %19 = sbr.rel (0) target = $region13
    $region12: #{tpu_custom_call.1} parent=1 // pred_region
      _
    $region13: #{tpu_custom_call.1} parent=1 // pred_fallthru
      _
    // Predicated region
    $region14: #{tpu_custom_call.1} parent=1 // pred_check
      _
    $region15: #{tpu_custom_call.1} parent=1 // pred_check_branch
      %21 = sbr.rel (0) target = $region17
    $region16: #{tpu_custom_call.1} parent=1 // pred_region
      _
    $region17: #{tpu_custom_call.1} parent=1 // pred_fallthru
      _
    // Predicated region
    $region18: #{tpu_custom_call.1} parent=1 // pred_check
      _
    $region19: #{tpu_custom_call.1} parent=1 // pred_check_branch
      %23 = sbr.rel (0) target = $region21
    $region20: #{tpu_custom_call.1} parent=1 // pred_region
      _
    $region21: #{tpu_custom_call.1} parent=1 // pred_fallthru
      _
    // Predicated region
    $region22: #{tpu_custom_call.1} parent=1 // pred_check
      _
    $region23: #{tpu_custom_call.1} parent=1 // pred_check_branch
      %25 = sbr.rel (0) target = $region25
    $region24: #{tpu_custom_call.1} parent=1 // pred_region
      _
    $region25: #{tpu_custom_call.1} parent=1 // pred_fallthru
      _
    // Predicated region
    $region26: #{tpu_custom_call.1} parent=1 // pred_check
      _
    $region27: #{tpu_custom_call.1} parent=1 // pred_check_branch
      %27 = sbr.rel (0) target = $region29
    $region28: #{tpu_custom_call.1} parent=1 // pred_region
      _
    $region29: #{tpu_custom_call.1} parent=1 // pred_fallthru
      _
    // Predicated region
    $region30: #{tpu_custom_call.1} parent=1 // pred_check
      _
    $region31: #{tpu_custom_call.1} parent=1 // pred_check_branch
      %29 = sbr.rel (0) target = $region33
    $region32: #{tpu_custom_call.1} parent=1 // pred_region
      _
    $region33: #{tpu_custom_call.1} parent=1 // pred_fallthru
      _
    %v30 = vld [vmem:[%s0] sm:$0xff]
    %v31 = vld [vmem:[%s0 + $0x8] sm:$0x7]
    %v32 = vld [vmem:[%s1] sm:$0xff]
    %v33 = vld [vmem:[%s1 + $0x8] sm:$0xff]
    %v34 = vld [vmem:[%s1 + $0x10] sm:$0x3]
    %v35 = vld [vmem:[%s2] sm:$0xff]
    %v36 = vld [vmem:[%s2 + $0x8] sm:$0xff]
    %v37 = vld [vmem:[%s2 + $0x10] sm:$0xff]
    %v38 = vld [vmem:[%s2 + $0x18] sm:$0xff]
    %v39 = vld [vmem:[%s2 + $0x20] sm:$0xf]
    %v40 = vld [vmem:[%s3] sm:$0xff]
    %v41 = vld [vmem:[%s3 + $0x8] sm:$0x7]
    %v42 = vld [vmem:[%s6] sm:$0xff]
    %v43 = vld [vmem:[%s6 + $0x8] sm:$0xff]
    %v44 = vld [vmem:[%s6 + $0x10] sm:$0xff]
    %v45 = vld [vmem:[%s6 + $0x18] sm:$0xff]
    %vm46 = vcmask 261120
    %v48 = vsel %vm46, %v30, 0
    %v51 = vsel %vm46, %v31, 0
    %53 = vmatprep.subr.mxu0 0.0
    %54 = vmatpush1.msra.mxu0 %v42
    %55 = vmatprep.subr.mxu0 0.0
    %56 = vmatpush1.msra.mxu0 %v43
    %57 = vmatprep.subr.mxu0 0.0
    %58 = vmatpush1.msra.mxu0 %v44
    %59 = vmatprep.subr.mxu0 0.0
    %60 = vmatpush1.msra.mxu0 %v45
    %61 = vmatprep.subr.mxu0 0.0
    %62 = vmatpush1.msra.mxu0 0.0
    %63 = vmatprep.subr.mxu0 0.0
    %64 = vmatpush1.msra.mxu0 0.0
    %65 = vmatprep.subr.mxu0 0.0
    %66 = vmatpush1.msra.mxu0 0.0
    %67 = vmatprep.subr.mxu0 0.0
    %68 = vmatpush1.msra.mxu0 0.0
    %69 = vmatprep.subr.mxu0 0.0
    %70 = vmatpush1.msra.mxu0 0.0
    %71 = vmatprep.subr.mxu0 0.0
    %72 = vmatpush1.msra.mxu0 0.0
    %73 = vmatprep.subr.mxu0 0.0
    %74 = vmatpush1.msra.mxu0 0.0
    %75 = vmatprep.subr.mxu0 0.0
    %76 = vmatpush1.msra.mxu0 0.0
    %77 = vmatprep.subr.mxu0 0.0
    %78 = vmatpush1.msra.mxu0 0.0
    %79 = vmatprep.subr.mxu0 0.0
    %80 = vmatpush1.msra.mxu0 0.0
    %81 = vmatprep.subr.mxu0 0.0
    %82 = vmatpush1.msra.mxu0 0.0
    %83 = vmatprep.subr.mxu0 0.0
    %84 = vmatpush1.msra.mxu0 0.0
    %85 = vmatprep.subr.mxu0 0.0
    %86 = vmatpush1.msra.mxu0 0.0
    %87 = vmatprep.subr.mxu0 0.0
    %88 = vmatpush1.msra.mxu0 0.0
    %89 = vmatprep.subr.mxu0 0.0
    %90 = vmatpush1.msra.mxu0 0.0
    %91 = vmatprep.subr.mxu0 0.0
    %92 = vmatpush1.msra.mxu0 0.0
    %93 = vmatprep.subr.mxu0 0.0
    %94 = vmatpush1.msra.mxu0 0.0
    %95 = vmatprep.subr.mxu0 0.0
    %96 = vmatpush1.msra.mxu0 0.0
    %97 = vmatprep.subr.mxu0 0.0
    %98 = vmatpush1.msra.mxu0 0.0
    %99 = vmatprep.subr.mxu0 0.0
    %100 = vmatpush1.msra.mxu0 0.0
    %101 = vmatprep.subr.mxu0 0.0
    %102 = vmatpush1.msra.mxu0 0.0
    %103 = vmatprep.subr.mxu0 0.0
    %104 = vmatpush1.msra.mxu0 0.0
    %105 = vmatprep.subr.mxu0 0.0
    %106 = vmatpush1.msra.mxu0 0.0
    %107 = vmatprep.subr.mxu0 0.0
    %108 = vmatpush1.msra.mxu0 0.0
    %109 = vmatprep.subr.mxu0 0.0
    %110 = vmatpush1.msra.mxu0 0.0
    %111 = vmatprep.subr.mxu0 0.0
    %112 = vmatpush1.msra.mxu0 0.0
    %113 = vmatprep.subr.mxu0 0.0
    %114 = vmatpush1.msra.mxu0 0.0
    %115 = vmatprep.subr.mxu0 0.0
    %116 = vmatpush1.msra.mxu0 0.0
    %117 = vmatprep.mubr.f32.mxu0 0.0
    %118 = vmatmul.mubr.f32.gmra.mrb[0].mxu0 %v48
    %v119 = vpop.f32.mrb[0].mxu0
    %v120 = vadd.f32 0.0, %v119
    %v121 = vpop.f32.mrb[0].mxu0
    %122 = vmatprep.mubr.f32.mxu0 0.0
    %123 = vmatmul.mubr.f32.gmra.mrb[0].mxu0 %v51
    %v124 = vpop.f32.mrb[0].mxu0
    %v125 = vadd.f32 0.0, %v124
    %v126 = vpop.f32.mrb[0].mxu0
    %127 = vdwg.mxu0
    %v128 = vld [vmem:[%s7] sm:$0x1]
    %v129 = vlaneseq
    %v130 = vshrl.u32 %v129, 7
    %v131 = vsub.s32 0, %v130
    %v132 = vrot.slane %v128, %v131
    %v133 = vadd.f32 %v120, %v132
    %v134 = vadd.f32 %v125, %v132
    %vm135 = vcmp.gt.f32.partialorder %v133, 0.0
    %vm136 = vcmp.gt.f32.partialorder %v134, 0.0
    %v137 = vmul.f32 %v133, 0.01
    %v138 = vmul.f32 %v134, 0.01
    %v139 = vsel %vm135, %v133, %v137
    %v140 = vsel %vm136, %v134, %v138
    %v141 = vld [vmem:[%s7 + $0x1] sm:$0x1]
    %v142 = vld [vmem:[%s7 + $0x2] sm:$0x1]
    %v143 = vlaneseq
    %v144 = vshrl.u32 %v143, 7
    %v145 = vsub.s32 0, %v144
    %v146 = vrot.slane %v142, %v145
    %v147 = vmul.f32 %v139, %v146
    %v148 = vmul.f32 %v140, %v146
    %v149 = vsel %vm46, %v147, 0.0
    %150 = vadd.xlane.f32.xlu0 %v149
    %v151 = vpop.xlane.xlu0 %150
    %vm152 = vcmask 256000
    %v153 = vsel %vm152, %v148, 0.0
    %154 = vadd.xlane.f32.xlu0 %v153
    %v155 = vpop.xlane.xlu0 %154
    %v156 = vsel %vm46, %v139, %v151
    %v157 = vsel %vm46, %v140, %v155
    %vm158 = vcmask 89088
    %v160 = vsel %vm158, %v35, 0
    %v163 = vsel %vm158, %v36, 0
    %v166 = vsel %vm158, %v37, 0
    %v169 = vsel %vm158, %v38, 0
    %v172 = vsel %vm158, %v39, 0
    %vm174 = vcmask 1042432
    %v176 = vsel %vm174, %v157, 0
    %178 = vmatprep.subr.mxu0 0.0
    %179 = vmatpush1.msra.mxu0 %v156
    %180 = vmatprep.subr.mxu0 0.0
    %181 = vmatpush1.msra.mxu0 %v176
    %182 = vmatprep.subr.mxu0 0.0
    %183 = vmatpush1.msra.mxu0 0.0
    %184 = vmatprep.subr.mxu0 0.0
    %185 = vmatpush1.msra.mxu0 0.0
    %186 = vmatprep.subr.mxu0 0.0
    %187 = vmatpush1.msra.mxu0 0.0
    %188 = vmatprep.subr.mxu0 0.0
    %189 = vmatpush1.msra.mxu0 0.0
    %190 = vmatprep.subr.mxu0 0.0
    %191 = vmatpush1.msra.mxu0 0.0
    %192 = vmatprep.subr.mxu0 0.0
    %193 = vmatpush1.msra.mxu0 0.0
    %194 = vmatprep.subr.mxu0 0.0
    %195 = vmatpush1.msra.mxu0 0.0
    %196 = vmatprep.subr.mxu0 0.0
    %197 = vmatpush1.msra.mxu0 0.0
    %198 = vmatprep.subr.mxu0 0.0
    %199 = vmatpush1.msra.mxu0 0.0
    %200 = vmatprep.subr.mxu0 0.0
    %201 = vmatpush1.msra.mxu0 0.0
    %202 = vmatprep.subr.mxu0 0.0
    %203 = vmatpush1.msra.mxu0 0.0
    %204 = vmatprep.subr.mxu0 0.0
    %205 = vmatpush1.msra.mxu0 0.0
    %206 = vmatprep.subr.mxu0 0.0
    %207 = vmatpush1.msra.mxu0 0.0
    %208 = vmatprep.subr.mxu0 0.0
    %209 = vmatpush1.msra.mxu0 0.0
    %210 = vmatprep.subr.mxu0 0.0
    %211 = vmatpush1.msra.mxu0 0.0
    %212 = vmatprep.subr.mxu0 0.0
    %213 = vmatpush1.msra.mxu0 0.0
    %214 = vmatprep.subr.mxu0 0.0
    %215 = vmatpush1.msra.mxu0 0.0
    %216 = vmatprep.subr.mxu0 0.0
    %217 = vmatpush1.msra.mxu0 0.0
    %218 = vmatprep.subr.mxu0 0.0
    %219 = vmatpush1.msra.mxu0 0.0
    %220 = vmatprep.subr.mxu0 0.0
    %221 = vmatpush1.msra.mxu0 0.0
    %222 = vmatprep.subr.mxu0 0.0
    %223 = vmatpush1.msra.mxu0 0.0
    %224 = vmatprep.subr.mxu0 0.0
    %225 = vmatpush1.msra.mxu0 0.0
    %226 = vmatprep.subr.mxu0 0.0
    %227 = vmatpush1.msra.mxu0 0.0
    %228 = vmatprep.subr.mxu0 0.0
    %229 = vmatpush1.msra.mxu0 0.0
    %230 = vmatprep.subr.mxu0 0.0
    %231 = vmatpush1.msra.mxu0 0.0
    %232 = vmatprep.subr.mxu0 0.0
    %233 = vmatpush1.msra.mxu0 0.0
    %234 = vmatprep.subr.mxu0 0.0
    %235 = vmatpush1.msra.mxu0 0.0
    %236 = vmatprep.subr.mxu0 0.0
    %237 = vmatpush1.msra.mxu0 0.0
    %238 = vmatprep.subr.mxu0 0.0
    %239 = vmatpush1.msra.mxu0 0.0
    %240 = vmatprep.subr.mxu0 0.0
    %241 = vmatpush1.msra.mxu0 0.0
    %242 = vmatprep.mubr.f32.mxu0 0.0
    %243 = vmatmul.mubr.f32.gmra.mrb[0].mxu0 %v160
    %v244 = vpop.f32.mrb[0].mxu0
    %v245 = vadd.f32 0.0, %v244
    %v246 = vpop.f32.mrb[0].mxu0
    %247 = vmatprep.mubr.f32.mxu0 0.0
    %248 = vmatmul.mubr.f32.gmra.mrb[0].mxu0 %v163
    %v249 = vpop.f32.mrb[0].mxu0
    %v250 = vadd.f32 0.0, %v249
    %v251 = vpop.f32.mrb[0].mxu0
    %252 = vmatprep.mubr.f32.mxu0 0.0
    %253 = vmatmul.mubr.f32.gmra.mrb[0].mxu0 %v166
    %v254 = vpop.f32.mrb[0].mxu0
    %v255 = vadd.f32 0.0, %v254
    %v256 = vpop.f32.mrb[0].mxu0
    %257 = vmatprep.mubr.f32.mxu0 0.0
    %258 = vmatmul.mubr.f32.gmra.mrb[0].mxu0 %v169
    %v259 = vpop.f32.mrb[0].mxu0
    %v260 = vadd.f32 0.0, %v259
    %v261 = vpop.f32.mrb[0].mxu0
    %262 = vmatprep.mubr.f32.mxu0 0.0
    %263 = vmatmul.mubr.f32.gmra.mrb[0].mxu0 %v172
    %v264 = vpop.f32.mrb[0].mxu0
    %v265 = vadd.f32 0.0, %v264
    %v266 = vpop.f32.mrb[0].mxu0
    %267 = vdwg.mxu0
    %271 = vrot.lane.b32.xlu0 %v32, 32
    %v272 = vpop.permute.xlu0 %271
    %273 = vrot.lane.b32.xlu0 %v33, 32
    %v274 = vpop.permute.xlu0 %273
    %275 = vrot.lane.b32.xlu0 %v34, 32
    %v276 = vpop.permute.xlu0 %275
    %v280 = vsel %vm46, %v245, %v272
    %v281 = vsel %vm46, %v250, %v274
    %v282 = vsel %vm46, %v255, %v276
    %v283 = vld [vmem:[%s6 + $0x20] sm:$0xff]
    %v284 = vld [vmem:[%s6 + $0x28] sm:$0xff]
    %v285 = vld [vmem:[%s6 + $0x30] sm:$0xff]
    %v286 = vld [vmem:[%s6 + $0x38] sm:$0xff]
    %v287 = vld [vmem:[%s6 + $0x40] sm:$0xff]
    %v288 = vld [vmem:[%s6 + $0x48] sm:$0xff]
    %vm289 = vcmask 392192
    %v291 = vsel %vm289, %v280, 0
    %v294 = vsel %vm289, %v281, 0
    %v297 = vsel %vm289, %v282, 0
    %299 = vmatprep.subr.mxu0 0.0
    %300 = vmatpush1.msra.mxu0 %v283
    %301 = vmatprep.subr.mxu0 0.0
    %302 = vmatpush1.msra.mxu0 %v284
    %303 = vmatprep.subr.mxu0 0.0
    %304 = vmatpush1.msra.mxu0 %v285
    %305 = vmatprep.subr.mxu0 0.0
    %306 = vmatpush1.msra.mxu0 %v286
    %307 = vmatprep.subr.mxu0 0.0
    %308 = vmatpush1.msra.mxu0 %v287
    %309 = vmatprep.subr.mxu0 0.0
    %310 = vmatpush1.msra.mxu0 %v288
    %311 = vmatprep.subr.mxu0 0.0
    %312 = vmatpush1.msra.mxu0 0.0
    %313 = vmatprep.subr.mxu0 0.0
    %314 = vmatpush1.msra.mxu0 0.0
    %315 = vmatprep.subr.mxu0 0.0
    %316 = vmatpush1.msra.mxu0 0.0
    %317 = vmatprep.subr.mxu0 0.0
    %318 = vmatpush1.msra.mxu0 0.0
    %319 = vmatprep.subr.mxu0 0.0
    %320 = vmatpush1.msra.mxu0 0.0
    %321 = vmatprep.subr.mxu0 0.0
    %322 = vmatpush1.msra.mxu0 0.0
    %323 = vmatprep.subr.mxu0 0.0
    %324 = vmatpush1.msra.mxu0 0.0
    %325 = vmatprep.subr.mxu0 0.0
    %326 = vmatpush1.msra.mxu0 0.0
    %327 = vmatprep.subr.mxu0 0.0
    %328 = vmatpush1.msra.mxu0 0.0
    %329 = vmatprep.subr.mxu0 0.0
    %330 = vmatpush1.msra.mxu0 0.0
    %331 = vmatprep.subr.mxu0 0.0
    %332 = vmatpush1.msra.mxu0 0.0
    %333 = vmatprep.subr.mxu0 0.0
    %334 = vmatpush1.msra.mxu0 0.0
    %335 = vmatprep.subr.mxu0 0.0
    %336 = vmatpush1.msra.mxu0 0.0
    %337 = vmatprep.subr.mxu0 0.0
    %338 = vmatpush1.msra.mxu0 0.0
    %339 = vmatprep.subr.mxu0 0.0
    %340 = vmatpush1.msra.mxu0 0.0
    %341 = vmatprep.subr.mxu0 0.0
    %342 = vmatpush1.msra.mxu0 0.0
    %343 = vmatprep.subr.mxu0 0.0
    %344 = vmatpush1.msra.mxu0 0.0
    %345 = vmatprep.subr.mxu0 0.0
    %346 = vmatpush1.msra.mxu0 0.0
    %347 = vmatprep.subr.mxu0 0.0
    %348 = vmatpush1.msra.mxu0 0.0
    %349 = vmatprep.subr.mxu0 0.0
    %350 = vmatpush1.msra.mxu0 0.0
    %351 = vmatprep.subr.mxu0 0.0
    %352 = vmatpush1.msra.mxu0 0.0
    %353 = vmatprep.subr.mxu0 0.0
    %354 = vmatpush1.msra.mxu0 0.0
    %355 = vmatprep.subr.mxu0 0.0
    %356 = vmatpush1.msra.mxu0 0.0
    %357 = vmatprep.subr.mxu0 0.0
    %358 = vmatpush1.msra.mxu0 0.0
    %359 = vmatprep.subr.mxu0 0.0
    %360 = vmatpush1.msra.mxu0 0.0
    %361 = vmatprep.subr.mxu0 0.0
    %362 = vmatpush1.msra.mxu0 0.0
    %363 = vmatprep.mubr.f32.mxu0 0.0
    %364 = vmatmul.mubr.f32.gmra.mrb[0].mxu0 %v291
    %v365 = vpop.f32.mrb[0].mxu0
    %v366 = vadd.f32 0.0, %v365
    %v367 = vpop.f32.mrb[0].mxu0
    %368 = vmatprep.mubr.f32.mxu0 0.0
    %369 = vmatmul.mubr.f32.gmra.mrb[0].mxu0 %v294
    %v370 = vpop.f32.mrb[0].mxu0
    %v371 = vadd.f32 0.0, %v370
    %v372 = vpop.f32.mrb[0].mxu0
    %373 = vmatprep.mubr.f32.mxu0 0.0
    %374 = vmatmul.mubr.f32.gmra.mrb[0].mxu0 %v297
    %v375 = vpop.f32.mrb[0].mxu0
    %v376 = vadd.f32 0.0, %v375
    %v377 = vpop.f32.mrb[0].mxu0
    %378 = vdwg.mxu0
    %vm379 = vcmp.gt.f32.partialorder %v366, 0.0
    %vm380 = vcmp.gt.f32.partialorder %v371, 0.0
    %vm381 = vcmp.gt.f32.partialorder %v376, 0.0
    %v382 = vmul.f32 %v366, 0.01
    %v383 = vmul.f32 %v371, 0.01
    %v384 = vmul.f32 %v376, 0.01
    %v385 = vsel %vm379, %v366, %v382
    %v386 = vsel %vm380, %v371, %v383
    %v387 = vsel %vm381, %v376, %v384
    %v388 = vlaneseq
    %v389 = vshrl.u32 %v388, 7
    %v390 = vsub.s32 0, %v389
    %v391 = vrot.slane %v141, %v390
    %v392 = vmul.f32 %v385, %v391
    %v393 = vmul.f32 %v386, %v391
    %v394 = vmul.f32 %v387, %v391
    %v395 = vsel %vm46, %v392, 0.0
    %396 = vadd.xlane.f32.xlu0 %v395
    %v397 = vpop.xlane.xlu0 %396
    %v398 = vsel %vm46, %v393, 0.0
    %399 = vadd.xlane.f32.xlu0 %v398
    %v400 = vpop.xlane.xlu0 %399
    %vm401 = vcmask 254976
    %v402 = vsel %vm401, %v394, 0.0
    %403 = vadd.xlane.f32.xlu0 %v402
    %v404 = vpop.xlane.xlu0 %403
    %vm408 = vcmask 1045504
    %v409 = vrot.slane %v255, 2
    %v410 = vrot.slane %v260, 2
    %v411 = vsel %vm408, %v409, %v410
    %v412 = vrot.slane %v265, 2
    %v413 = vsel %vm408, %v410, %v412
    %414 = vrot.lane.b32.xlu0 %v411, 96
    %v415 = vpop.permute.xlu0 %414
    %416 = vrot.lane.b32.xlu0 %v413, 96
    %v417 = vpop.permute.xlu0 %416
    %418 = vrot.lane.b32.xlu0 %v412, 96
    %v419 = vpop.permute.xlu0 %418
    %v423 = vadd.f32 %v397, %v415
    %v424 = vadd.f32 %v400, %v417
    %v425 = vadd.f32 %v404, %v419
    %vm426 = vcmp.gt.f32.partialorder %v423, 0.0
    %vm427 = vcmp.gt.f32.partialorder %v424, 0.0
    %vm428 = vcmp.gt.f32.partialorder %v425, 0.0
    %v429 = vmul.f32 %v423, 0.01
    %v430 = vmul.f32 %v424, 0.01
    %v431 = vmul.f32 %v425, 0.01
    %v432 = vsel %vm426, %v423, %v429
    %v433 = vsel %vm427, %v424, %v430
    %v434 = vsel %vm428, %v425, %v431
    %vm435 = vcmask 7168
    %v436 = vsel %vm435, %v432, -inf
    %v437 = vsel %vm435, %v433, -inf
    %vm438 = vcmask 1024
    %v439 = vsel %vm438, %v434, -inf
    %v440 = vmax.f32 %v436, %v437
    %v441 = vmax.f32 %v440, %v439
    %v442 = vrot.slane %v441, 4
    %v443 = vmax.f32 %v441, %v442
    %v444 = vrot.slane %v443, 2
    %v445 = vmax.f32 %v443, %v444
    %v446 = vrot.slane %v445, 1
    %v447 = vmax.f32 %v445, %v446
    %v448 = vsub.f32 %v432, %v447
    %v449 = vsub.f32 %v433, %v447
    %v450 = vsub.f32 %v434, %v447
    %v451 = vmul.f32 %v448, 1.442695
    %v452 = vpow.pop %v451
    %v453 = vmul.f32 %v449, 1.442695
    %v454 = vpow.pop %v453
    %v455 = vmul.f32 %v450, 1.442695
    %v456 = vpow.pop %v455
    %458 = vset.pattern.permute.xlu0 0
    %459 = vperm.xlu0 %458, %v452
    %v460 = vpop.permute.xlu0 %459
    %463 = vset.pattern.permute.xlu0 0
    %464 = vperm.xlu0 %463, %v454
    %v465 = vpop.permute.xlu0 %464
    %468 = vset.pattern.permute.xlu0 0
    %469 = vperm.xlu0 %468, %v456
    %v470 = vpop.permute.xlu0 %469
    %v472 = vmul.f32 %v366, %v460
    %v473 = vmul.f32 %v371, %v465
    %v474 = vmul.f32 %v376, %v470
    %478 = vrot.lane.b32.xlu0 %v472, 96
    %v479 = vpop.permute.xlu0 %478
    %480 = vrot.lane.b32.xlu0 %v473, 96
    %v481 = vpop.permute.xlu0 %480
    %482 = vrot.lane.b32.xlu0 %v474, 96
    %v483 = vpop.permute.xlu0 %482
    %487 = vrot.lane.b32.xlu0 %v452, 32
    %v488 = vpop.permute.xlu0 %487
    %489 = vrot.lane.b32.xlu0 %v454, 32
    %v490 = vpop.permute.xlu0 %489
    %491 = vrot.lane.b32.xlu0 %v456, 32
    %v492 = vpop.permute.xlu0 %491
    %v496 = vsel %vm46, %v479, %v488
    %v497 = vsel %vm46, %v481, %v490
    %v498 = vsel %vm46, %v483, %v492
    %vm499 = vcmask 146432
    %v501 = vsel %vm499, %v40, 0
    %v504 = vsel %vm499, %v41, 0
    %vm506 = vcmask 1041408
    %v508 = vsel %vm506, %v498, 0
    %510 = vmatprep.subr.mxu0 0.0
    %511 = vmatpush1.msra.mxu0 %v496
    %512 = vmatprep.subr.mxu0 0.0
    %513 = vmatpush1.msra.mxu0 %v497
    %514 = vmatprep.subr.mxu0 0.0
    %515 = vmatpush1.msra.mxu0 %v508
    %516 = vmatprep.subr.mxu0 0.0
    %517 = vmatpush1.msra.mxu0 0.0
    %518 = vmatprep.subr.mxu0 0.0
    %519 = vmatpush1.msra.mxu0 0.0
    %520 = vmatprep.subr.mxu0 0.0
    %521 = vmatpush1.msra.mxu0 0.0
    %522 = vmatprep.subr.mxu0 0.0
    %523 = vmatpush1.msra.mxu0 0.0
    %524 = vmatprep.subr.mxu0 0.0
    %525 = vmatpush1.msra.mxu0 0.0
    %526 = vmatprep.subr.mxu0 0.0
    %527 = vmatpush1.msra.mxu0 0.0
    %528 = vmatprep.subr.mxu0 0.0
    %529 = vmatpush1.msra.mxu0 0.0
    %530 = vmatprep.subr.mxu0 0.0
    %531 = vmatpush1.msra.mxu0 0.0
    %532 = vmatprep.subr.mxu0 0.0
    %533 = vmatpush1.msra.mxu0 0.0
    %534 = vmatprep.subr.mxu0 0.0
    %535 = vmatpush1.msra.mxu0 0.0
    %536 = vmatprep.subr.mxu0 0.0
    %537 = vmatpush1.msra.mxu0 0.0
    %538 = vmatprep.subr.mxu0 0.0
    %539 = vmatpush1.msra.mxu0 0.0
    %540 = vmatprep.subr.mxu0 0.0
    %541 = vmatpush1.msra.mxu0 0.0
    %542 = vmatprep.subr.mxu0 0.0
    %543 = vmatpush1.msra.mxu0 0.0
    %544 = vmatprep.subr.mxu0 0.0
    %545 = vmatpush1.msra.mxu0 0.0
    %546 = vmatprep.subr.mxu0 0.0
    %547 = vmatpush1.msra.mxu0 0.0
    %548 = vmatprep.subr.mxu0 0.0
    %549 = vmatpush1.msra.mxu0 0.0
    %550 = vmatprep.subr.mxu0 0.0
    %551 = vmatpush1.msra.mxu0 0.0
    %552 = vmatprep.subr.mxu0 0.0
    %553 = vmatpush1.msra.mxu0 0.0
    %554 = vmatprep.subr.mxu0 0.0
    %555 = vmatpush1.msra.mxu0 0.0
    %556 = vmatprep.subr.mxu0 0.0
    %557 = vmatpush1.msra.mxu0 0.0
    %558 = vmatprep.subr.mxu0 0.0
    %559 = vmatpush1.msra.mxu0 0.0
    %560 = vmatprep.subr.mxu0 0.0
    %561 = vmatpush1.msra.mxu0 0.0
    %562 = vmatprep.subr.mxu0 0.0
    %563 = vmatpush1.msra.mxu0 0.0
    %564 = vmatprep.subr.mxu0 0.0
    %565 = vmatpush1.msra.mxu0 0.0
    %566 = vmatprep.subr.mxu0 0.0
    %567 = vmatpush1.msra.mxu0 0.0
    %568 = vmatprep.subr.mxu0 0.0
    %569 = vmatpush1.msra.mxu0 0.0
    %570 = vmatprep.subr.mxu0 0.0
    %571 = vmatpush1.msra.mxu0 0.0
    %572 = vmatprep.subr.mxu0 0.0
    %573 = vmatpush1.msra.mxu0 0.0
    %574 = vmatprep.mubr.f32.mxu0 0.0
    %575 = vmatmul.mubr.f32.gmra.mrb[0].mxu0 %v501
    %v576 = vpop.f32.mrb[0].mxu0
    %v577 = vadd.f32 0.0, %v576
    %v578 = vpop.f32.mrb[0].mxu0
    %579 = vmatprep.mubr.f32.mxu0 0.0
    %580 = vmatmul.mubr.f32.gmra.mrb[0].mxu0 %v504
    %v581 = vpop.f32.mrb[0].mxu0
    %v582 = vadd.f32 0.0, %v581
    %v583 = vpop.f32.mrb[0].mxu0
    %584 = vdwg.mxu0
    %v585 = vmax.f32 %v577, 1e-30
    %v586 = vmax.f32 %v582, 1e-30
    %588 = vset.pattern.permute.xlu0 32
    %589 = vperm.xlu0 %588, %v585
    %v590 = vpop.permute.xlu0 %589
    %593 = vset.pattern.permute.xlu0 32
    %594 = vperm.xlu0 %593, %v586
    %v595 = vpop.permute.xlu0 %594
    %v597 = vrcp.pop %v590
    %v598 = vmul.f32 %v577, %v597
    %v599 = vrcp.pop %v595
    %v600 = vmul.f32 %v582, %v599
    %v601 = vld [vmem:[%s7 + $0x3] sm:$0x1]
    %v602 = vlaneseq
    %v603 = vshrl.u32 %v602, 7
    %v604 = vsub.s32 0, %v603
    %v605 = vrot.slane %v601, %v604
    %v606 = vadd.f32 %v598, %v605
    %v607 = vadd.f32 %v600, %v605
    %vm608 = vcmp.gt.f32.partialorder %v606, 0.0
    %vm609 = vcmp.gt.f32.partialorder %v607, 0.0
    %v610 = vmul.f32 %v606, 1.442695
    %v611 = vpow.pop %v610
    %v612 = vmul.f32 %v607, 1.442695
    %v613 = vpow.pop %v612
    %v614 = vsub.f32 %v611, 1.0
    %v615 = vsub.f32 %v613, 1.0
    %v616 = vsel %vm608, %v606, %v614
    %v617 = vsel %vm609, %v607, %v615
    %v618 = vld [vmem:[%s6 + $0x50] sm:$0xff]
    %v619 = vld [vmem:[%s6 + $0x58] sm:$0xff]
    %v620 = vld [vmem:[%s6 + $0x60] sm:$0xff]
    %v621 = vld [vmem:[%s6 + $0x68] sm:$0xff]
    %v622 = vld [vmem:[%s7 + $0x4] sm:$0x1]
    %v623 = vlaneseq
    %v624 = vshrl.u32 %v623, 7
    %v625 = vsub.s32 0, %v624
    %v626 = vrot.slane %v622, %v625
    %v628 = vsel %vm46, %v616, 0
    %v631 = vsel %vm46, %v617, 0
    %633 = vmatprep.subr.mxu0 0.0
    %634 = vmatpush1.msra.mxu0 %v618
    %635 = vmatprep.subr.mxu0 0.0
    %636 = vmatpush1.msra.mxu0 %v619
    %637 = vmatprep.subr.mxu0 0.0
    %638 = vmatpush1.msra.mxu0 %v620
    %639 = vmatprep.subr.mxu0 0.0
    %640 = vmatpush1.msra.mxu0 %v621
    %641 = vmatprep.subr.mxu0 0.0
    %642 = vmatpush1.msra.mxu0 0.0
    %643 = vmatprep.subr.mxu0 0.0
    %644 = vmatpush1.msra.mxu0 0.0
    %645 = vmatprep.subr.mxu0 0.0
    %646 = vmatpush1.msra.mxu0 0.0
    %647 = vmatprep.subr.mxu0 0.0
    %648 = vmatpush1.msra.mxu0 0.0
    %649 = vmatprep.subr.mxu0 0.0
    %650 = vmatpush1.msra.mxu0 0.0
    %651 = vmatprep.subr.mxu0 0.0
    %652 = vmatpush1.msra.mxu0 0.0
    %653 = vmatprep.subr.mxu0 0.0
    %654 = vmatpush1.msra.mxu0 0.0
    %655 = vmatprep.subr.mxu0 0.0
    %656 = vmatpush1.msra.mxu0 0.0
    %657 = vmatprep.subr.mxu0 0.0
    %658 = vmatpush1.msra.mxu0 0.0
    %659 = vmatprep.subr.mxu0 0.0
    %660 = vmatpush1.msra.mxu0 0.0
    %661 = vmatprep.subr.mxu0 0.0
    %662 = vmatpush1.msra.mxu0 0.0
    %663 = vmatprep.subr.mxu0 0.0
    %664 = vmatpush1.msra.mxu0 0.0
    %665 = vmatprep.subr.mxu0 0.0
    %666 = vmatpush1.msra.mxu0 0.0
    %667 = vmatprep.subr.mxu0 0.0
    %668 = vmatpush1.msra.mxu0 0.0
    %669 = vmatprep.subr.mxu0 0.0
    %670 = vmatpush1.msra.mxu0 0.0
    %671 = vmatprep.subr.mxu0 0.0
    %672 = vmatpush1.msra.mxu0 0.0
    %673 = vmatprep.subr.mxu0 0.0
    %674 = vmatpush1.msra.mxu0 0.0
    %675 = vmatprep.subr.mxu0 0.0
    %676 = vmatpush1.msra.mxu0 0.0
    %677 = vmatprep.subr.mxu0 0.0
    %678 = vmatpush1.msra.mxu0 0.0
    %679 = vmatprep.subr.mxu0 0.0
    %680 = vmatpush1.msra.mxu0 0.0
    %681 = vmatprep.subr.mxu0 0.0
    %682 = vmatpush1.msra.mxu0 0.0
    %683 = vmatprep.subr.mxu0 0.0
    %684 = vmatpush1.msra.mxu0 0.0
    %685 = vmatprep.subr.mxu0 0.0
    %686 = vmatpush1.msra.mxu0 0.0
    %687 = vmatprep.subr.mxu0 0.0
    %688 = vmatpush1.msra.mxu0 0.0
    %689 = vmatprep.subr.mxu0 0.0
    %690 = vmatpush1.msra.mxu0 0.0
    %691 = vmatprep.subr.mxu0 0.0
    %692 = vmatpush1.msra.mxu0 0.0
    %693 = vmatprep.subr.mxu0 0.0
    %694 = vmatpush1.msra.mxu0 0.0
    %695 = vmatprep.subr.mxu0 0.0
    %696 = vmatpush1.msra.mxu0 0.0
    %697 = vmatprep.mubr.f32.mxu0 0.0
    %698 = vmatmul.mubr.f32.gmra.mrb[0].mxu0 %v628
    %v699 = vpop.f32.mrb[0].mxu0
    %v700 = vadd.f32 %v626, %v699
    %v701 = vpop.f32.mrb[0].mxu0
    %702 = vmatprep.mubr.f32.mxu0 0.0
    %703 = vmatmul.mubr.f32.gmra.mrb[0].mxu0 %v631
    %v704 = vpop.f32.mrb[0].mxu0
    %v705 = vadd.f32 %v626, %v704
    %v706 = vpop.f32.mrb[0].mxu0
    %707 = vdwg.mxu0
    %v708 = vld [vmem:[%s6 + $0x70] sm:$0xff]
    %v709 = vld [vmem:[%s6 + $0x78] sm:$0xff]
    %v710 = vld [vmem:[%s6 + $0x80] sm:$0xff]
    %v711 = vld [vmem:[%s6 + $0x88] sm:$0xff]
    %v712 = vld [vmem:[%s7 + $0x5] sm:$0x1]
    %v713 = vlaneseq
    %v714 = vshrl.u32 %v713, 7
    %v715 = vsub.s32 0, %v714
    %v716 = vrot.slane %v712, %v715
    %v718 = vsel %vm46, %v139, 0
    %v721 = vsel %vm46, %v140, 0
    %723 = vmatprep.subr.mxu0 0.0
    %724 = vmatpush1.msra.mxu0 %v708
    %725 = vmatprep.subr.mxu0 0.0
    %726 = vmatpush1.msra.mxu0 %v709
    %727 = vmatprep.subr.mxu0 0.0
    %728 = vmatpush1.msra.mxu0 %v710
    %729 = vmatprep.subr.mxu0 0.0
    %730 = vmatpush1.msra.mxu0 %v711
    %731 = vmatprep.subr.mxu0 0.0
    %732 = vmatpush1.msra.mxu0 0.0
    %733 = vmatprep.subr.mxu0 0.0
    %734 = vmatpush1.msra.mxu0 0.0
    %735 = vmatprep.subr.mxu0 0.0
    %736 = vmatpush1.msra.mxu0 0.0
    %737 = vmatprep.subr.mxu0 0.0
    %738 = vmatpush1.msra.mxu0 0.0
    %739 = vmatprep.subr.mxu0 0.0
    %740 = vmatpush1.msra.mxu0 0.0
    %741 = vmatprep.subr.mxu0 0.0
    %742 = vmatpush1.msra.mxu0 0.0
    %743 = vmatprep.subr.mxu0 0.0
    %744 = vmatpush1.msra.mxu0 0.0
    %745 = vmatprep.subr.mxu0 0.0
    %746 = vmatpush1.msra.mxu0 0.0
    %747 = vmatprep.subr.mxu0 0.0
    %748 = vmatpush1.msra.mxu0 0.0
    %749 = vmatprep.subr.mxu0 0.0
    %750 = vmatpush1.msra.mxu0 0.0
    %751 = vmatprep.subr.mxu0 0.0
    %752 = vmatpush1.msra.mxu0 0.0
    %753 = vmatprep.subr.mxu0 0.0
    %754 = vmatpush1.msra.mxu0 0.0
    %755 = vmatprep.subr.mxu0 0.0
    %756 = vmatpush1.msra.mxu0 0.0
    %757 = vmatprep.subr.mxu0 0.0
    %758 = vmatpush1.msra.mxu0 0.0
    %759 = vmatprep.subr.mxu0 0.0
    %760 = vmatpush1.msra.mxu0 0.0
    %761 = vmatprep.subr.mxu0 0.0
    %762 = vmatpush1.msra.mxu0 0.0
    %763 = vmatprep.subr.mxu0 0.0
    %764 = vmatpush1.msra.mxu0 0.0
    %765 = vmatprep.subr.mxu0 0.0
    %766 = vmatpush1.msra.mxu0 0.0
    %767 = vmatprep.subr.mxu0 0.0
    %768 = vmatpush1.msra.mxu0 0.0
    %769 = vmatprep.subr.mxu0 0.0
    %770 = vmatpush1.msra.mxu0 0.0
    %771 = vmatprep.subr.mxu0 0.0
    %772 = vmatpush1.msra.mxu0 0.0
    %773 = vmatprep.subr.mxu0 0.0
    %774 = vmatpush1.msra.mxu0 0.0
    %775 = vmatprep.subr.mxu0 0.0
    %776 = vmatpush1.msra.mxu0 0.0
    %777 = vmatprep.subr.mxu0 0.0
    %778 = vmatpush1.msra.mxu0 0.0
    %779 = vmatprep.subr.mxu0 0.0
    %780 = vmatpush1.msra.mxu0 0.0
    %781 = vmatprep.subr.mxu0 0.0
    %782 = vmatpush1.msra.mxu0 0.0
    %783 = vmatprep.subr.mxu0 0.0
    %784 = vmatpush1.msra.mxu0 0.0
    %785 = vmatprep.subr.mxu0 0.0
    %786 = vmatpush1.msra.mxu0 0.0
    %787 = vmatprep.mubr.f32.mxu0 0.0
    %788 = vmatmul.mubr.f32.gmra.mrb[0].mxu0 %v718
    %v789 = vpop.f32.mrb[0].mxu0
    %v790 = vadd.f32 %v716, %v789
    %v791 = vpop.f32.mrb[0].mxu0
    %792 = vmatprep.mubr.f32.mxu0 0.0
    %793 = vmatmul.mubr.f32.gmra.mrb[0].mxu0 %v721
    %v794 = vpop.f32.mrb[0].mxu0
    %v795 = vadd.f32 %v716, %v794
    %v796 = vpop.f32.mrb[0].mxu0
    %797 = vdwg.mxu0
    %v798 = vadd.f32 %v700, %v790
    %v799 = vadd.f32 %v705, %v795
    %v800 = vxor.u32 %v798, 2147483648
    %v801 = vxor.u32 %v799, 2147483648
    %v802 = vmul.f32 %v800, 1.442695
    %v803 = vpow.pop %v802
    %v804 = vmul.f32 %v801, 1.442695
    %v805 = vpow.pop %v804
    %v806 = vadd.f32 %v803, 1.0
    %v807 = vadd.f32 %v805, 1.0
    %v808 = vrcp.pop %v806
    %v809 = vmul.f32 1.0, %v808
    %v810 = vrcp.pop %v807
    %v811 = vmul.f32 1.0, %v810
    %814 = vrot.lane.b32.xlu0 %v790, 64
    %v815 = vpop.permute.xlu0 %814
    %816 = vrot.lane.b32.xlu0 %v795, 64
    %v817 = vpop.permute.xlu0 %816
    %v820 = vmul.f32 %v809, %v815
    %v821 = vmul.f32 %v811, %v817
    %824 = vrot.lane.b32.xlu0 %v820, 64
    %v825 = vpop.permute.xlu0 %824
    %826 = vrot.lane.b32.xlu0 %v821, 64
    %v827 = vpop.permute.xlu0 %826
    %v830 = vadd.f32 %v700, %v825
    %v831 = vadd.f32 %v705, %v827
    %v832 = vtanh.pop %v830
    %v833 = vtanh.pop %v831
    %v834 = vsub.f32 1.0, %v809
    %v835 = vsub.f32 1.0, %v811
    %838 = vrot.lane.b32.xlu0 %v832, 96
    %v839 = vpop.permute.xlu0 %838
    %840 = vrot.lane.b32.xlu0 %v833, 96
    %v841 = vpop.permute.xlu0 %840
    %v844 = vmul.f32 %v834, %v839
    %v845 = vmul.f32 %v835, %v841
    %846 = vrot.lane.b32.xlu0 %v139, 32
    %v847 = vpop.permute.xlu0 %846
    %848 = vrot.lane.b32.xlu0 %v140, 32
    %v849 = vpop.permute.xlu0 %848
    %v852 = vmul.f32 %v809, %v847
    %v853 = vmul.f32 %v811, %v849
    %v854 = vadd.f32 %v844, %v852
    %v855 = vadd.f32 %v845, %v853
    %v856 = vmax.f32 %v854, 0.0
    %v857 = vmax.f32 %v855, 0.0
    %v858 = vld [vmem:[%s6 + $0x90] sm:$0xff]
    %v859 = vld [vmem:[%s6 + $0x98] sm:$0xff]
    %v860 = vld [vmem:[%s6 + $0xa0] sm:$0xff]
    %v861 = vld [vmem:[%s6 + $0xa8] sm:$0xff]
    %864 = vrot.lane.b32.xlu0 %v856, 96
    %v865 = vpop.permute.xlu0 %864
    %866 = vrot.lane.b32.xlu0 %v857, 96
    %v867 = vpop.permute.xlu0 %866
    %v868 = vsel %vm46, %v865, 0
    %v870 = vsel %vm46, %v867, 0
    %872 = vmatprep.subr.mxu0 0.0
    %873 = vmatpush1.msra.mxu0 %v858
    %874 = vmatprep.subr.mxu0 0.0
    %875 = vmatpush1.msra.mxu0 %v859
    %876 = vmatprep.subr.mxu0 0.0
    %877 = vmatpush1.msra.mxu0 %v860
    %878 = vmatprep.subr.mxu0 0.0
    %879 = vmatpush1.msra.mxu0 %v861
    %880 = vmatprep.subr.mxu0 0.0
    %881 = vmatpush1.msra.mxu0 0.0
    %882 = vmatprep.subr.mxu0 0.0
    %883 = vmatpush1.msra.mxu0 0.0
    %884 = vmatprep.subr.mxu0 0.0
    %885 = vmatpush1.msra.mxu0 0.0
    %886 = vmatprep.subr.mxu0 0.0
    %887 = vmatpush1.msra.mxu0 0.0
    %888 = vmatprep.subr.mxu0 0.0
    %889 = vmatpush1.msra.mxu0 0.0
    %890 = vmatprep.subr.mxu0 0.0
    %891 = vmatpush1.msra.mxu0 0.0
    %892 = vmatprep.subr.mxu0 0.0
    %893 = vmatpush1.msra.mxu0 0.0
    %894 = vmatprep.subr.mxu0 0.0
    %895 = vmatpush1.msra.mxu0 0.0
    %896 = vmatprep.subr.mxu0 0.0
    %897 = vmatpush1.msra.mxu0 0.0
    %898 = vmatprep.subr.mxu0 0.0
    %899 = vmatpush1.msra.mxu0 0.0
    %900 = vmatprep.subr.mxu0 0.0
    %901 = vmatpush1.msra.mxu0 0.0
    %902 = vmatprep.subr.mxu0 0.0
    %903 = vmatpush1.msra.mxu0 0.0
    %904 = vmatprep.subr.mxu0 0.0
    %905 = vmatpush1.msra.mxu0 0.0
    %906 = vmatprep.subr.mxu0 0.0
    %907 = vmatpush1.msra.mxu0 0.0
    %908 = vmatprep.subr.mxu0 0.0
    %909 = vmatpush1.msra.mxu0 0.0
    %910 = vmatprep.subr.mxu0 0.0
    %911 = vmatpush1.msra.mxu0 0.0
    %912 = vmatprep.subr.mxu0 0.0
    %913 = vmatpush1.msra.mxu0 0.0
    %914 = vmatprep.subr.mxu0 0.0
    %915 = vmatpush1.msra.mxu0 0.0
    %916 = vmatprep.subr.mxu0 0.0
    %917 = vmatpush1.msra.mxu0 0.0
    %918 = vmatprep.subr.mxu0 0.0
    %919 = vmatpush1.msra.mxu0 0.0
    %920 = vmatprep.subr.mxu0 0.0
    %921 = vmatpush1.msra.mxu0 0.0
    %922 = vmatprep.subr.mxu0 0.0
    %923 = vmatpush1.msra.mxu0 0.0
    %924 = vmatprep.subr.mxu0 0.0
    %925 = vmatpush1.msra.mxu0 0.0
    %926 = vmatprep.subr.mxu0 0.0
    %927 = vmatpush1.msra.mxu0 0.0
    %928 = vmatprep.subr.mxu0 0.0
    %929 = vmatpush1.msra.mxu0 0.0
    %930 = vmatprep.subr.mxu0 0.0
    %931 = vmatpush1.msra.mxu0 0.0
    %932 = vmatprep.subr.mxu0 0.0
    %933 = vmatpush1.msra.mxu0 0.0
    %934 = vmatprep.subr.mxu0 0.0
    %935 = vmatpush1.msra.mxu0 0.0
    %936 = vmatprep.mubr.f32.mxu0 0.0
    %937 = vmatmul.mubr.f32.gmra.mrb[0].mxu0 %v868
    %v938 = vpop.f32.mrb[0].mxu0
    %v939 = vadd.f32 0.0, %v938
    %v940 = vpop.f32.mrb[0].mxu0
    %941 = vmatprep.mubr.f32.mxu0 0.0
    %942 = vmatmul.mubr.f32.gmra.mrb[0].mxu0 %v870
    %v943 = vpop.f32.mrb[0].mxu0
    %v944 = vadd.f32 0.0, %v943
    %v945 = vpop.f32.mrb[0].mxu0
    %946 = vdwg.mxu0
    %v948 = vsel %vm174, %v944, 0
    %950 = vmatprep.subr.mxu0 0.0
    %951 = vmatpush1.msra.mxu0 %v939
    %952 = vmatprep.subr.mxu0 0.0
    %953 = vmatpush1.msra.mxu0 %v948
    %954 = vmatprep.subr.mxu0 0.0
    %955 = vmatpush1.msra.mxu0 0.0
    %956 = vmatprep.subr.mxu0 0.0
    %957 = vmatpush1.msra.mxu0 0.0
    %958 = vmatprep.subr.mxu0 0.0
    %959 = vmatpush1.msra.mxu0 0.0
    %960 = vmatprep.subr.mxu0 0.0
    %961 = vmatpush1.msra.mxu0 0.0
    %962 = vmatprep.subr.mxu0 0.0
    %963 = vmatpush1.msra.mxu0 0.0
    %964 = vmatprep.subr.mxu0 0.0
    %965 = vmatpush1.msra.mxu0 0.0
    %966 = vmatprep.subr.mxu0 0.0
    %967 = vmatpush1.msra.mxu0 0.0
    %968 = vmatprep.subr.mxu0 0.0
    %969 = vmatpush1.msra.mxu0 0.0
    %970 = vmatprep.subr.mxu0 0.0
    %971 = vmatpush1.msra.mxu0 0.0
    %972 = vmatprep.subr.mxu0 0.0
    %973 = vmatpush1.msra.mxu0 0.0
    %974 = vmatprep.subr.mxu0 0.0
    %975 = vmatpush1.msra.mxu0 0.0
    %976 = vmatprep.subr.mxu0 0.0
    %977 = vmatpush1.msra.mxu0 0.0
    %978 = vmatprep.subr.mxu0 0.0
    %979 = vmatpush1.msra.mxu0 0.0
    %980 = vmatprep.subr.mxu0 0.0
    %981 = vmatpush1.msra.mxu0 0.0
    %982 = vmatprep.subr.mxu0 0.0
    %983 = vmatpush1.msra.mxu0 0.0
    %984 = vmatprep.subr.mxu0 0.0
    %985 = vmatpush1.msra.mxu0 0.0
    %986 = vmatprep.subr.mxu0 0.0
    %987 = vmatpush1.msra.mxu0 0.0
    %988 = vmatprep.subr.mxu0 0.0
    %989 = vmatpush1.msra.mxu0 0.0
    %990 = vmatprep.subr.mxu0 0.0
    %991 = vmatpush1.msra.mxu0 0.0
    %992 = vmatprep.subr.mxu0 0.0
    %993 = vmatpush1.msra.mxu0 0.0
    %994 = vmatprep.subr.mxu0 0.0
    %995 = vmatpush1.msra.mxu0 0.0
    %996 = vmatprep.subr.mxu0 0.0
    %997 = vmatpush1.msra.mxu0 0.0
    %998 = vmatprep.subr.mxu0 0.0
    %999 = vmatpush1.msra.mxu0 0.0
    %1000 = vmatprep.subr.mxu0 0.0
    %1001 = vmatpush1.msra.mxu0 0.0
    %1002 = vmatprep.subr.mxu0 0.0
    %1003 = vmatpush1.msra.mxu0 0.0
    %1004 = vmatprep.subr.mxu0 0.0
    %1005 = vmatpush1.msra.mxu0 0.0
    %1006 = vmatprep.subr.mxu0 0.0
    %1007 = vmatpush1.msra.mxu0 0.0
    %1008 = vmatprep.subr.mxu0 0.0
    %1009 = vmatpush1.msra.mxu0 0.0
    %1010 = vmatprep.subr.mxu0 0.0
    %1011 = vmatpush1.msra.mxu0 0.0
    %1012 = vmatprep.subr.mxu0 0.0
    %1013 = vmatpush1.msra.mxu0 0.0
    %1014 = vmatprep.mubr.f32.mxu0 0.0
    %1015 = vmatmul.mubr.f32.gmra.mrb[0].mxu0 %v160
    %v1016 = vpop.f32.mrb[0].mxu0
    %v1017 = vadd.f32 0.0, %v1016
    %v1018 = vpop.f32.mrb[0].mxu0
    %1019 = vmatprep.mubr.f32.mxu0 0.0
    %1020 = vmatmul.mubr.f32.gmra.mrb[0].mxu0 %v163
    %v1021 = vpop.f32.mrb[0].mxu0
    %v1022 = vadd.f32 0.0, %v1021
    %v1023 = vpop.f32.mrb[0].mxu0
    %1024 = vmatprep.mubr.f32.mxu0 0.0
    %1025 = vmatmul.mubr.f32.gmra.mrb[0].mxu0 %v166
    %v1026 = vpop.f32.mrb[0].mxu0
    %v1027 = vadd.f32 0.0, %v1026
    %v1028 = vpop.f32.mrb[0].mxu0
    %1029 = vmatprep.mubr.f32.mxu0 0.0
    %1030 = vmatmul.mubr.f32.gmra.mrb[0].mxu0 %v169
    %v1031 = vpop.f32.mrb[0].mxu0
    %v1032 = vadd.f32 0.0, %v1031
    %v1033 = vpop.f32.mrb[0].mxu0
    %1034 = vmatprep.mubr.f32.mxu0 0.0
    %1035 = vmatmul.mubr.f32.gmra.mrb[0].mxu0 %v172
    %v1036 = vpop.f32.mrb[0].mxu0
    %v1037 = vadd.f32 0.0, %v1036
    %v1038 = vpop.f32.mrb[0].mxu0
    %1039 = vdwg.mxu0
    %v1043 = vrot.slane %v1027, 2
    %v1044 = vrot.slane %v1032, 2
    %v1045 = vsel %vm408, %v1043, %v1044
    %v1046 = vrot.slane %v1037, 2
    %v1047 = vsel %vm408, %v1044, %v1046
    %1048 = vrot.lane.b32.xlu0 %v1045, 127
    %v1049 = vpop.permute.xlu0 %1048
    %1050 = vrot.lane.b32.xlu0 %v1047, 127
    %v1051 = vpop.permute.xlu0 %1050
    %1052 = vrot.lane.b32.xlu0 %v1046, 127
    %v1053 = vpop.permute.xlu0 %1052
    %v1057 = vadd.f32 %v1017, %v1049
    %v1058 = vadd.f32 %v1022, %v1051
    %v1059 = vadd.f32 %v1027, %v1053
    %vm1060 = vcmp.gt.f32.partialorder %v1057, 0.0
    %vm1061 = vcmp.gt.f32.partialorder %v1058, 0.0
    %vm1062 = vcmp.gt.f32.partialorder %v1059, 0.0
    %v1063 = vmul.f32 %v1057, 0.01
    %v1064 = vmul.f32 %v1058, 0.01
    %v1065 = vmul.f32 %v1059, 0.01
    %v1066 = vsel %vm1060, %v1057, %v1063
    %v1067 = vsel %vm1061, %v1058, %v1064
    %v1068 = vsel %vm1062, %v1059, %v1065
    %vm1069 = vcmask 269568
    %v1070 = vsel %vm1069, %v1066, -inf
    %v1071 = vsel %vm1069, %v1067, -inf
    %vm1072 = vcmask 263424
    %v1073 = vsel %vm1072, %v1068, -inf
    %v1074 = vmax.f32 %v1070, %v1071
    %v1075 = vmax.f32 %v1074, %v1073
    %v1076 = vrot.slane %v1075, 4
    %v1077 = vmax.f32 %v1075, %v1076
    %v1078 = vrot.slane %v1077, 2
    %v1079 = vmax.f32 %v1077, %v1078
    %v1080 = vrot.slane %v1079, 1
    %v1081 = vmax.f32 %v1079, %v1080
    %v1082 = vsub.f32 %v1066, %v1081
    %v1083 = vsub.f32 %v1067, %v1081
    %v1084 = vsub.f32 %v1068, %v1081
    %v1085 = vmul.f32 %v1082, 1.442695
    %v1086 = vpow.pop %v1085
    %v1087 = vmul.f32 %v1083, 1.442695
    %v1088 = vpow.pop %v1087
    %v1089 = vmul.f32 %v1084, 1.442695
    %v1090 = vpow.pop %v1089
    %1092 = vset.pattern.permute.xlu0 32
    %1093 = vperm.xlu0 %1092, %v1086
    %v1094 = vpop.permute.xlu0 %1093
    %1097 = vset.pattern.permute.xlu0 32
    %1098 = vperm.xlu0 %1097, %v1088
    %v1099 = vpop.permute.xlu0 %1098
    %1102 = vset.pattern.permute.xlu0 32
    %1103 = vperm.xlu0 %1102, %v1090
    %v1104 = vpop.permute.xlu0 %1103
    %v1106 = vmul.f32 %v1017, %v1094
    %v1107 = vmul.f32 %v1022, %v1099
    %v1108 = vmul.f32 %v1027, %v1104
    %v1109 = vsel %vm46, %v1106, %v1086
    %v1110 = vsel %vm46, %v1107, %v1088
    %v1111 = vsel %vm46, %v1108, %v1090
    %v1113 = vsel %vm506, %v1111, 0
    %1115 = vmatprep.subr.mxu0 0.0
    %1116 = vmatpush1.msra.mxu0 %v1109
    %1117 = vmatprep.subr.mxu0 0.0
    %1118 = vmatpush1.msra.mxu0 %v1110
    %1119 = vmatprep.subr.mxu0 0.0
    %1120 = vmatpush1.msra.mxu0 %v1113
    %1121 = vmatprep.subr.mxu0 0.0
    %1122 = vmatpush1.msra.mxu0 0.0
    %1123 = vmatprep.subr.mxu0 0.0
    %1124 = vmatpush1.msra.mxu0 0.0
    %1125 = vmatprep.subr.mxu0 0.0
    %1126 = vmatpush1.msra.mxu0 0.0
    %1127 = vmatprep.subr.mxu0 0.0
    %1128 = vmatpush1.msra.mxu0 0.0
    %1129 = vmatprep.subr.mxu0 0.0
    %1130 = vmatpush1.msra.mxu0 0.0
    %1131 = vmatprep.subr.mxu0 0.0
    %1132 = vmatpush1.msra.mxu0 0.0
    %1133 = vmatprep.subr.mxu0 0.0
    %1134 = vmatpush1.msra.mxu0 0.0
    %1135 = vmatprep.subr.mxu0 0.0
    %1136 = vmatpush1.msra.mxu0 0.0
    %1137 = vmatprep.subr.mxu0 0.0
    %1138 = vmatpush1.msra.mxu0 0.0
    %1139 = vmatprep.subr.mxu0 0.0
    %1140 = vmatpush1.msra.mxu0 0.0
    %1141 = vmatprep.subr.mxu0 0.0
    %1142 = vmatpush1.msra.mxu0 0.0
    %1143 = vmatprep.subr.mxu0 0.0
    %1144 = vmatpush1.msra.mxu0 0.0
    %1145 = vmatprep.subr.mxu0 0.0
    %1146 = vmatpush1.msra.mxu0 0.0
    %1147 = vmatprep.subr.mxu0 0.0
    %1148 = vmatpush1.msra.mxu0 0.0
    %1149 = vmatprep.subr.mxu0 0.0
    %1150 = vmatpush1.msra.mxu0 0.0
    %1151 = vmatprep.subr.mxu0 0.0
    %1152 = vmatpush1.msra.mxu0 0.0
    %1153 = vmatprep.subr.mxu0 0.0
    %1154 = vmatpush1.msra.mxu0 0.0
    %1155 = vmatprep.subr.mxu0 0.0
    %1156 = vmatpush1.msra.mxu0 0.0
    %1157 = vmatprep.subr.mxu0 0.0
    %1158 = vmatpush1.msra.mxu0 0.0
    %1159 = vmatprep.subr.mxu0 0.0
    %1160 = vmatpush1.msra.mxu0 0.0
    %1161 = vmatprep.subr.mxu0 0.0
    %1162 = vmatpush1.msra.mxu0 0.0
    %1163 = vmatprep.subr.mxu0 0.0
    %1164 = vmatpush1.msra.mxu0 0.0
    %1165 = vmatprep.subr.mxu0 0.0
    %1166 = vmatpush1.msra.mxu0 0.0
    %1167 = vmatprep.subr.mxu0 0.0
    %1168 = vmatpush1.msra.mxu0 0.0
    %1169 = vmatprep.subr.mxu0 0.0
    %1170 = vmatpush1.msra.mxu0 0.0
    %1171 = vmatprep.subr.mxu0 0.0
    %1172 = vmatpush1.msra.mxu0 0.0
    %1173 = vmatprep.subr.mxu0 0.0
    %1174 = vmatpush1.msra.mxu0 0.0
    %1175 = vmatprep.subr.mxu0 0.0
    %1176 = vmatpush1.msra.mxu0 0.0
    %1177 = vmatprep.subr.mxu0 0.0
    %1178 = vmatpush1.msra.mxu0 0.0
    %1179 = vmatprep.mubr.f32.mxu0 0.0
    %1180 = vmatmul.mubr.f32.gmra.mrb[0].mxu0 %v501
    %v1181 = vpop.f32.mrb[0].mxu0
    %v1182 = vadd.f32 0.0, %v1181
    %v1183 = vpop.f32.mrb[0].mxu0
    %1184 = vmatprep.mubr.f32.mxu0 0.0
    %1185 = vmatmul.mubr.f32.gmra.mrb[0].mxu0 %v504
    %v1186 = vpop.f32.mrb[0].mxu0
    %v1187 = vadd.f32 0.0, %v1186
    %v1188 = vpop.f32.mrb[0].mxu0
    %1189 = vdwg.mxu0
    %v1190 = vmax.f32 %v1182, 1e-30
    %v1191 = vmax.f32 %v1187, 1e-30
    %1193 = vset.pattern.permute.xlu0 32
    %1194 = vperm.xlu0 %1193, %v1190
    %v1195 = vpop.permute.xlu0 %1194
    %1198 = vset.pattern.permute.xlu0 32
    %1199 = vperm.xlu0 %1198, %v1191
    %v1200 = vpop.permute.xlu0 %1199
    %v1202 = vrcp.pop %v1195
    %v1203 = vmul.f32 %v1182, %v1202
    %v1204 = vrcp.pop %v1200
    %v1205 = vmul.f32 %v1187, %v1204
    %v1206 = vld [vmem:[%s7 + $0x6] sm:$0x1]
    %v1207 = vlaneseq
    %v1208 = vshrl.u32 %v1207, 7
    %v1209 = vsub.s32 0, %v1208
    %v1210 = vrot.slane %v1206, %v1209
    %v1211 = vadd.f32 %v1203, %v1210
    %v1212 = vadd.f32 %v1205, %v1210
    %vm1213 = vcmp.gt.f32.partialorder %v1211, 0.0
    %vm1214 = vcmp.gt.f32.partialorder %v1212, 0.0
    %v1215 = vmul.f32 %v1211, 1.442695
    %v1216 = vpow.pop %v1215
    %v1217 = vmul.f32 %v1212, 1.442695
    %v1218 = vpow.pop %v1217
    %v1219 = vsub.f32 %v1216, 1.0
    %v1220 = vsub.f32 %v1218, 1.0
    %v1221 = vsel %vm1213, %v1211, %v1219
    %v1222 = vsel %vm1214, %v1212, %v1220
    %v1223 = vld [vmem:[%s6 + $0xb0] sm:$0xff]
    %v1224 = vld [vmem:[%s6 + $0xb8] sm:$0xff]
    %v1225 = vld [vmem:[%s6 + $0xc0] sm:$0xff]
    %v1226 = vld [vmem:[%s6 + $0xc8] sm:$0xff]
    %v1227 = vld [vmem:[%s7 + $0x7] sm:$0x1]
    %v1228 = vlaneseq
    %v1229 = vshrl.u32 %v1228, 7
    %v1230 = vsub.s32 0, %v1229
    %v1231 = vrot.slane %v1227, %v1230
    %v1233 = vsel %vm46, %v1221, 0
    %v1236 = vsel %vm46, %v1222, 0
    %1238 = vmatprep.subr.mxu0 0.0
    %1239 = vmatpush1.msra.mxu0 %v1223
    %1240 = vmatprep.subr.mxu0 0.0
    %1241 = vmatpush1.msra.mxu0 %v1224
    %1242 = vmatprep.subr.mxu0 0.0
    %1243 = vmatpush1.msra.mxu0 %v1225
    %1244 = vmatprep.subr.mxu0 0.0
    %1245 = vmatpush1.msra.mxu0 %v1226
    %1246 = vmatprep.subr.mxu0 0.0
    %1247 = vmatpush1.msra.mxu0 0.0
    %1248 = vmatprep.subr.mxu0 0.0
    %1249 = vmatpush1.msra.mxu0 0.0
    %1250 = vmatprep.subr.mxu0 0.0
    %1251 = vmatpush1.msra.mxu0 0.0
    %1252 = vmatprep.subr.mxu0 0.0
    %1253 = vmatpush1.msra.mxu0 0.0
    %1254 = vmatprep.subr.mxu0 0.0
    %1255 = vmatpush1.msra.mxu0 0.0
    %1256 = vmatprep.subr.mxu0 0.0
    %1257 = vmatpush1.msra.mxu0 0.0
    %1258 = vmatprep.subr.mxu0 0.0
    %1259 = vmatpush1.msra.mxu0 0.0
    %1260 = vmatprep.subr.mxu0 0.0
    %1261 = vmatpush1.msra.mxu0 0.0
    %1262 = vmatprep.subr.mxu0 0.0
    %1263 = vmatpush1.msra.mxu0 0.0
    %1264 = vmatprep.subr.mxu0 0.0
    %1265 = vmatpush1.msra.mxu0 0.0
    %1266 = vmatprep.subr.mxu0 0.0
    %1267 = vmatpush1.msra.mxu0 0.0
    %1268 = vmatprep.subr.mxu0 0.0
    %1269 = vmatpush1.msra.mxu0 0.0
    %1270 = vmatprep.subr.mxu0 0.0
    %1271 = vmatpush1.msra.mxu0 0.0
    %1272 = vmatprep.subr.mxu0 0.0
    %1273 = vmatpush1.msra.mxu0 0.0
    %1274 = vmatprep.subr.mxu0 0.0
    %1275 = vmatpush1.msra.mxu0 0.0
    %1276 = vmatprep.subr.mxu0 0.0
    %1277 = vmatpush1.msra.mxu0 0.0
    %1278 = vmatprep.subr.mxu0 0.0
    %1279 = vmatpush1.msra.mxu0 0.0
    %1280 = vmatprep.subr.mxu0 0.0
    %1281 = vmatpush1.msra.mxu0 0.0
    %1282 = vmatprep.subr.mxu0 0.0
    %1283 = vmatpush1.msra.mxu0 0.0
    %1284 = vmatprep.subr.mxu0 0.0
    %1285 = vmatpush1.msra.mxu0 0.0
    %1286 = vmatprep.subr.mxu0 0.0
    %1287 = vmatpush1.msra.mxu0 0.0
    %1288 = vmatprep.subr.mxu0 0.0
    %1289 = vmatpush1.msra.mxu0 0.0
    %1290 = vmatprep.subr.mxu0 0.0
    %1291 = vmatpush1.msra.mxu0 0.0
    %1292 = vmatprep.subr.mxu0 0.0
    %1293 = vmatpush1.msra.mxu0 0.0
    %1294 = vmatprep.subr.mxu0 0.0
    %1295 = vmatpush1.msra.mxu0 0.0
    %1296 = vmatprep.subr.mxu0 0.0
    %1297 = vmatpush1.msra.mxu0 0.0
    %1298 = vmatprep.subr.mxu0 0.0
    %1299 = vmatpush1.msra.mxu0 0.0
    %1300 = vmatprep.subr.mxu0 0.0
    %1301 = vmatpush1.msra.mxu0 0.0
    %1302 = vmatprep.mubr.f32.mxu0 0.0
    %1303 = vmatmul.mubr.f32.gmra.mrb[0].mxu0 %v1233
    %v1304 = vpop.f32.mrb[0].mxu0
    %v1305 = vadd.f32 %v1231, %v1304
    %v1306 = vpop.f32.mrb[0].mxu0
    %1307 = vmatprep.mubr.f32.mxu0 0.0
    %1308 = vmatmul.mubr.f32.gmra.mrb[0].mxu0 %v1236
    %v1309 = vpop.f32.mrb[0].mxu0
    %v1310 = vadd.f32 %v1231, %v1309
    %v1311 = vpop.f32.mrb[0].mxu0
    %1312 = vdwg.mxu0
    %v1313 = vld [vmem:[%s6 + $0xd0] sm:$0xff]
    %v1314 = vld [vmem:[%s6 + $0xd8] sm:$0xff]
    %v1315 = vld [vmem:[%s6 + $0xe0] sm:$0xff]
    %v1316 = vld [vmem:[%s6 + $0xe8] sm:$0xff]
    %v1317 = vld [vmem:[%s7 + $0x8] sm:$0x1]
    %v1318 = vlaneseq
    %v1319 = vshrl.u32 %v1318, 7
    %v1320 = vsub.s32 0, %v1319
    %v1321 = vrot.slane %v1317, %v1320
    %1322 = vmatprep.subr.mxu0 0.0
    %1323 = vmatpush1.msra.mxu0 %v1313
    %1324 = vmatprep.subr.mxu0 0.0
    %1325 = vmatpush1.msra.mxu0 %v1314
    %1326 = vmatprep.subr.mxu0 0.0
    %1327 = vmatpush1.msra.mxu0 %v1315
    %1328 = vmatprep.subr.mxu0 0.0
    %1329 = vmatpush1.msra.mxu0 %v1316
    %1330 = vmatprep.subr.mxu0 0.0
    %1331 = vmatpush1.msra.mxu0 0.0
    %1332 = vmatprep.subr.mxu0 0.0
    %1333 = vmatpush1.msra.mxu0 0.0
    %1334 = vmatprep.subr.mxu0 0.0
    %1335 = vmatpush1.msra.mxu0 0.0
    %1336 = vmatprep.subr.mxu0 0.0
    %1337 = vmatpush1.msra.mxu0 0.0
    %1338 = vmatprep.subr.mxu0 0.0
    %1339 = vmatpush1.msra.mxu0 0.0
    %1340 = vmatprep.subr.mxu0 0.0
    %1341 = vmatpush1.msra.mxu0 0.0
    %1342 = vmatprep.subr.mxu0 0.0
    %1343 = vmatpush1.msra.mxu0 0.0
    %1344 = vmatprep.subr.mxu0 0.0
    %1345 = vmatpush1.msra.mxu0 0.0
    %1346 = vmatprep.subr.mxu0 0.0
    %1347 = vmatpush1.msra.mxu0 0.0
    %1348 = vmatprep.subr.mxu0 0.0
    %1349 = vmatpush1.msra.mxu0 0.0
    %1350 = vmatprep.subr.mxu0 0.0
    %1351 = vmatpush1.msra.mxu0 0.0
    %1352 = vmatprep.subr.mxu0 0.0
    %1353 = vmatpush1.msra.mxu0 0.0
    %1354 = vmatprep.subr.mxu0 0.0
    %1355 = vmatpush1.msra.mxu0 0.0
    %1356 = vmatprep.subr.mxu0 0.0
    %1357 = vmatpush1.msra.mxu0 0.0
    %1358 = vmatprep.subr.mxu0 0.0
    %1359 = vmatpush1.msra.mxu0 0.0
    %1360 = vmatprep.subr.mxu0 0.0
    %1361 = vmatpush1.msra.mxu0 0.0
    %1362 = vmatprep.subr.mxu0 0.0
    %1363 = vmatpush1.msra.mxu0 0.0
    %1364 = vmatprep.subr.mxu0 0.0
    %1365 = vmatpush1.msra.mxu0 0.0
    %1366 = vmatprep.subr.mxu0 0.0
    %1367 = vmatpush1.msra.mxu0 0.0
    %1368 = vmatprep.subr.mxu0 0.0
    %1369 = vmatpush1.msra.mxu0 0.0
    %1370 = vmatprep.subr.mxu0 0.0
    %1371 = vmatpush1.msra.mxu0 0.0
    %1372 = vmatprep.subr.mxu0 0.0
    %1373 = vmatpush1.msra.mxu0 0.0
    %1374 = vmatprep.subr.mxu0 0.0
    %1375 = vmatpush1.msra.mxu0 0.0
    %1376 = vmatprep.subr.mxu0 0.0
    %1377 = vmatpush1.msra.mxu0 0.0
    %1378 = vmatprep.subr.mxu0 0.0
    %1379 = vmatpush1.msra.mxu0 0.0
    %1380 = vmatprep.subr.mxu0 0.0
    %1381 = vmatpush1.msra.mxu0 0.0
    %1382 = vmatprep.subr.mxu0 0.0
    %1383 = vmatpush1.msra.mxu0 0.0
    %1384 = vmatprep.subr.mxu0 0.0
    %1385 = vmatpush1.msra.mxu0 0.0
    %1386 = vmatprep.mubr.f32.mxu0 0.0
    %1387 = vmatmul.mubr.f32.gmra.mrb[0].mxu0 %v868
    %v1388 = vpop.f32.mrb[0].mxu0
    %v1389 = vadd.f32 %v1321, %v1388
    %v1390 = vpop.f32.mrb[0].mxu0
    %1391 = vmatprep.mubr.f32.mxu0 0.0
    %1392 = vmatmul.mubr.f32.gmra.mrb[0].mxu0 %v870
    %v1393 = vpop.f32.mrb[0].mxu0
    %v1394 = vadd.f32 %v1321, %v1393
    %v1395 = vpop.f32.mrb[0].mxu0
    %1396 = vdwg.mxu0
    %v1397 = vadd.f32 %v1305, %v1389
    %v1398 = vadd.f32 %v1310, %v1394
    %v1399 = vxor.u32 %v1397, 2147483648
    %v1400 = vxor.u32 %v1398, 2147483648
    %v1401 = vmul.f32 %v1399, 1.442695
    %v1402 = vpow.pop %v1401
    %v1403 = vmul.f32 %v1400, 1.442695
    %v1404 = vpow.pop %v1403
    %v1405 = vadd.f32 %v1402, 1.0
    %v1406 = vadd.f32 %v1404, 1.0
    %v1407 = vrcp.pop %v1405
    %v1408 = vmul.f32 1.0, %v1407
    %v1409 = vrcp.pop %v1406
    %v1410 = vmul.f32 1.0, %v1409
    %1413 = vrot.lane.b32.xlu0 %v1389, 64
    %v1414 = vpop.permute.xlu0 %1413
    %1415 = vrot.lane.b32.xlu0 %v1394, 64
    %v1416 = vpop.permute.xlu0 %1415
    %v1419 = vmul.f32 %v1408, %v1414
    %v1420 = vmul.f32 %v1410, %v1416
    %1423 = vrot.lane.b32.xlu0 %v1419, 64
    %v1424 = vpop.permute.xlu0 %1423
    %1425 = vrot.lane.b32.xlu0 %v1420, 64
    %v1426 = vpop.permute.xlu0 %1425
    %v1429 = vadd.f32 %v1305, %v1424
    %v1430 = vadd.f32 %v1310, %v1426
    %v1431 = vtanh.pop %v1429
    %v1432 = vtanh.pop %v1430
    %v1433 = vsub.f32 1.0, %v1408
    %v1434 = vsub.f32 1.0, %v1410
    %1437 = vrot.lane.b32.xlu0 %v1431, 96
    %v1438 = vpop.permute.xlu0 %1437
    %1439 = vrot.lane.b32.xlu0 %v1432, 96
    %v1440 = vpop.permute.xlu0 %1439
    %v1443 = vmul.f32 %v1433, %v1438
    %v1444 = vmul.f32 %v1434, %v1440
    %v1445 = vmul.f32 %v1408, %v856
    %v1446 = vmul.f32 %v1410, %v857
    %v1447 = vadd.f32 %v1443, %v1445
    %v1448 = vadd.f32 %v1444, %v1446
    %v1449 = vmax.f32 %v1447, 0.0
    %v1450 = vmax.f32 %v1448, 0.0
    %v1451 = vld [vmem:[%s4] sm:$0xff]
    %v1452 = vld [vmem:[%s4 + $0x8] sm:$0x7]
    %v1453 = vld [vmem:[%s5] sm:$0x3]
    %1456 = vrot.lane.b32.xlu0 %v1449, 96
    %v1457 = vpop.permute.xlu0 %1456
    %1458 = vrot.lane.b32.xlu0 %v1450, 96
    %v1459 = vpop.permute.xlu0 %1458
    %v1462 = vsel %vm158, %v1453, 0
    %v1464 = vsel %vm174, %v1459, 0
    %1466 = vmatprep.subr.mxu0 0.0
    %1467 = vmatpush1.msra.mxu0 %v1457
    %1468 = vmatprep.subr.mxu0 0.0
    %1469 = vmatpush1.msra.mxu0 %v1464
    %1470 = vmatprep.subr.mxu0 0.0
    %1471 = vmatpush1.msra.mxu0 0.0
    %1472 = vmatprep.subr.mxu0 0.0
    %1473 = vmatpush1.msra.mxu0 0.0
    %1474 = vmatprep.subr.mxu0 0.0
    %1475 = vmatpush1.msra.mxu0 0.0
    %1476 = vmatprep.subr.mxu0 0.0
    %1477 = vmatpush1.msra.mxu0 0.0
    %1478 = vmatprep.subr.mxu0 0.0
    %1479 = vmatpush1.msra.mxu0 0.0
    %1480 = vmatprep.subr.mxu0 0.0
    %1481 = vmatpush1.msra.mxu0 0.0
    %1482 = vmatprep.subr.mxu0 0.0
    %1483 = vmatpush1.msra.mxu0 0.0
    %1484 = vmatprep.subr.mxu0 0.0
    %1485 = vmatpush1.msra.mxu0 0.0
    %1486 = vmatprep.subr.mxu0 0.0
    %1487 = vmatpush1.msra.mxu0 0.0
    %1488 = vmatprep.subr.mxu0 0.0
    %1489 = vmatpush1.msra.mxu0 0.0
    %1490 = vmatprep.subr.mxu0 0.0
    %1491 = vmatpush1.msra.mxu0 0.0
    %1492 = vmatprep.subr.mxu0 0.0
    %1493 = vmatpush1.msra.mxu0 0.0
    %1494 = vmatprep.subr.mxu0 0.0
    %1495 = vmatpush1.msra.mxu0 0.0
    %1496 = vmatprep.subr.mxu0 0.0
    %1497 = vmatpush1.msra.mxu0 0.0
    %1498 = vmatprep.subr.mxu0 0.0
    %1499 = vmatpush1.msra.mxu0 0.0
    %1500 = vmatprep.subr.mxu0 0.0
    %1501 = vmatpush1.msra.mxu0 0.0
    %1502 = vmatprep.subr.mxu0 0.0
    %1503 = vmatpush1.msra.mxu0 0.0
    %1504 = vmatprep.subr.mxu0 0.0
    %1505 = vmatpush1.msra.mxu0 0.0
    %1506 = vmatprep.subr.mxu0 0.0
    %1507 = vmatpush1.msra.mxu0 0.0
    %1508 = vmatprep.subr.mxu0 0.0
    %1509 = vmatpush1.msra.mxu0 0.0
    %1510 = vmatprep.subr.mxu0 0.0
    %1511 = vmatpush1.msra.mxu0 0.0
    %1512 = vmatprep.subr.mxu0 0.0
    %1513 = vmatpush1.msra.mxu0 0.0
    %1514 = vmatprep.subr.mxu0 0.0
    %1515 = vmatpush1.msra.mxu0 0.0
    %1516 = vmatprep.subr.mxu0 0.0
    %1517 = vmatpush1.msra.mxu0 0.0
    %1518 = vmatprep.subr.mxu0 0.0
    %1519 = vmatpush1.msra.mxu0 0.0
    %1520 = vmatprep.subr.mxu0 0.0
    %1521 = vmatpush1.msra.mxu0 0.0
    %1522 = vmatprep.subr.mxu0 0.0
    %1523 = vmatpush1.msra.mxu0 0.0
    %1524 = vmatprep.subr.mxu0 0.0
    %1525 = vmatpush1.msra.mxu0 0.0
    %1526 = vmatprep.subr.mxu0 0.0
    %1527 = vmatpush1.msra.mxu0 0.0
    %1528 = vmatprep.subr.mxu0 0.0
    %1529 = vmatpush1.msra.mxu0 0.0
    %1530 = vmatprep.mubr.f32.mxu0 0.0
    %1531 = vmatmul.mubr.f32.gmra.mrb[0].mxu0 %v1462
    %v1532 = vpop.f32.mrb[0].mxu0
    %v1533 = vadd.f32 0.0, %v1532
    %v1534 = vpop.f32.mrb[0].mxu0
    %1535 = vdwg.mxu0
    %v1536 = vmax.f32 %v1533, 0.0
    %v1537 = vld [vmem:[%s6 + $0xf0] sm:$0xff]
    %v1538 = vld [vmem:[%s6 + $0xf8] sm:$0xff]
    %v1539 = vld [vmem:[%s6 + $0x100] sm:$0xff]
    %v1540 = vld [vmem:[%s6 + $0x108] sm:$0xff]
    %v1541 = vsel %vm46, %v1457, 0
    %v1543 = vsel %vm46, %v1459, 0
    %1545 = vmatprep.subr.mxu0 0.0
    %1546 = vmatpush1.msra.mxu0 %v1537
    %1547 = vmatprep.subr.mxu0 0.0
    %1548 = vmatpush1.msra.mxu0 %v1538
    %1549 = vmatprep.subr.mxu0 0.0
    %1550 = vmatpush1.msra.mxu0 %v1539
    %1551 = vmatprep.subr.mxu0 0.0
    %1552 = vmatpush1.msra.mxu0 %v1540
    %1553 = vmatprep.subr.mxu0 0.0
    %1554 = vmatpush1.msra.mxu0 0.0
    %1555 = vmatprep.subr.mxu0 0.0
    %1556 = vmatpush1.msra.mxu0 0.0
    %1557 = vmatprep.subr.mxu0 0.0
    %1558 = vmatpush1.msra.mxu0 0.0
    %1559 = vmatprep.subr.mxu0 0.0
    %1560 = vmatpush1.msra.mxu0 0.0
    %1561 = vmatprep.subr.mxu0 0.0
    %1562 = vmatpush1.msra.mxu0 0.0
    %1563 = vmatprep.subr.mxu0 0.0
    %1564 = vmatpush1.msra.mxu0 0.0
    %1565 = vmatprep.subr.mxu0 0.0
    %1566 = vmatpush1.msra.mxu0 0.0
    %1567 = vmatprep.subr.mxu0 0.0
    %1568 = vmatpush1.msra.mxu0 0.0
    %1569 = vmatprep.subr.mxu0 0.0
    %1570 = vmatpush1.msra.mxu0 0.0
    %1571 = vmatprep.subr.mxu0 0.0
    %1572 = vmatpush1.msra.mxu0 0.0
    %1573 = vmatprep.subr.mxu0 0.0
    %1574 = vmatpush1.msra.mxu0 0.0
    %1575 = vmatprep.subr.mxu0 0.0
    %1576 = vmatpush1.msra.mxu0 0.0
    %1577 = vmatprep.subr.mxu0 0.0
    %1578 = vmatpush1.msra.mxu0 0.0
    %1579 = vmatprep.subr.mxu0 0.0
    %1580 = vmatpush1.msra.mxu0 0.0
    %1581 = vmatprep.subr.mxu0 0.0
    %1582 = vmatpush1.msra.mxu0 0.0
    %1583 = vmatprep.subr.mxu0 0.0
    %1584 = vmatpush1.msra.mxu0 0.0
    %1585 = vmatprep.subr.mxu0 0.0
    %1586 = vmatpush1.msra.mxu0 0.0
    %1587 = vmatprep.subr.mxu0 0.0
    %1588 = vmatpush1.msra.mxu0 0.0
    %1589 = vmatprep.subr.mxu0 0.0
    %1590 = vmatpush1.msra.mxu0 0.0
    %1591 = vmatprep.subr.mxu0 0.0
    %1592 = vmatpush1.msra.mxu0 0.0
    %1593 = vmatprep.subr.mxu0 0.0
    %1594 = vmatpush1.msra.mxu0 0.0
    %1595 = vmatprep.subr.mxu0 0.0
    %1596 = vmatpush1.msra.mxu0 0.0
    %1597 = vmatprep.subr.mxu0 0.0
    %1598 = vmatpush1.msra.mxu0 0.0
    %1599 = vmatprep.subr.mxu0 0.0
    %1600 = vmatpush1.msra.mxu0 0.0
    %1601 = vmatprep.subr.mxu0 0.0
    %1602 = vmatpush1.msra.mxu0 0.0
    %1603 = vmatprep.subr.mxu0 0.0
    %1604 = vmatpush1.msra.mxu0 0.0
    %1605 = vmatprep.subr.mxu0 0.0
    %1606 = vmatpush1.msra.mxu0 0.0
    %1607 = vmatprep.subr.mxu0 0.0
    %1608 = vmatpush1.msra.mxu0 0.0
    %1609 = vmatprep.mubr.f32.mxu0 0.0
    %1610 = vmatmul.mubr.f32.gmra.mrb[0].mxu0 %v1541
    %v1611 = vpop.f32.mrb[0].mxu0
    %v1612 = vadd.f32 0.0, %v1611
    %v1613 = vpop.f32.mrb[0].mxu0
    %1614 = vmatprep.mubr.f32.mxu0 0.0
    %1615 = vmatmul.mubr.f32.gmra.mrb[0].mxu0 %v1543
    %v1616 = vpop.f32.mrb[0].mxu0
    %v1617 = vadd.f32 0.0, %v1616
    %v1618 = vpop.f32.mrb[0].mxu0
    %1619 = vdwg.mxu0
    %v1620 = vld [vmem:[%s7 + $0x9] sm:$0x1]
    %v1621 = vld [vmem:[%s7 + $0xa] sm:$0x1]
    %v1622 = vlaneseq
    %v1623 = vshrl.u32 %v1622, 7
    %v1624 = vsub.s32 0, %v1623
    %v1625 = vrot.slane %v1620, %v1624
    %v1626 = vmul.f32 %v1536, %v1625
    %v1627 = vsel %vm401, %v1626, 0.0
    %1628 = vadd.xlane.f32.xlu0 %v1627
    %v1629 = vpop.xlane.xlu0 %1628
    %vm1630 = vcmask 15360
    %v1632 = vsel %vm1630, %v1451, 0
    %v1635 = vsel %vm1630, %v1452, 0
    %v1638 = vsel %vm506, %v1629, 0
    %1640 = vmatprep.subr.mxu0 0.0
    %1641 = vmatpush1.msra.mxu0 %v1638
    %1642 = vmatprep.subr.mxu0 0.0
    %1643 = vmatpush1.msra.mxu0 0.0
    %1644 = vmatprep.subr.mxu0 0.0
    %1645 = vmatpush1.msra.mxu0 0.0
    %1646 = vmatprep.subr.mxu0 0.0
    %1647 = vmatpush1.msra.mxu0 0.0
    %1648 = vmatprep.subr.mxu0 0.0
    %1649 = vmatpush1.msra.mxu0 0.0
    %1650 = vmatprep.subr.mxu0 0.0
    %1651 = vmatpush1.msra.mxu0 0.0
    %1652 = vmatprep.subr.mxu0 0.0
    %1653 = vmatpush1.msra.mxu0 0.0
    %1654 = vmatprep.subr.mxu0 0.0
    %1655 = vmatpush1.msra.mxu0 0.0
    %1656 = vmatprep.subr.mxu0 0.0
    %1657 = vmatpush1.msra.mxu0 0.0
    %1658 = vmatprep.subr.mxu0 0.0
    %1659 = vmatpush1.msra.mxu0 0.0
    %1660 = vmatprep.subr.mxu0 0.0
    %1661 = vmatpush1.msra.mxu0 0.0
    %1662 = vmatprep.subr.mxu0 0.0
    %1663 = vmatpush1.msra.mxu0 0.0
    %1664 = vmatprep.subr.mxu0 0.0
    %1665 = vmatpush1.msra.mxu0 0.0
    %1666 = vmatprep.subr.mxu0 0.0
    %1667 = vmatpush1.msra.mxu0 0.0
    %1668 = vmatprep.subr.mxu0 0.0
    %1669 = vmatpush1.msra.mxu0 0.0
    %1670 = vmatprep.subr.mxu0 0.0
    %1671 = vmatpush1.msra.mxu0 0.0
    %1672 = vmatprep.subr.mxu0 0.0
    %1673 = vmatpush1.msra.mxu0 0.0
    %1674 = vmatprep.subr.mxu0 0.0
    %1675 = vmatpush1.msra.mxu0 0.0
    %1676 = vmatprep.subr.mxu0 0.0
    %1677 = vmatpush1.msra.mxu0 0.0
    %1678 = vmatprep.subr.mxu0 0.0
    %1679 = vmatpush1.msra.mxu0 0.0
    %1680 = vmatprep.subr.mxu0 0.0
    %1681 = vmatpush1.msra.mxu0 0.0
    %1682 = vmatprep.subr.mxu0 0.0
    %1683 = vmatpush1.msra.mxu0 0.0
    %1684 = vmatprep.subr.mxu0 0.0
    %1685 = vmatpush1.msra.mxu0 0.0
    %1686 = vmatprep.subr.mxu0 0.0
    %1687 = vmatpush1.msra.mxu0 0.0
    %1688 = vmatprep.subr.mxu0 0.0
    %1689 = vmatpush1.msra.mxu0 0.0
    %1690 = vmatprep.subr.mxu0 0.0
    %1691 = vmatpush1.msra.mxu0 0.0
    %1692 = vmatprep.subr.mxu0 0.0
    %1693 = vmatpush1.msra.mxu0 0.0
    %1694 = vmatprep.subr.mxu0 0.0
    %1695 = vmatpush1.msra.mxu0 0.0
    %1696 = vmatprep.subr.mxu0 0.0
    %1697 = vmatpush1.msra.mxu0 0.0
    %1698 = vmatprep.subr.mxu0 0.0
    %1699 = vmatpush1.msra.mxu0 0.0
    %1700 = vmatprep.subr.mxu0 0.0
    %1701 = vmatpush1.msra.mxu0 0.0
    %1702 = vmatprep.subr.mxu0 0.0
    %1703 = vmatpush1.msra.mxu0 0.0
    %1704 = vmatprep.mubr.f32.mxu0 0.0
    %1705 = vmatmul.mubr.f32.gmra.mrb[0].mxu0 %v1632
    %v1706 = vpop.f32.mrb[0].mxu0
    %v1707 = vadd.f32 0.0, %v1706
    %v1708 = vpop.f32.mrb[0].mxu0
    %1709 = vmatprep.mubr.f32.mxu0 0.0
    %1710 = vmatmul.mubr.f32.gmra.mrb[0].mxu0 %v1635
    %v1711 = vpop.f32.mrb[0].mxu0
    %v1712 = vadd.f32 0.0, %v1711
    %v1713 = vpop.f32.mrb[0].mxu0
    %1714 = vdwg.mxu0
    %1717 = vrot.lane.b32.xlu0 %v1707, 32
    %v1718 = vpop.permute.xlu0 %1717
    %1719 = vrot.lane.b32.xlu0 %v1712, 32
    %v1720 = vpop.permute.xlu0 %1719
    %v1723 = vadd.f32 %v1612, %v1718
    %v1724 = vadd.f32 %v1617, %v1720
    %vm1725 = vcmp.gt.f32.partialorder %v1723, 0.0
    %vm1726 = vcmp.gt.f32.partialorder %v1724, 0.0
    %v1727 = vmul.f32 %v1723, 0.01
    %v1728 = vmul.f32 %v1724, 0.01
    %v1729 = vsel %vm1725, %v1723, %v1727
    %v1730 = vsel %vm1726, %v1724, %v1728
    %v1731 = vsel %vm1069, %v1729, -inf
    %vm1732 = vcmask 264448
    %v1733 = vsel %vm1732, %v1730, -inf
    %v1734 = vmax.f32 %v1731, %v1733
    %v1735 = vrot.slane %v1734, 4
    %v1736 = vmax.f32 %v1734, %v1735
    %v1737 = vrot.slane %v1736, 2
    %v1738 = vmax.f32 %v1736, %v1737
    %v1739 = vrot.slane %v1738, 1
    %v1740 = vmax.f32 %v1738, %v1739
    %v1741 = vsub.f32 %v1729, %v1740
    %v1742 = vsub.f32 %v1730, %v1740
    %v1743 = vmul.f32 %v1741, 1.442695
    %v1744 = vpow.pop %v1743
    %v1745 = vmul.f32 %v1742, 1.442695
    %v1746 = vpow.pop %v1745
    %1748 = vset.pattern.permute.xlu0 32
    %1749 = vperm.xlu0 %1748, %v1744
    %v1750 = vpop.permute.xlu0 %1749
    %1753 = vset.pattern.permute.xlu0 32
    %1754 = vperm.xlu0 %1753, %v1746
    %v1755 = vpop.permute.xlu0 %1754
    %v1757 = vmul.f32 %v1612, %v1750
    %v1758 = vmul.f32 %v1617, %v1755
    %v1759 = vsel %vm46, %v1757, %v1744
    %v1760 = vsel %vm46, %v1758, %v1746
    %v1762 = vsel %vm174, %v1760, 0
    %1764 = vmatprep.subr.mxu0 0.0
    %1765 = vmatpush1.msra.mxu0 %v1759
    %1766 = vmatprep.subr.mxu0 0.0
    %1767 = vmatpush1.msra.mxu0 %v1762
    %1768 = vmatprep.subr.mxu0 0.0
    %1769 = vmatpush1.msra.mxu0 0.0
    %1770 = vmatprep.subr.mxu0 0.0
    %1771 = vmatpush1.msra.mxu0 0.0
    %1772 = vmatprep.subr.mxu0 0.0
    %1773 = vmatpush1.msra.mxu0 0.0
    %1774 = vmatprep.subr.mxu0 0.0
    %1775 = vmatpush1.msra.mxu0 0.0
    %1776 = vmatprep.subr.mxu0 0.0
    %1777 = vmatpush1.msra.mxu0 0.0
    %1778 = vmatprep.subr.mxu0 0.0
    %1779 = vmatpush1.msra.mxu0 0.0
    %1780 = vmatprep.subr.mxu0 0.0
    %1781 = vmatpush1.msra.mxu0 0.0
    %1782 = vmatprep.subr.mxu0 0.0
    %1783 = vmatpush1.msra.mxu0 0.0
    %1784 = vmatprep.subr.mxu0 0.0
    %1785 = vmatpush1.msra.mxu0 0.0
    %1786 = vmatprep.subr.mxu0 0.0
    %1787 = vmatpush1.msra.mxu0 0.0
    %1788 = vmatprep.subr.mxu0 0.0
    %1789 = vmatpush1.msra.mxu0 0.0
    %1790 = vmatprep.subr.mxu0 0.0
    %1791 = vmatpush1.msra.mxu0 0.0
    %1792 = vmatprep.subr.mxu0 0.0
    %1793 = vmatpush1.msra.mxu0 0.0
    %1794 = vmatprep.subr.mxu0 0.0
    %1795 = vmatpush1.msra.mxu0 0.0
    %1796 = vmatprep.subr.mxu0 0.0
    %1797 = vmatpush1.msra.mxu0 0.0
    %1798 = vmatprep.subr.mxu0 0.0
    %1799 = vmatpush1.msra.mxu0 0.0
    %1800 = vmatprep.subr.mxu0 0.0
    %1801 = vmatpush1.msra.mxu0 0.0
    %1802 = vmatprep.subr.mxu0 0.0
    %1803 = vmatpush1.msra.mxu0 0.0
    %1804 = vmatprep.subr.mxu0 0.0
    %1805 = vmatpush1.msra.mxu0 0.0
    %1806 = vmatprep.subr.mxu0 0.0
    %1807 = vmatpush1.msra.mxu0 0.0
    %1808 = vmatprep.subr.mxu0 0.0
    %1809 = vmatpush1.msra.mxu0 0.0
    %1810 = vmatprep.subr.mxu0 0.0
    %1811 = vmatpush1.msra.mxu0 0.0
    %1812 = vmatprep.subr.mxu0 0.0
    %1813 = vmatpush1.msra.mxu0 0.0
    %1814 = vmatprep.subr.mxu0 0.0
    %1815 = vmatpush1.msra.mxu0 0.0
    %1816 = vmatprep.subr.mxu0 0.0
    %1817 = vmatpush1.msra.mxu0 0.0
    %1818 = vmatprep.subr.mxu0 0.0
    %1819 = vmatpush1.msra.mxu0 0.0
    %1820 = vmatprep.subr.mxu0 0.0
    %1821 = vmatpush1.msra.mxu0 0.0
    %1822 = vmatprep.subr.mxu0 0.0
    %1823 = vmatpush1.msra.mxu0 0.0
    %1824 = vmatprep.subr.mxu0 0.0
    %1825 = vmatpush1.msra.mxu0 0.0
    %1826 = vmatprep.subr.mxu0 0.0
    %1827 = vmatpush1.msra.mxu0 0.0
    %1828 = vmatprep.mubr.f32.mxu0 0.0
    %1829 = vmatmul.mubr.f32.gmra.mrb[0].mxu0 %v1462
    %v1830 = vpop.f32.mrb[0].mxu0
    %v1831 = vadd.f32 0.0, %v1830
    %v1832 = vpop.f32.mrb[0].mxu0
    %1833 = vdwg.mxu0
    %v1834 = vmax.f32 %v1831, 1e-30
    %1836 = vset.pattern.permute.xlu0 32
    %1837 = vperm.xlu0 %1836, %v1834
    %v1838 = vpop.permute.xlu0 %1837
    %v1840 = vrcp.pop %v1838
    %v1841 = vmul.f32 %v1831, %v1840
    %v1842 = vlaneseq
    %v1843 = vshrl.u32 %v1842, 7
    %v1844 = vsub.s32 0, %v1843
    %v1845 = vrot.slane %v1621, %v1844
    %v1846 = vadd.f32 %v1841, %v1845
    %vm1847 = vcmp.gt.f32.partialorder %v1846, 0.0
    %v1848 = vmul.f32 %v1846, 1.442695
    %v1849 = vpow.pop %v1848
    %v1850 = vsub.f32 %v1849, 1.0
    %v1851 = vsel %vm1847, %v1846, %v1850
    %v1852 = vld [vmem:[%s6 + $0x110] sm:$0xff]
    %v1853 = vld [vmem:[%s6 + $0x118] sm:$0xff]
    %v1854 = vld [vmem:[%s6 + $0x120] sm:$0xff]
    %v1855 = vld [vmem:[%s6 + $0x128] sm:$0xff]
    %v1856 = vld [vmem:[%s7 + $0xb] sm:$0x1]
    %v1857 = vlaneseq
    %v1858 = vshrl.u32 %v1857, 7
    %v1859 = vsub.s32 0, %v1858
    %v1860 = vrot.slane %v1856, %v1859
    %v1862 = vsel %vm46, %v1851, 0
    %1864 = vmatprep.subr.mxu0 0.0
    %1865 = vmatpush1.msra.mxu0 %v1852
    %1866 = vmatprep.subr.mxu0 0.0
    %1867 = vmatpush1.msra.mxu0 %v1853
    %1868 = vmatprep.subr.mxu0 0.0
    %1869 = vmatpush1.msra.mxu0 %v1854
    %1870 = vmatprep.subr.mxu0 0.0
    %1871 = vmatpush1.msra.mxu0 %v1855
    %1872 = vmatprep.subr.mxu0 0.0
    %1873 = vmatpush1.msra.mxu0 0.0
    %1874 = vmatprep.subr.mxu0 0.0
    %1875 = vmatpush1.msra.mxu0 0.0
    %1876 = vmatprep.subr.mxu0 0.0
    %1877 = vmatpush1.msra.mxu0 0.0
    %1878 = vmatprep.subr.mxu0 0.0
    %1879 = vmatpush1.msra.mxu0 0.0
    %1880 = vmatprep.subr.mxu0 0.0
    %1881 = vmatpush1.msra.mxu0 0.0
    %1882 = vmatprep.subr.mxu0 0.0
    %1883 = vmatpush1.msra.mxu0 0.0
    %1884 = vmatprep.subr.mxu0 0.0
    %1885 = vmatpush1.msra.mxu0 0.0
    %1886 = vmatprep.subr.mxu0 0.0
    %1887 = vmatpush1.msra.mxu0 0.0
    %1888 = vmatprep.subr.mxu0 0.0
    %1889 = vmatpush1.msra.mxu0 0.0
    %1890 = vmatprep.subr.mxu0 0.0
    %1891 = vmatpush1.msra.mxu0 0.0
    %1892 = vmatprep.subr.mxu0 0.0
    %1893 = vmatpush1.msra.mxu0 0.0
    %1894 = vmatprep.subr.mxu0 0.0
    %1895 = vmatpush1.msra.mxu0 0.0
    %1896 = vmatprep.subr.mxu0 0.0
    %1897 = vmatpush1.msra.mxu0 0.0
    %1898 = vmatprep.subr.mxu0 0.0
    %1899 = vmatpush1.msra.mxu0 0.0
    %1900 = vmatprep.subr.mxu0 0.0
    %1901 = vmatpush1.msra.mxu0 0.0
    %1902 = vmatprep.subr.mxu0 0.0
    %1903 = vmatpush1.msra.mxu0 0.0
    %1904 = vmatprep.subr.mxu0 0.0
    %1905 = vmatpush1.msra.mxu0 0.0
    %1906 = vmatprep.subr.mxu0 0.0
    %1907 = vmatpush1.msra.mxu0 0.0
    %1908 = vmatprep.subr.mxu0 0.0
    %1909 = vmatpush1.msra.mxu0 0.0
    %1910 = vmatprep.subr.mxu0 0.0
    %1911 = vmatpush1.msra.mxu0 0.0
    %1912 = vmatprep.subr.mxu0 0.0
    %1913 = vmatpush1.msra.mxu0 0.0
    %1914 = vmatprep.subr.mxu0 0.0
    %1915 = vmatpush1.msra.mxu0 0.0
    %1916 = vmatprep.subr.mxu0 0.0
    %1917 = vmatpush1.msra.mxu0 0.0
    %1918 = vmatprep.subr.mxu0 0.0
    %1919 = vmatpush1.msra.mxu0 0.0
    %1920 = vmatprep.subr.mxu0 0.0
    %1921 = vmatpush1.msra.mxu0 0.0
    %1922 = vmatprep.subr.mxu0 0.0
    %1923 = vmatpush1.msra.mxu0 0.0
    %1924 = vmatprep.subr.mxu0 0.0
    %1925 = vmatpush1.msra.mxu0 0.0
    %1926 = vmatprep.subr.mxu0 0.0
    %1927 = vmatpush1.msra.mxu0 0.0
    %1928 = vmatprep.mubr.f32.mxu0 0.0
    %1929 = vmatmul.mubr.f32.gmra.mrb[0].mxu0 %v1862
    %v1930 = vpop.f32.mrb[0].mxu0
    %v1931 = vadd.f32 %v1860, %v1930
    %v1932 = vpop.f32.mrb[0].mxu0
    %1933 = vdwg.mxu0
    %v1934 = vld [vmem:[%s6 + $0x130] sm:$0xff]
    %v1935 = vld [vmem:[%s6 + $0x138] sm:$0xff]
    %v1936 = vld [vmem:[%s6 + $0x140] sm:$0xff]
    %v1937 = vld [vmem:[%s6 + $0x148] sm:$0xff]
    %v1938 = vld [vmem:[%s7 + $0xc] sm:$0x1]
    %v1939 = vlaneseq
    %v1940 = vshrl.u32 %v1939, 7
    %v1941 = vsub.s32 0, %v1940
    %v1942 = vrot.slane %v1938, %v1941
    %v1944 = vsel %vm46, %v1536, 0
    %1946 = vmatprep.subr.mxu0 0.0
    %1947 = vmatpush1.msra.mxu0 %v1934
    %1948 = vmatprep.subr.mxu0 0.0
    %1949 = vmatpush1.msra.mxu0 %v1935
    %1950 = vmatprep.subr.mxu0 0.0
    %1951 = vmatpush1.msra.mxu0 %v1936
    %1952 = vmatprep.subr.mxu0 0.0
    %1953 = vmatpush1.msra.mxu0 %v1937
    %1954 = vmatprep.subr.mxu0 0.0
    %1955 = vmatpush1.msra.mxu0 0.0
    %1956 = vmatprep.subr.mxu0 0.0
    %1957 = vmatpush1.msra.mxu0 0.0
    %1958 = vmatprep.subr.mxu0 0.0
    %1959 = vmatpush1.msra.mxu0 0.0
    %1960 = vmatprep.subr.mxu0 0.0
    %1961 = vmatpush1.msra.mxu0 0.0
    %1962 = vmatprep.subr.mxu0 0.0
    %1963 = vmatpush1.msra.mxu0 0.0
    %1964 = vmatprep.subr.mxu0 0.0
    %1965 = vmatpush1.msra.mxu0 0.0
    %1966 = vmatprep.subr.mxu0 0.0
    %1967 = vmatpush1.msra.mxu0 0.0
    %1968 = vmatprep.subr.mxu0 0.0
    %1969 = vmatpush1.msra.mxu0 0.0
    %1970 = vmatprep.subr.mxu0 0.0
    %1971 = vmatpush1.msra.mxu0 0.0
    %1972 = vmatprep.subr.mxu0 0.0
    %1973 = vmatpush1.msra.mxu0 0.0
    %1974 = vmatprep.subr.mxu0 0.0
    %1975 = vmatpush1.msra.mxu0 0.0
    %1976 = vmatprep.subr.mxu0 0.0
    %1977 = vmatpush1.msra.mxu0 0.0
    %1978 = vmatprep.subr.mxu0 0.0
    %1979 = vmatpush1.msra.mxu0 0.0
    %1980 = vmatprep.subr.mxu0 0.0
    %1981 = vmatpush1.msra.mxu0 0.0
    %1982 = vmatprep.subr.mxu0 0.0
    %1983 = vmatpush1.msra.mxu0 0.0
    %1984 = vmatprep.subr.mxu0 0.0
    %1985 = vmatpush1.msra.mxu0 0.0
    %1986 = vmatprep.subr.mxu0 0.0
    %1987 = vmatpush1.msra.mxu0 0.0
    %1988 = vmatprep.subr.mxu0 0.0
    %1989 = vmatpush1.msra.mxu0 0.0
    %1990 = vmatprep.subr.mxu0 0.0
    %1991 = vmatpush1.msra.mxu0 0.0
    %1992 = vmatprep.subr.mxu0 0.0
    %1993 = vmatpush1.msra.mxu0 0.0
    %1994 = vmatprep.subr.mxu0 0.0
    %1995 = vmatpush1.msra.mxu0 0.0
    %1996 = vmatprep.subr.mxu0 0.0
    %1997 = vmatpush1.msra.mxu0 0.0
    %1998 = vmatprep.subr.mxu0 0.0
    %1999 = vmatpush1.msra.mxu0 0.0
    %2000 = vmatprep.subr.mxu0 0.0
    %2001 = vmatpush1.msra.mxu0 0.0
    %2002 = vmatprep.subr.mxu0 0.0
    %2003 = vmatpush1.msra.mxu0 0.0
    %2004 = vmatprep.subr.mxu0 0.0
    %2005 = vmatpush1.msra.mxu0 0.0
    %2006 = vmatprep.subr.mxu0 0.0
    %2007 = vmatpush1.msra.mxu0 0.0
    %2008 = vmatprep.subr.mxu0 0.0
    %2009 = vmatpush1.msra.mxu0 0.0
    %2010 = vmatprep.mubr.f32.mxu0 0.0
    %2011 = vmatmul.mubr.f32.gmra.mrb[0].mxu0 %v1944
    %v2012 = vpop.f32.mrb[0].mxu0
    %v2013 = vadd.f32 %v1942, %v2012
    %v2014 = vpop.f32.mrb[0].mxu0
    %2015 = vdwg.mxu0
    %v2016 = vadd.f32 %v1931, %v2013
    %v2017 = vxor.u32 %v2016, 2147483648
    %v2018 = vmul.f32 %v2017, 1.442695
    %v2019 = vpow.pop %v2018
    %v2020 = vadd.f32 %v2019, 1.0
    %v2021 = vrcp.pop %v2020
    %v2022 = vmul.f32 1.0, %v2021
    %2024 = vrot.lane.b32.xlu0 %v2013, 64
    %v2025 = vpop.permute.xlu0 %2024
    %v2027 = vmul.f32 %v2022, %v2025
    %2029 = vrot.lane.b32.xlu0 %v2027, 64
    %v2030 = vpop.permute.xlu0 %2029
    %v2032 = vadd.f32 %v1931, %v2030
    %v2033 = vtanh.pop %v2032
    %v2034 = vsub.f32 1.0, %v2022
    %2036 = vrot.lane.b32.xlu0 %v2033, 96
    %v2037 = vpop.permute.xlu0 %2036
    %v2039 = vmul.f32 %v2034, %v2037
    %2040 = vrot.lane.b32.xlu0 %v1536, 32
    %v2041 = vpop.permute.xlu0 %2040
    %v2043 = vmul.f32 %v2022, %v2041
    %v2044 = vadd.f32 %v2039, %v2043
    %v2045 = vmax.f32 %v2044, 0.0
    %2047 = vrot.lane.b32.xlu0 %v1625, 32
    %v2048 = vpop.permute.xlu0 %2047
    %v2050 = vmul.f32 %v2045, %v2048
    %2052 = vrot.lane.b32.xlu0 %v2050, 96
    %v2053 = vpop.permute.xlu0 %2052
    %v2055 = vsel %vm401, %v2053, 0.0
    %2056 = vadd.xlane.f32.xlu0 %v2055
    %v2057 = vpop.xlane.xlu0 %2056
    %v2059 = vsel %vm506, %v2057, 0
    %2061 = vmatprep.subr.mxu0 0.0
    %2062 = vmatpush1.msra.mxu0 %v2059
    %2063 = vmatprep.subr.mxu0 0.0
    %2064 = vmatpush1.msra.mxu0 0.0
    %2065 = vmatprep.subr.mxu0 0.0
    %2066 = vmatpush1.msra.mxu0 0.0
    %2067 = vmatprep.subr.mxu0 0.0
    %2068 = vmatpush1.msra.mxu0 0.0
    %2069 = vmatprep.subr.mxu0 0.0
    %2070 = vmatpush1.msra.mxu0 0.0
    %2071 = vmatprep.subr.mxu0 0.0
    %2072 = vmatpush1.msra.mxu0 0.0
    %2073 = vmatprep.subr.mxu0 0.0
    %2074 = vmatpush1.msra.mxu0 0.0
    %2075 = vmatprep.subr.mxu0 0.0
    %2076 = vmatpush1.msra.mxu0 0.0
    %2077 = vmatprep.subr.mxu0 0.0
    %2078 = vmatpush1.msra.mxu0 0.0
    %2079 = vmatprep.subr.mxu0 0.0
    %2080 = vmatpush1.msra.mxu0 0.0
    %2081 = vmatprep.subr.mxu0 0.0
    %2082 = vmatpush1.msra.mxu0 0.0
    %2083 = vmatprep.subr.mxu0 0.0
    %2084 = vmatpush1.msra.mxu0 0.0
    %2085 = vmatprep.subr.mxu0 0.0
    %2086 = vmatpush1.msra.mxu0 0.0
    %2087 = vmatprep.subr.mxu0 0.0
    %2088 = vmatpush1.msra.mxu0 0.0
    %2089 = vmatprep.subr.mxu0 0.0
    %2090 = vmatpush1.msra.mxu0 0.0
    %2091 = vmatprep.subr.mxu0 0.0
    %2092 = vmatpush1.msra.mxu0 0.0
    %2093 = vmatprep.subr.mxu0 0.0
    %2094 = vmatpush1.msra.mxu0 0.0
    %2095 = vmatprep.subr.mxu0 0.0
    %2096 = vmatpush1.msra.mxu0 0.0
    %2097 = vmatprep.subr.mxu0 0.0
    %2098 = vmatpush1.msra.mxu0 0.0
    %2099 = vmatprep.subr.mxu0 0.0
    %2100 = vmatpush1.msra.mxu0 0.0
    %2101 = vmatprep.subr.mxu0 0.0
    %2102 = vmatpush1.msra.mxu0 0.0
    %2103 = vmatprep.subr.mxu0 0.0
    %2104 = vmatpush1.msra.mxu0 0.0
    %2105 = vmatprep.subr.mxu0 0.0
    %2106 = vmatpush1.msra.mxu0 0.0
    %2107 = vmatprep.subr.mxu0 0.0
    %2108 = vmatpush1.msra.mxu0 0.0
    %2109 = vmatprep.subr.mxu0 0.0
    %2110 = vmatpush1.msra.mxu0 0.0
    %2111 = vmatprep.subr.mxu0 0.0
    %2112 = vmatpush1.msra.mxu0 0.0
    %2113 = vmatprep.subr.mxu0 0.0
    %2114 = vmatpush1.msra.mxu0 0.0
    %2115 = vmatprep.subr.mxu0 0.0
    %2116 = vmatpush1.msra.mxu0 0.0
    %2117 = vmatprep.subr.mxu0 0.0
    %2118 = vmatpush1.msra.mxu0 0.0
    %2119 = vmatprep.subr.mxu0 0.0
    %2120 = vmatpush1.msra.mxu0 0.0
    %2121 = vmatprep.subr.mxu0 0.0
    %2122 = vmatpush1.msra.mxu0 0.0
    %2123 = vmatprep.subr.mxu0 0.0
    %2124 = vmatpush1.msra.mxu0 0.0
    %2125 = vmatprep.mubr.f32.mxu0 0.0
    %2126 = vmatmul.mubr.f32.gmra.mrb[0].mxu0 %v1632
    %v2127 = vpop.f32.mrb[0].mxu0
    %v2128 = vadd.f32 0.0, %v2127
    %v2129 = vpop.f32.mrb[0].mxu0
    %2130 = vmatprep.mubr.f32.mxu0 0.0
    %2131 = vmatmul.mubr.f32.gmra.mrb[0].mxu0 %v1635
    %v2132 = vpop.f32.mrb[0].mxu0
    %v2133 = vadd.f32 0.0, %v2132
    %v2134 = vpop.f32.mrb[0].mxu0
    %2135 = vdwg.mxu0
    %2138 = vrot.lane.b32.xlu0 %v2128, 32
    %v2139 = vpop.permute.xlu0 %2138
    %2140 = vrot.lane.b32.xlu0 %v2133, 32
    %v2141 = vpop.permute.xlu0 %2140
    %v2144 = vadd.f32 %v1612, %v2139
    %v2145 = vadd.f32 %v1617, %v2141
    %vm2146 = vcmp.gt.f32.partialorder %v2144, 0.0
    %vm2147 = vcmp.gt.f32.partialorder %v2145, 0.0
    %v2148 = vmul.f32 %v2144, 0.01
    %v2149 = vmul.f32 %v2145, 0.01
    %v2150 = vsel %vm2146, %v2144, %v2148
    %v2151 = vsel %vm2147, %v2145, %v2149
    %v2152 = vsel %vm1069, %v2150, -inf
    %v2153 = vsel %vm1732, %v2151, -inf
    %v2154 = vmax.f32 %v2152, %v2153
    %v2155 = vrot.slane %v2154, 4
    %v2156 = vmax.f32 %v2154, %v2155
    %v2157 = vrot.slane %v2156, 2
    %v2158 = vmax.f32 %v2156, %v2157
    %v2159 = vrot.slane %v2158, 1
    %v2160 = vmax.f32 %v2158, %v2159
    %v2161 = vsub.f32 %v2150, %v2160
    %v2162 = vsub.f32 %v2151, %v2160
    %v2163 = vmul.f32 %v2161, 1.442695
    %v2164 = vpow.pop %v2163
    %v2165 = vmul.f32 %v2162, 1.442695
    %v2166 = vpow.pop %v2165
    %2168 = vset.pattern.permute.xlu0 32
    %2169 = vperm.xlu0 %2168, %v2164
    %v2170 = vpop.permute.xlu0 %2169
    %2173 = vset.pattern.permute.xlu0 32
    %2174 = vperm.xlu0 %2173, %v2166
    %v2175 = vpop.permute.xlu0 %2174
    %v2177 = vmul.f32 %v1612, %v2170
    %v2178 = vmul.f32 %v1617, %v2175
    %v2179 = vsel %vm46, %v2177, %v2164
    %v2180 = vsel %vm46, %v2178, %v2166
    %v2182 = vsel %vm174, %v2180, 0
    %2184 = vmatprep.subr.mxu0 0.0
    %2185 = vmatpush1.msra.mxu0 %v2179
    %2186 = vmatprep.subr.mxu0 0.0
    %2187 = vmatpush1.msra.mxu0 %v2182
    %2188 = vmatprep.subr.mxu0 0.0
    %2189 = vmatpush1.msra.mxu0 0.0
    %2190 = vmatprep.subr.mxu0 0.0
    %2191 = vmatpush1.msra.mxu0 0.0
    %2192 = vmatprep.subr.mxu0 0.0
    %2193 = vmatpush1.msra.mxu0 0.0
    %2194 = vmatprep.subr.mxu0 0.0
    %2195 = vmatpush1.msra.mxu0 0.0
    %2196 = vmatprep.subr.mxu0 0.0
    %2197 = vmatpush1.msra.mxu0 0.0
    %2198 = vmatprep.subr.mxu0 0.0
    %2199 = vmatpush1.msra.mxu0 0.0
    %2200 = vmatprep.subr.mxu0 0.0
    %2201 = vmatpush1.msra.mxu0 0.0
    %2202 = vmatprep.subr.mxu0 0.0
    %2203 = vmatpush1.msra.mxu0 0.0
    %2204 = vmatprep.subr.mxu0 0.0
    %2205 = vmatpush1.msra.mxu0 0.0
    %2206 = vmatprep.subr.mxu0 0.0
    %2207 = vmatpush1.msra.mxu0 0.0
    %2208 = vmatprep.subr.mxu0 0.0
    %2209 = vmatpush1.msra.mxu0 0.0
    %2210 = vmatprep.subr.mxu0 0.0
    %2211 = vmatpush1.msra.mxu0 0.0
    %2212 = vmatprep.subr.mxu0 0.0
    %2213 = vmatpush1.msra.mxu0 0.0
    %2214 = vmatprep.subr.mxu0 0.0
    %2215 = vmatpush1.msra.mxu0 0.0
    %2216 = vmatprep.subr.mxu0 0.0
    %2217 = vmatpush1.msra.mxu0 0.0
    %2218 = vmatprep.subr.mxu0 0.0
    %2219 = vmatpush1.msra.mxu0 0.0
    %2220 = vmatprep.subr.mxu0 0.0
    %2221 = vmatpush1.msra.mxu0 0.0
    %2222 = vmatprep.subr.mxu0 0.0
    %2223 = vmatpush1.msra.mxu0 0.0
    %2224 = vmatprep.subr.mxu0 0.0
    %2225 = vmatpush1.msra.mxu0 0.0
    %2226 = vmatprep.subr.mxu0 0.0
    %2227 = vmatpush1.msra.mxu0 0.0
    %2228 = vmatprep.subr.mxu0 0.0
    %2229 = vmatpush1.msra.mxu0 0.0
    %2230 = vmatprep.subr.mxu0 0.0
    %2231 = vmatpush1.msra.mxu0 0.0
    %2232 = vmatprep.subr.mxu0 0.0
    %2233 = vmatpush1.msra.mxu0 0.0
    %2234 = vmatprep.subr.mxu0 0.0
    %2235 = vmatpush1.msra.mxu0 0.0
    %2236 = vmatprep.subr.mxu0 0.0
    %2237 = vmatpush1.msra.mxu0 0.0
    %2238 = vmatprep.subr.mxu0 0.0
    %2239 = vmatpush1.msra.mxu0 0.0
    %2240 = vmatprep.subr.mxu0 0.0
    %2241 = vmatpush1.msra.mxu0 0.0
    %2242 = vmatprep.subr.mxu0 0.0
    %2243 = vmatpush1.msra.mxu0 0.0
    %2244 = vmatprep.subr.mxu0 0.0
    %2245 = vmatpush1.msra.mxu0 0.0
    %2246 = vmatprep.subr.mxu0 0.0
    %2247 = vmatpush1.msra.mxu0 0.0
    %2248 = vmatprep.mubr.f32.mxu0 0.0
    %2249 = vmatmul.mubr.f32.gmra.mrb[0].mxu0 %v1462
    %v2250 = vpop.f32.mrb[0].mxu0
    %v2251 = vadd.f32 0.0, %v2250
    %v2252 = vpop.f32.mrb[0].mxu0
    %2253 = vdwg.mxu0
    %v2254 = vmax.f32 %v2251, 1e-30
    %2256 = vset.pattern.permute.xlu0 32
    %2257 = vperm.xlu0 %2256, %v2254
    %v2258 = vpop.permute.xlu0 %2257
    %v2260 = vrcp.pop %v2258
    %v2261 = vmul.f32 %v2251, %v2260
    %v2262 = vadd.f32 %v2261, %v1845
    %vm2263 = vcmp.gt.f32.partialorder %v2262, 0.0
    %v2264 = vmul.f32 %v2262, 1.442695
    %v2265 = vpow.pop %v2264
    %v2266 = vsub.f32 %v2265, 1.0
    %v2267 = vsel %vm2263, %v2262, %v2266
    %v2269 = vsel %vm46, %v2267, 0
    %2271 = vmatprep.subr.mxu0 0.0
    %2272 = vmatpush1.msra.mxu0 %v1852
    %2273 = vmatprep.subr.mxu0 0.0
    %2274 = vmatpush1.msra.mxu0 %v1853
    %2275 = vmatprep.subr.mxu0 0.0
    %2276 = vmatpush1.msra.mxu0 %v1854
    %2277 = vmatprep.subr.mxu0 0.0
    %2278 = vmatpush1.msra.mxu0 %v1855
    %2279 = vmatprep.subr.mxu0 0.0
    %2280 = vmatpush1.msra.mxu0 0.0
    %2281 = vmatprep.subr.mxu0 0.0
    %2282 = vmatpush1.msra.mxu0 0.0
    %2283 = vmatprep.subr.mxu0 0.0
    %2284 = vmatpush1.msra.mxu0 0.0
    %2285 = vmatprep.subr.mxu0 0.0
    %2286 = vmatpush1.msra.mxu0 0.0
    %2287 = vmatprep.subr.mxu0 0.0
    %2288 = vmatpush1.msra.mxu0 0.0
    %2289 = vmatprep.subr.mxu0 0.0
    %2290 = vmatpush1.msra.mxu0 0.0
    %2291 = vmatprep.subr.mxu0 0.0
    %2292 = vmatpush1.msra.mxu0 0.0
    %2293 = vmatprep.subr.mxu0 0.0
    %2294 = vmatpush1.msra.mxu0 0.0
    %2295 = vmatprep.subr.mxu0 0.0
    %2296 = vmatpush1.msra.mxu0 0.0
    %2297 = vmatprep.subr.mxu0 0.0
    %2298 = vmatpush1.msra.mxu0 0.0
    %2299 = vmatprep.subr.mxu0 0.0
    %2300 = vmatpush1.msra.mxu0 0.0
    %2301 = vmatprep.subr.mxu0 0.0
    %2302 = vmatpush1.msra.mxu0 0.0
    %2303 = vmatprep.subr.mxu0 0.0
    %2304 = vmatpush1.msra.mxu0 0.0
    %2305 = vmatprep.subr.mxu0 0.0
    %2306 = vmatpush1.msra.mxu0 0.0
    %2307 = vmatprep.subr.mxu0 0.0
    %2308 = vmatpush1.msra.mxu0 0.0
    %2309 = vmatprep.subr.mxu0 0.0
    %2310 = vmatpush1.msra.mxu0 0.0
    %2311 = vmatprep.subr.mxu0 0.0
    %2312 = vmatpush1.msra.mxu0 0.0
    %2313 = vmatprep.subr.mxu0 0.0
    %2314 = vmatpush1.msra.mxu0 0.0
    %2315 = vmatprep.subr.mxu0 0.0
    %2316 = vmatpush1.msra.mxu0 0.0
    %2317 = vmatprep.subr.mxu0 0.0
    %2318 = vmatpush1.msra.mxu0 0.0
    %2319 = vmatprep.subr.mxu0 0.0
    %2320 = vmatpush1.msra.mxu0 0.0
    %2321 = vmatprep.subr.mxu0 0.0
    %2322 = vmatpush1.msra.mxu0 0.0
    %2323 = vmatprep.subr.mxu0 0.0
    %2324 = vmatpush1.msra.mxu0 0.0
    %2325 = vmatprep.subr.mxu0 0.0
    %2326 = vmatpush1.msra.mxu0 0.0
    %2327 = vmatprep.subr.mxu0 0.0
    %2328 = vmatpush1.msra.mxu0 0.0
    %2329 = vmatprep.subr.mxu0 0.0
    %2330 = vmatpush1.msra.mxu0 0.0
    %2331 = vmatprep.subr.mxu0 0.0
    %2332 = vmatpush1.msra.mxu0 0.0
    %2333 = vmatprep.subr.mxu0 0.0
    %2334 = vmatpush1.msra.mxu0 0.0
    %2335 = vmatprep.mubr.f32.mxu0 0.0
    %2336 = vmatmul.mubr.f32.gmra.mrb[0].mxu0 %v2269
    %v2337 = vpop.f32.mrb[0].mxu0
    %v2338 = vadd.f32 %v1860, %v2337
    %v2339 = vpop.f32.mrb[0].mxu0
    %2340 = vdwg.mxu0
    %2342 = vrot.lane.b32.xlu0 %v2045, 96
    %v2343 = vpop.permute.xlu0 %2342
    %v2344 = vsel %vm46, %v2343, 0
    %2346 = vmatprep.subr.mxu0 0.0
    %2347 = vmatpush1.msra.mxu0 %v1934
    %2348 = vmatprep.subr.mxu0 0.0
    %2349 = vmatpush1.msra.mxu0 %v1935
    %2350 = vmatprep.subr.mxu0 0.0
    %2351 = vmatpush1.msra.mxu0 %v1936
    %2352 = vmatprep.subr.mxu0 0.0
    %2353 = vmatpush1.msra.mxu0 %v1937
    %2354 = vmatprep.subr.mxu0 0.0
    %2355 = vmatpush1.msra.mxu0 0.0
    %2356 = vmatprep.subr.mxu0 0.0
    %2357 = vmatpush1.msra.mxu0 0.0
    %2358 = vmatprep.subr.mxu0 0.0
    %2359 = vmatpush1.msra.mxu0 0.0
    %2360 = vmatprep.subr.mxu0 0.0
    %2361 = vmatpush1.msra.mxu0 0.0
    %2362 = vmatprep.subr.mxu0 0.0
    %2363 = vmatpush1.msra.mxu0 0.0
    %2364 = vmatprep.subr.mxu0 0.0
    %2365 = vmatpush1.msra.mxu0 0.0
    %2366 = vmatprep.subr.mxu0 0.0
    %2367 = vmatpush1.msra.mxu0 0.0
    %2368 = vmatprep.subr.mxu0 0.0
    %2369 = vmatpush1.msra.mxu0 0.0
    %2370 = vmatprep.subr.mxu0 0.0
    %2371 = vmatpush1.msra.mxu0 0.0
    %2372 = vmatprep.subr.mxu0 0.0
    %2373 = vmatpush1.msra.mxu0 0.0
    %2374 = vmatprep.subr.mxu0 0.0
    %2375 = vmatpush1.msra.mxu0 0.0
    %2376 = vmatprep.subr.mxu0 0.0
    %2377 = vmatpush1.msra.mxu0 0.0
    %2378 = vmatprep.subr.mxu0 0.0
    %2379 = vmatpush1.msra.mxu0 0.0
    %2380 = vmatprep.subr.mxu0 0.0
    %2381 = vmatpush1.msra.mxu0 0.0
    %2382 = vmatprep.subr.mxu0 0.0
    %2383 = vmatpush1.msra.mxu0 0.0
    %2384 = vmatprep.subr.mxu0 0.0
    %2385 = vmatpush1.msra.mxu0 0.0
    %2386 = vmatprep.subr.mxu0 0.0
    %2387 = vmatpush1.msra.mxu0 0.0
    %2388 = vmatprep.subr.mxu0 0.0
    %2389 = vmatpush1.msra.mxu0 0.0
    %2390 = vmatprep.subr.mxu0 0.0
    %2391 = vmatpush1.msra.mxu0 0.0
    %2392 = vmatprep.subr.mxu0 0.0
    %2393 = vmatpush1.msra.mxu0 0.0
    %2394 = vmatprep.subr.mxu0 0.0
    %2395 = vmatpush1.msra.mxu0 0.0
    %2396 = vmatprep.subr.mxu0 0.0
    %2397 = vmatpush1.msra.mxu0 0.0
    %2398 = vmatprep.subr.mxu0 0.0
    %2399 = vmatpush1.msra.mxu0 0.0
    %2400 = vmatprep.subr.mxu0 0.0
    %2401 = vmatpush1.msra.mxu0 0.0
    %2402 = vmatprep.subr.mxu0 0.0
    %2403 = vmatpush1.msra.mxu0 0.0
    %2404 = vmatprep.subr.mxu0 0.0
    %2405 = vmatpush1.msra.mxu0 0.0
    %2406 = vmatprep.subr.mxu0 0.0
    %2407 = vmatpush1.msra.mxu0 0.0
    %2408 = vmatprep.subr.mxu0 0.0
    %2409 = vmatpush1.msra.mxu0 0.0
    %2410 = vmatprep.mubr.f32.mxu0 0.0
    %2411 = vmatmul.mubr.f32.gmra.mrb[0].mxu0 %v2344
    %v2412 = vpop.f32.mrb[0].mxu0
    %v2413 = vadd.f32 %v1942, %v2412
    %v2414 = vpop.f32.mrb[0].mxu0
    %2415 = vdwg.mxu0
    %v2416 = vadd.f32 %v2338, %v2413
    %v2417 = vxor.u32 %v2416, 2147483648
    %v2418 = vmul.f32 %v2417, 1.442695
    %v2419 = vpow.pop %v2418
    %v2420 = vadd.f32 %v2419, 1.0
    %v2421 = vrcp.pop %v2420
    %v2422 = vmul.f32 1.0, %v2421
    %2424 = vrot.lane.b32.xlu0 %v2413, 64
    %v2425 = vpop.permute.xlu0 %2424
    %v2427 = vmul.f32 %v2422, %v2425
    %2429 = vrot.lane.b32.xlu0 %v2427, 64
    %v2430 = vpop.permute.xlu0 %2429
    %v2432 = vadd.f32 %v2338, %v2430
    %v2433 = vtanh.pop %v2432
    %v2434 = vsub.f32 1.0, %v2422
    %2436 = vrot.lane.b32.xlu0 %v2433, 96
    %v2437 = vpop.permute.xlu0 %2436
    %v2439 = vmul.f32 %v2434, %v2437
    %v2440 = vmul.f32 %v2422, %v2045
    %v2441 = vadd.f32 %v2439, %v2440
    %v2442 = vmax.f32 %v2441, 0.0
    %v2443 = vld [vmem:[%s6 + $0x150] sm:$0xff]
    %v2444 = vld [vmem:[%s6 + $0x158] sm:$0xff]
    %v2445 = vld [vmem:[%s6 + $0x160] sm:$0xff]
    %v2446 = vld [vmem:[%s6 + $0x168] sm:$0xff]
    %2448 = vrot.lane.b32.xlu0 %v2442, 96
    %v2449 = vpop.permute.xlu0 %2448
    %v2450 = vsel %vm46, %v2449, 0
    %2452 = vmatprep.subr.mxu0 0.0
    %2453 = vmatpush1.msra.mxu0 %v2443
    %2454 = vmatprep.subr.mxu0 0.0
    %2455 = vmatpush1.msra.mxu0 %v2444
    %2456 = vmatprep.subr.mxu0 0.0
    %2457 = vmatpush1.msra.mxu0 %v2445
    %2458 = vmatprep.subr.mxu0 0.0
    %2459 = vmatpush1.msra.mxu0 %v2446
    %2460 = vmatprep.subr.mxu0 0.0
    %2461 = vmatpush1.msra.mxu0 0.0
    %2462 = vmatprep.subr.mxu0 0.0
    %2463 = vmatpush1.msra.mxu0 0.0
    %2464 = vmatprep.subr.mxu0 0.0
    %2465 = vmatpush1.msra.mxu0 0.0
    %2466 = vmatprep.subr.mxu0 0.0
    %2467 = vmatpush1.msra.mxu0 0.0
    %2468 = vmatprep.subr.mxu0 0.0
    %2469 = vmatpush1.msra.mxu0 0.0
    %2470 = vmatprep.subr.mxu0 0.0
    %2471 = vmatpush1.msra.mxu0 0.0
    %2472 = vmatprep.subr.mxu0 0.0
    %2473 = vmatpush1.msra.mxu0 0.0
    %2474 = vmatprep.subr.mxu0 0.0
    %2475 = vmatpush1.msra.mxu0 0.0
    %2476 = vmatprep.subr.mxu0 0.0
    %2477 = vmatpush1.msra.mxu0 0.0
    %2478 = vmatprep.subr.mxu0 0.0
    %2479 = vmatpush1.msra.mxu0 0.0
    %2480 = vmatprep.subr.mxu0 0.0
    %2481 = vmatpush1.msra.mxu0 0.0
    %2482 = vmatprep.subr.mxu0 0.0
    %2483 = vmatpush1.msra.mxu0 0.0
    %2484 = vmatprep.subr.mxu0 0.0
    %2485 = vmatpush1.msra.mxu0 0.0
    %2486 = vmatprep.subr.mxu0 0.0
    %2487 = vmatpush1.msra.mxu0 0.0
    %2488 = vmatprep.subr.mxu0 0.0
    %2489 = vmatpush1.msra.mxu0 0.0
    %2490 = vmatprep.subr.mxu0 0.0
    %2491 = vmatpush1.msra.mxu0 0.0
    %2492 = vmatprep.subr.mxu0 0.0
    %2493 = vmatpush1.msra.mxu0 0.0
    %2494 = vmatprep.subr.mxu0 0.0
    %2495 = vmatpush1.msra.mxu0 0.0
    %2496 = vmatprep.subr.mxu0 0.0
    %2497 = vmatpush1.msra.mxu0 0.0
    %2498 = vmatprep.subr.mxu0 0.0
    %2499 = vmatpush1.msra.mxu0 0.0
    %2500 = vmatprep.subr.mxu0 0.0
    %2501 = vmatpush1.msra.mxu0 0.0
    %2502 = vmatprep.subr.mxu0 0.0
    %2503 = vmatpush1.msra.mxu0 0.0
    %2504 = vmatprep.subr.mxu0 0.0
    %2505 = vmatpush1.msra.mxu0 0.0
    %2506 = vmatprep.subr.mxu0 0.0
    %2507 = vmatpush1.msra.mxu0 0.0
    %2508 = vmatprep.subr.mxu0 0.0
    %2509 = vmatpush1.msra.mxu0 0.0
    %2510 = vmatprep.subr.mxu0 0.0
    %2511 = vmatpush1.msra.mxu0 0.0
    %2512 = vmatprep.subr.mxu0 0.0
    %2513 = vmatpush1.msra.mxu0 0.0
    %2514 = vmatprep.subr.mxu0 0.0
    %2515 = vmatpush1.msra.mxu0 0.0
    %2516 = vmatprep.mubr.f32.mxu0 0.0
    %2517 = vmatmul.mubr.f32.gmra.mrb[0].mxu0 %v2450
    %v2518 = vpop.f32.mrb[0].mxu0
    %v2519 = vadd.f32 0.0, %v2518
    %v2520 = vpop.f32.mrb[0].mxu0
    %2521 = vdwg.mxu0
    %v2522 = vld [vmem:[%s7 + $0xd] sm:$0x1]
    %v2523 = vlaneseq
    %v2524 = vshrl.u32 %v2523, 7
    %v2525 = vsub.s32 0, %v2524
    %v2526 = vrot.slane %v2522, %v2525
    %v2527 = vadd.f32 %v2519, %v2526
    %2528 = vst.msk [vmem:[#allocation2] sm:$0x3] %vm401, %v2527
    // Predicated region
    $region34: #{tpu_custom_call.1} parent=1 // pred_check
      _
    $region35: #{tpu_custom_call.1} parent=1 // pred_check_branch
      %2530 = sbr.rel (0) target = $region37
    $region36: #{tpu_custom_call.1} parent=1 // pred_region
      %s2532 = ssub.s32 32, 32
      %2533 = vsyncadd [#allocation3], %s2532
      %s2535 = sshll.u32 [#allocation2], 4
      %s2536 = int_to_ptr.vmem [resolvable:$true] %s2535
      %2538 = dma.vmem_to_hbm [thread:$0]  %s2536, 32, %s8, [#allocation3]
    $region37: #{tpu_custom_call.1} parent=1 // pred_fallthru
      _
    // Predicated region
    $region38: #{tpu_custom_call.1} parent=1 // pred_check
      _
    $region39: #{tpu_custom_call.1} parent=1 // pred_check_branch
      %2540 = sbr.rel (0) target = $region41
    $region40: #{tpu_custom_call.1} parent=1 // pred_region
      %2541 = dma.done [#allocation3], 32
    $region41: #{tpu_custom_call.1} parent=1 // pred_fallthru
      _
    %2542 = vsyncpa [#allocation3], 1

</llo_original>
